<compile_context>
chip_gen: v6e
topology: v6e:2x2x1
jax: 0.10.0
libtpu: 0.0.40
codegen_flags: <defaults>
</compile_context>

<pallas_src>
import jax
import jax.numpy as jnp
from jax.experimental import pallas as pl
from jax.experimental.pallas import tpu as pltpu

K_CONV = 3                      # conv kernel size ("same" padding)
LANE = 128                      # TPU lane width
# Set to jnp.bfloat16 on v6e/v7x for ~2x MXU throughput (keep f32 accumulation;
# loosen the validation tolerance to ~2e-2 if you do).
_MXU_DTYPE = jnp.float32
_VMEM_LIMIT = 32 * 1024 * 1024  # safe on every generation (v7x TC has 64 MiB)


def _round_up(x, m):
    return ((x + m - 1) // m) * m


# ----------------------------------------------------------------------------
# Kernel 1: merged news encoder (conv -> relu -> masked additive attention)
# for BOTH text fields + category, one lane-dense output slab per news item.
# ----------------------------------------------------------------------------
def _field_encode(x, mask, wc, bc, wa, ba, va):
    """Conv1d(K, same) -> ReLU -> masked additive attention pooling.

    x: (Nt, L+K-1, De) zero-padded token embeddings; mask: (Nt, L) float.
    Returns (Nt, F).
    """
    Nt, Lpad, De = x.shape
    F = wc.shape[1]
    K = wc.shape[0] // De
    L = Lpad - (K - 1)

    # Conv as a sum of K flattened 2-D MXU matmuls (no im2col concat).
    conv = jnp.zeros((Nt * L, F), jnp.float32)
    for k in range(K):
        xk = x[:, k:k + L, :].reshape(Nt * L, De)
        wk = wc[k * De:(k + 1) * De, :]
        conv = conv + jnp.dot(xk.astype(_MXU_DTYPE), wk.astype(_MXU_DTYPE),
                              preferred_element_type=jnp.float32)
    conv = jnp.maximum(conv + bc, 0.0)                               # (Nt*L, F)

    # Additive attention: e = v^T tanh(conv @ Wa + ba), softmax over L.
    h_att = jnp.tanh(jnp.dot(conv.astype(_MXU_DTYPE), wa.astype(_MXU_DTYPE),
                             preferred_element_type=jnp.float32) + ba)
    scores = jnp.sum(h_att.reshape(Nt, L, -1) * va[None], axis=-1)   # (Nt, L)
    scores = scores + (1.0 - mask) * (-1e9)
    scores = scores - jnp.max(scores, axis=-1, keepdims=True)
    e = jnp.exp(scores)
    denom = jnp.sum(e, axis=-1, keepdims=True)
    # approx=True would move the divide to the EUP slot; kept exact to hold
    # the 1e-4 validation tolerance against the f32 reference.
    alpha = e * pl.reciprocal(denom, approx=False)

    conv3 = conv.reshape(Nt, L, F)
    return jnp.sum(alpha[:, :, None] * conv3, axis=1)                # (Nt, F)


def _news_encoder_kernel(tx_ref, tm_ref, sx_ref, sm_ref, cat_ref,
                         twc_ref, tbc_ref, twa_ref, tba_ref, tva_ref,
                         swc_ref, sbc_ref, swa_ref, sba_ref, sva_ref,
                         out_ref):
    t_pool = _field_encode(tx_ref[...], tm_ref[...], twc_ref[...], tbc_ref[...],
                           twa_ref[...], tba_ref[...], tva_ref[...])
    s_pool = _field_encode(sx_ref[...], sm_ref[...], swc_ref[...], sbc_ref[...],
                           swa_ref[...], sba_ref[...], sva_ref[...])
    cat = cat_ref[...]
    nt = t_pool.shape[0]
    used = t_pool.shape[1] + s_pool.shape[1] + cat.shape[1]
    pad_cols = out_ref.shape[1] - used
    parts = [t_pool, s_pool, cat]
    if pad_cols > 0:
        parts.append(jnp.zeros((nt, pad_cols), jnp.float32))
    # Single lane-dense (Nt, Hp) store instead of narrow masked stores.
    out_ref[...] = jnp.concatenate(parts, axis=-1)


def news_encoder(title_x, title_mask, sapo_x, sapo_mask, cat_rows, p, *, n_tile=128):
    """Encode a flat slab of N news items. Returns (N, Hp), Hp=round_up(2F+Dc,128)."""
    N = title_x.shape[0]
    De = title_x.shape[2]
    Ltp, Lt = title_x.shape[1], title_mask.shape[1]
    Lsp, Ls = sapo_x.shape[1], sapo_mask.shape[1]
    Dc = cat_rows.shape[1]
    F = p["title_wc"].shape[1]
    Hp = _round_up(2 * F + Dc, LANE)

    n_tile = max(8, (min(n_tile, _round_up(N, 8)) // 8) * 8)
    N_pad = _round_up(N, n_tile)
    pad_n = lambda a: jnp.pad(a, ((0, N_pad - N),) + ((0, 0),) * (a.ndim - 1))
    tx, tm, sx, sm, ce = (pad_n(a) for a in
                          (title_x, title_mask, sapo_x, sapo_mask, cat_rows))

    full = lambda arr: pl.BlockSpec(arr.shape, lambda *_: (0,) * arr.ndim)
    weights = (p["title_wc"], p["title_bc"], p["title_wa"], p["title_ba"], p["title_va"],
               p["sapo_wc"], p["sapo_bc"], p["sapo_wa"], p["sapo_ba"], p["sapo_va"])

    out = pl.pallas_call(
        _news_encoder_kernel,
        out_shape=jax.ShapeDtypeStruct((N_pad, Hp), jnp.float32),
        grid=(N_pad // n_tile,),
        in_specs=[
            pl.BlockSpec((n_tile, Ltp, De), lambda i: (i, 0, 0)),
            pl.BlockSpec((n_tile, Lt), lambda i: (i, 0)),
            pl.BlockSpec((n_tile, Lsp, De), lambda i: (i, 0, 0)),
            pl.BlockSpec((n_tile, Ls), lambda i: (i, 0)),
            pl.BlockSpec((n_tile, Dc), lambda i: (i, 0)),
        ] + [full(w) for w in weights],
        out_specs=pl.BlockSpec((n_tile, Hp), lambda i: (i, 0)),
        compiler_params=pltpu.CompilerParams(
            dimension_semantics=("parallel",),      # megacore split on v7x
            vmem_limit_bytes=_VMEM_LIMIT),
    )(tx, tm, sx, sm, ce, *weights)
    return out[:N]


# ----------------------------------------------------------------------------
# Kernel 2: user encoder (masked GRU, init hidden = user embedding) + scoring
# ----------------------------------------------------------------------------
def _user_score_kernel(cand_ref, his_ref, hmask_ref, h0_ref,
                       wih_ref, whh_ref, bih_ref, bhh_ref, logits_ref):
    # cand_ref  : (B, C, Hp)   candidate news representations (lane-padded)
    # his_ref   : (T*B, Hp)    clicked-news reprs, time-major (row = t*B + b)
    # hmask_ref : (T*B, 1)     float history mask (1 = valid step)
    # h0_ref    : (B, Hp)      user embedding (GRU initial hidden)
    # wih/whh   : (Hp, 3Hp)    per-gate blocks 128-lane aligned
    B, Hp = h0_ref.shape
    T = his_ref.shape[0] // B
    wih = wih_ref[...]
    whh = whh_ref[...]
    bih = bih_ref[...]
    bhh = bhh_ref[...]

    # Hoisted h-independent input projection: one well-shaped MXU matmul.
    gi = jnp.dot(his_ref[...].astype(_MXU_DTYPE), wih.astype(_MXU_DTYPE),
                 preferred_element_type=jnp.float32) + bih            # (T*B, 3Hp)
    # Fold the history mask once: on padded steps force z -> 1 so h_new == h
    # (exact for 0/1 masks), removing per-step mask loads / blends.
    gi_r = gi[:, 0:Hp].reshape(T, B, Hp)
    gi_z = (gi[:, Hp:2 * Hp] + (1.0 - hmask_ref[...]) * 1e9).reshape(T, B, Hp)
    gi_n = gi[:, 2 * Hp:3 * Hp].reshape(T, B, Hp)

    # Fully unrolled recurrence (T is small/static): only h @ whh is serial.
    h = h0_ref[...]
    for t in range(T):
        gh = jnp.dot(h.astype(_MXU_DTYPE), whh.astype(_MXU_DTYPE),
                     preferred_element_type=jnp.float32) + bhh        # (B, 3Hp)
        r = jax.nn.sigmoid(gi_r[t] + gh[:, 0:Hp])
        z = jax.nn.sigmoid(gi_z[t] + gh[:, Hp:2 * Hp])
        n = jnp.tanh(gi_n[t] + r * gh[:, 2 * Hp:3 * Hp])
        h = (1.0 - z) * n + z * h

    # logits[b, c] = <cand[b, c, :], h[b, :]>   (== torch.bmm(...).squeeze(2))
    logits_ref[...] = jnp.sum(cand_ref[...] * h[:, None, :], axis=-1)


def user_score(cand, his_flat, hmask_flat, h0, wih_p, whh_p, bih_p, bhh_p):
    B, C, _ = cand.shape
    return pl.pallas_call(
        _user_score_kernel,
        out_shape=jax.ShapeDtypeStruct((B, C), jnp.float32),
        compiler_params=pltpu.CompilerParams(vmem_limit_bytes=_VMEM_LIMIT),
    )(cand, his_flat, hmask_flat, h0, wih_p, whh_p, bih_p, bhh_p)


# ----------------------------------------------------------------------------
# Model glue: embedding lookups, lane padding of H, parameter packing
# ----------------------------------------------------------------------------
def _embed_and_pad(tokens_flat, word_emb):
    # TODO(synk): embedding gathers stay in XLA glue; a data-dependent gather
    # inside the kernel would need manual DMA (PrefetchScalarGridSpec/ANY).
    x = jnp.take(word_emb, tokens_flat, axis=0)                      # (N, L, De)
    pad = (K_CONV - 1) // 2
    return jnp.pad(x, ((0, 0), (pad, pad), (0, 0)))                  # (N, L+K-1, De)


def _pad_gru_w(w, H, Hp):
    """(H, 3H) -> (Hp, 3Hp) with each gate block placed on a 128-aligned slot."""
    out = jnp.zeros((Hp, 3 * Hp), w.dtype)
    for g in range(3):
        out = out.at[:H, g * Hp:g * Hp + H].set(w[:, g * H:(g + 1) * H])
    return out


def _pad_gru_b(b, H, Hp):
    out = jnp.zeros((1, 3 * Hp), b.dtype)
    for g in range(3):
        out = out.at[:, g * Hp:g * Hp + H].set(b[:, g * H:(g + 1) * H])
    return out


def lstur_forward(params, user_encoding, title, title_mask,
                  his_title, his_title_mask, his_mask,
                  sapo, sapo_mask, his_sapo, his_sapo_mask,
                  category, his_category, *, n_tile=128):
    p = params
    B, C, Lt = title.shape
    _, T, _ = his_title.shape
    Ls = sapo.shape[-1]
    F = p["title_wc"].shape[1]
    Dc = p["cat_emb"].shape[1]
    H = 2 * F + Dc
    Hp = _round_up(H, LANE)

    # ---- one merged slab: candidate news first, then clicked (history) news ----
    title_all = jnp.concatenate([title.reshape(B * C, Lt),
                                 his_title.reshape(B * T, Lt)], axis=0)
    tmask_all = jnp.concatenate([title_mask.reshape(B * C, Lt),
                                 his_title_mask.reshape(B * T, Lt)],
                                axis=0).astype(jnp.float32)
    sapo_all = jnp.concatenate([sapo.reshape(B * C, Ls),
                                his_sapo.reshape(B * T, Ls)], axis=0)
    smask_all = jnp.concatenate([sapo_mask.reshape(B * C, Ls),
                                 his_sapo_mask.reshape(B * T, Ls)],
                                axis=0).astype(jnp.float32)
    cat_all = jnp.concatenate([category.reshape(B * C),
                               his_category.reshape(B * T)], axis=0)

    tx = _embed_and_pad(title_all, p["word_emb"])
    sx = _embed_and_pad(sapo_all, p["word_emb"])
    ce = jnp.take(p["cat_emb"], cat_all, axis=0)

    reprs = news_encoder(tx, tmask_all, sx, smask_all, ce, p, n_tile=n_tile)
    cand = reprs[:B * C].reshape(B, C, Hp)
    his = reprs[B * C:].reshape(B, T, Hp)

    # ---- user encoder (GRU) + scoring ----
    his_flat = jnp.transpose(his, (1, 0, 2)).reshape(T * B, Hp)       # time-major
    hmask_flat = jnp.transpose(his_mask.astype(jnp.float32), (1, 0)).reshape(T * B, 1)

    user_emb_p = jnp.pad(p["user_emb"], ((0, 0), (0, Hp - H)))
    h0 = jnp.take(user_emb_p, user_encoding, axis=0)                  # (B, Hp)
    wih_p = _pad_gru_w(p["gru_wih"], H, Hp)
    whh_p = _pad_gru_w(p["gru_whh"], H, Hp)
    bih_p = _pad_gru_b(p["gru_bih"], H, Hp)
    bhh_p = _pad_gru_b(p["gru_bhh"], H, Hp)

    return user_score(cand, his_flat, hmask_flat, h0,
                      wih_p, whh_p, bih_p, bhh_p)                     # (B, C)


# ----------------------------------------------------------------------------
# Pure-JAX reference (same math, unpadded, no Pallas) for validation
# ----------------------------------------------------------------------------
def _ref_text(x_pad, mask, wc, bc, wa, ba, va):
    L = mask.shape[1]
    windows = jnp.concatenate([x_pad[:, k:k + L, :] for k in range(K_CONV)], axis=-1)
    conv = jnp.maximum(jnp.einsum("nld,df->nlf", windows, wc) + bc[None], 0.0)
    h_att = jnp.tanh(jnp.einsum("nlf,fa->nla", conv, wa) + ba[None])
    scores = jnp.sum(h_att * va[None], axis=-1) + (1.0 - mask) * (-1e9)
    alpha = jax.nn.softmax(scores, axis=-1)
    return jnp.sum(alpha[:, :, None] * conv, axis=1)


def lstur_reference(params, user_encoding, title, title_mask,
                    his_title, his_title_mask, his_mask,
                    sapo, sapo_mask, his_sapo, his_sapo_mask,
                    category, his_category):
    p = params
    B, C, Lt = title.shape
    _, T, _ = his_title.shape

    def news(tok_t, m_t, tok_s, m_s, cat):
        tr = _ref_text(_embed_and_pad(tok_t, p["word_emb"]), m_t.astype(jnp.float32),
                       p["title_wc"], p["title_bc"], p["title_wa"], p["title_ba"],
                       p["title_va"])
        sr = _ref_text(_embed_and_pad(tok_s, p["word_emb"]), m_s.astype(jnp.float32),
                       p["sapo_wc"], p["sapo_bc"], p["sapo_wa"], p["sapo_ba"],
                       p["sapo_va"])
        return jnp.concatenate([tr, sr, jnp.take(p["cat_emb"], cat, axis=0)], axis=-1)

    cand = news(title.reshape(B * C, Lt), title_mask.reshape(B * C, Lt),
                sapo.reshape(B * C, -1), sapo_mask.reshape(B * C, -1),
                category.reshape(B * C))
    H = cand.shape[-1]
    cand = cand.reshape(B, C, H)
    his = news(his_title.reshape(B * T, Lt), his_title_mask.reshape(B * T, Lt),
               his_sapo.reshape(B * T, -1), his_sapo_mask.reshape(B * T, -1),
               his_category.reshape(B * T)).reshape(B, T, H)

    h = jnp.take(p["user_emb"], user_encoding, axis=0)
    for t in range(T):
        x_t = his[:, t, :]
        gi = x_t @ p["gru_wih"] + p["gru_bih"]
        gh = h @ p["gru_whh"] + p["gru_bhh"]
        r = jax.nn.sigmoid(gi[:, 0:H] + gh[:, 0:H])
        z = jax.nn.sigmoid(gi[:, H:2 * H] + gh[:, H:2 * H])
        n = jnp.tanh(gi[:, 2 * H:3 * H] + r * gh[:, 2 * H:3 * H])
        h_new = (1.0 - z) * n + z * h
        m = his_mask[:, t].astype(jnp.float32)[:, None]
        h = m * h_new + (1.0 - m) * h
    return jnp.einsum("bch,bh->bc", cand, h)


# ----------------------------------------------------------------------------
# Parameter / input construction (deterministic, synthetic)
# ----------------------------------------------------------------------------
def make_params(key, *, vocab=50, de=16, filters=32, attn=16,
                n_cat=10, d_cat=8, n_users=5):
    H = 2 * filters + d_cat
    ks = jax.random.split(key, 16)
    u = lambda k, s, sc=0.1: (jax.random.normal(k, s, jnp.float32) * sc)
    return {
        "word_emb": u(ks[0], (vocab, de)),
        "cat_emb":  u(ks[1], (n_cat, d_cat)),
        "user_emb": u(ks[2], (n_users, H)),
        "title_wc": u(ks[3], (K_CONV * de, filters)),
        "title_bc": u(ks[4], (1, filters)),
        "title_wa": u(ks[5], (filters, attn)),
        "title_ba": u(ks[6], (1, attn)),
        "title_va": u(ks[7], (1, attn)),
        "sapo_wc":  u(ks[8], (K_CONV * de, filters)),
        "sapo_bc":  u(ks[9], (1, filters)),
        "sapo_wa":  u(ks[10], (filters, attn)),
        "sapo_ba":  u(ks[11], (1, attn)),
        "sapo_va":  u(ks[12], (1, attn)),
        "gru_wih":  u(ks[13], (H, 3 * H)),
        "gru_whh":  u(ks[14], (H, 3 * H)),
        "gru_bih":  u(ks[15], (1, 3 * H)),
        "gru_bhh":  jnp.zeros((1, 3 * H), jnp.float32),
    }


if __name__ == "__main__":
    key = jax.random.PRNGKey(0)
    B, C, T = 2, 3, 4          # batch, num_candidates, num_clicked_news
    Lt, Ls = 8, 12             # title / sapo lengths
    vocab, n_cat, n_users = 50, 10, 5

    kp, k1, k2, k3, k4, k5, k6, k7 = jax.random.split(key, 8)
    params = make_params(kp, vocab=vocab, n_cat=n_cat, n_users=n_users)

    user_encoding = jax.random.randint(k1, (B,), 0, n_users)
    title = jax.random.randint(k2, (B, C, Lt), 0, vocab)
    sapo = jax.random.randint(k3, (B, C, Ls), 0, vocab)
    his_title = jax.random.randint(k4, (B, T, Lt), 0, vocab)
    his_sapo = jax.random.randint(k5, (B, T, Ls), 0, vocab)
    category = jax.random.randint(k6, (B, C), 0, n_cat)
    his_category = jax.random.randint(k7, (B, T), 0, n_cat)

    # masks: prefix of valid tokens / valid history items (binary)
    title_mask = (jnp.arange(Lt)[None, None, :] < 6).astype(jnp.int32) * jnp.ones((B, C, Lt), jnp.int32)
    sapo_mask = (jnp.arange(Ls)[None, None, :] < 9).astype(jnp.int32) * jnp.ones((B, C, Ls), jnp.int32)
    his_title_mask = (jnp.arange(Lt)[None, None, :] < 5).astype(jnp.int32) * jnp.ones((B, T, Lt), jnp.int32)
    his_sapo_mask = (jnp.arange(Ls)[None, None, :] < 7).astype(jnp.int32) * jnp.ones((B, T, Ls), jnp.int32)
    his_mask = (jnp.arange(T)[None, :] < jnp.array([[3], [4]])).astype(jnp.int32)

    fwd = jax.jit(lstur_forward, static_argnames=("n_tile",))
    # small n_tile so the tiny test exercises a multi-step (pipelined) grid
    logits = fwd(params, user_encoding, title, title_mask,
                 his_title, his_title_mask, his_mask,
                 sapo, sapo_mask, his_sapo, his_sapo_mask,
                 category, his_category, n_tile=8)
    logits = jax.block_until_ready(logits)

    ref = lstur_reference(params, user_encoding, title, title_mask,
                          his_title, his_title_mask, his_mask,
                          sapo, sapo_mask, his_sapo, his_sapo_mask,
                          category, his_category)
    assert logits.shape == (B, C)
    assert jnp.allclose(logits, ref, atol=1e-4, rtol=1e-4), (logits, ref)

    print("KERNEL_OK")
</pallas_src>

<mosaic_0001>
module attributes {stable_mosaic.version = 11 : i64} {
  func.func @_news_encoder_kernel(%arg0: i32, %arg1: memref<8x10x16xf32, #tpu.memory_space<vmem>>, %arg2: memref<8x8xf32, #tpu.memory_space<vmem>>, %arg3: memref<8x14x16xf32, #tpu.memory_space<vmem>>, %arg4: memref<8x12xf32, #tpu.memory_space<vmem>>, %arg5: memref<8x8xf32, #tpu.memory_space<vmem>>, %arg6: memref<48x32xf32, #tpu.memory_space<vmem>>, %arg7: memref<1x32xf32, #tpu.memory_space<vmem>>, %arg8: memref<32x16xf32, #tpu.memory_space<vmem>>, %arg9: memref<1x16xf32, #tpu.memory_space<vmem>>, %arg10: memref<1x16xf32, #tpu.memory_space<vmem>>, %arg11: memref<48x32xf32, #tpu.memory_space<vmem>>, %arg12: memref<1x32xf32, #tpu.memory_space<vmem>>, %arg13: memref<32x16xf32, #tpu.memory_space<vmem>>, %arg14: memref<1x16xf32, #tpu.memory_space<vmem>>, %arg15: memref<1x16xf32, #tpu.memory_space<vmem>>, %arg16: memref<8x128xf32, #tpu.memory_space<vmem>>) attributes {dimension_semantics = [#tpu.dimension_semantics<parallel>], iteration_bounds = array<i64: 2>, scalar_prefetch = 0 : i64, scratch_operands = 0 : i64, tpu.core_type = #tpu.core_type<tc>, window_params = [{transform_indices = @transform_0, window_bounds = array<i64: 8, 10, 16>}, {transform_indices = @transform_1, window_bounds = array<i64: 8, 8>}, {transform_indices = @transform_2, window_bounds = array<i64: 8, 14, 16>}, {transform_indices = @transform_3, window_bounds = array<i64: 8, 12>}, {transform_indices = @transform_4, window_bounds = array<i64: 8, 8>}, {pipeline_mode = #tpu.pipeline_mode<synchronous>, transform_indices = @transform_5, window_bounds = array<i64: 48, 32>}, {pipeline_mode = #tpu.pipeline_mode<synchronous>, transform_indices = @transform_6, window_bounds = array<i64: 1, 32>}, {pipeline_mode = #tpu.pipeline_mode<synchronous>, transform_indices = @transform_7, window_bounds = array<i64: 32, 16>}, {pipeline_mode = #tpu.pipeline_mode<synchronous>, transform_indices = @transform_8, window_bounds = array<i64: 1, 16>}, {pipeline_mode = #tpu.pipeline_mode<synchronous>, transform_indices = @transform_9, window_bounds = array<i64: 1, 16>}, {pipeline_mode = #tpu.pipeline_mode<synchronous>, transform_indices = @transform_10, window_bounds = array<i64: 48, 32>}, {pipeline_mode = #tpu.pipeline_mode<synchronous>, transform_indices = @transform_11, window_bounds = array<i64: 1, 32>}, {pipeline_mode = #tpu.pipeline_mode<synchronous>, transform_indices = @transform_12, window_bounds = array<i64: 32, 16>}, {pipeline_mode = #tpu.pipeline_mode<synchronous>, transform_indices = @transform_13, window_bounds = array<i64: 1, 16>}, {pipeline_mode = #tpu.pipeline_mode<synchronous>, transform_indices = @transform_14, window_bounds = array<i64: 1, 16>}, {transform_indices = @transform_15, window_bounds = array<i64: 8, 128>}]} {
    %c0 = arith.constant 0 : index
    %c0_0 = arith.constant 0 : index
    %c0_1 = arith.constant 0 : index
    %0 = vector.load %arg1[%c0, %c0_0, %c0_1] : memref<8x10x16xf32, #tpu.memory_space<vmem>>, vector<8x10x16xf32>
    %c0_2 = arith.constant 0 : index
    %c0_3 = arith.constant 0 : index
    %1 = vector.load %arg2[%c0_2, %c0_3] : memref<8x8xf32, #tpu.memory_space<vmem>>, vector<8x8xf32>
    %c0_4 = arith.constant 0 : index
    %c0_5 = arith.constant 0 : index
    %2 = vector.load %arg6[%c0_4, %c0_5] : memref<48x32xf32, #tpu.memory_space<vmem>>, vector<48x32xf32>
    %c0_6 = arith.constant 0 : index
    %c0_7 = arith.constant 0 : index
    %3 = vector.load %arg7[%c0_6, %c0_7] : memref<1x32xf32, #tpu.memory_space<vmem>>, vector<1x32xf32>
    %c0_8 = arith.constant 0 : index
    %c0_9 = arith.constant 0 : index
    %4 = vector.load %arg8[%c0_8, %c0_9] : memref<32x16xf32, #tpu.memory_space<vmem>>, vector<32x16xf32>
    %c0_10 = arith.constant 0 : index
    %c0_11 = arith.constant 0 : index
    %5 = vector.load %arg9[%c0_10, %c0_11] : memref<1x16xf32, #tpu.memory_space<vmem>>, vector<1x16xf32>
    %c0_12 = arith.constant 0 : index
    %c0_13 = arith.constant 0 : index
    %6 = vector.load %arg10[%c0_12, %c0_13] : memref<1x16xf32, #tpu.memory_space<vmem>>, vector<1x16xf32>
    %cst = arith.constant 0.000000e+00 : f32
    %7 = vector.broadcast %cst : f32 to vector<64x32xf32>
    %8 = vector.extract_strided_slice %0 {offsets = [0, 0, 0], sizes = [8, 8, 16], strides = [1, 1, 1]} : vector<8x10x16xf32> to vector<8x8x16xf32>
    %9 = vector.shape_cast %8 : vector<8x8x16xf32> to vector<64x16xf32>
    %10 = vector.extract_strided_slice %2 {offsets = [0, 0], sizes = [16, 32], strides = [1, 1]} : vector<48x32xf32> to vector<16x32xf32>
    %cst_14 = arith.constant dense<0.000000e+00> : vector<64x32xf32>
    %11 = tpu.matmul %9, %10, %cst_14 {dimension_numbers = #tpu.dot_dimension_numbers<[1], [0], [0], [1], [0, 0, 1, 1], [], []>} : vector<64x16xf32>, vector<16x32xf32>, vector<64x32xf32> -> vector<64x32xf32>
    %12 = arith.addf %7, %11 : vector<64x32xf32>
    %13 = vector.extract_strided_slice %0 {offsets = [0, 1, 0], sizes = [8, 8, 16], strides = [1, 1, 1]} : vector<8x10x16xf32> to vector<8x8x16xf32>
    %14 = vector.shape_cast %13 : vector<8x8x16xf32> to vector<64x16xf32>
    %15 = vector.extract_strided_slice %2 {offsets = [16, 0], sizes = [16, 32], strides = [1, 1]} : vector<48x32xf32> to vector<16x32xf32>
    %cst_15 = arith.constant dense<0.000000e+00> : vector<64x32xf32>
    %16 = tpu.matmul %14, %15, %cst_15 {dimension_numbers = #tpu.dot_dimension_numbers<[1], [0], [0], [1], [0, 0, 1, 1], [], []>} : vector<64x16xf32>, vector<16x32xf32>, vector<64x32xf32> -> vector<64x32xf32>
    %17 = arith.addf %12, %16 : vector<64x32xf32>
    %18 = vector.extract_strided_slice %0 {offsets = [0, 2, 0], sizes = [8, 8, 16], strides = [1, 1, 1]} : vector<8x10x16xf32> to vector<8x8x16xf32>
    %19 = vector.shape_cast %18 : vector<8x8x16xf32> to vector<64x16xf32>
    %20 = vector.extract_strided_slice %2 {offsets = [32, 0], sizes = [16, 32], strides = [1, 1]} : vector<48x32xf32> to vector<16x32xf32>
    %cst_16 = arith.constant dense<0.000000e+00> : vector<64x32xf32>
    %21 = tpu.matmul %19, %20, %cst_16 {dimension_numbers = #tpu.dot_dimension_numbers<[1], [0], [0], [1], [0, 0, 1, 1], [], []>} : vector<64x16xf32>, vector<16x32xf32>, vector<64x32xf32> -> vector<64x32xf32>
    %22 = arith.addf %17, %21 : vector<64x32xf32>
    %23 = vector.broadcast %3 : vector<1x32xf32> to vector<64x32xf32>
    %24 = arith.addf %22, %23 : vector<64x32xf32>
    %cst_17 = arith.constant 0.000000e+00 : f32
    %25 = vector.broadcast %cst_17 : f32 to vector<64x32xf32>
    %26 = arith.maximumf %24, %25 : vector<64x32xf32>
    %cst_18 = arith.constant dense<0.000000e+00> : vector<64x16xf32>
    %27 = tpu.matmul %26, %4, %cst_18 {dimension_numbers = #tpu.dot_dimension_numbers<[1], [0], [0], [1], [0, 0, 1, 1], [], []>} : vector<64x32xf32>, vector<32x16xf32>, vector<64x16xf32> -> vector<64x16xf32>
    %28 = vector.broadcast %5 : vector<1x16xf32> to vector<64x16xf32>
    %29 = arith.addf %27, %28 : vector<64x16xf32>
    %30 = math.tanh %29 : vector<64x16xf32>
    %31 = vector.shape_cast %30 : vector<64x16xf32> to vector<8x8x16xf32>
    %32 = vector.shape_cast %6 : vector<1x16xf32> to vector<1x1x16xf32>
    %33 = vector.broadcast %32 : vector<1x1x16xf32> to vector<8x8x16xf32>
    %34 = arith.mulf %31, %33 : vector<8x8x16xf32>
    %cst_19 = arith.constant dense<0.000000e+00> : vector<8x8xf32>
    %35 = vector.multi_reduction <add>, %34, %cst_19 [2] : vector<8x8x16xf32> to vector<8x8xf32>
    %cst_20 = arith.constant 1.000000e+00 : f32
    %36 = vector.broadcast %cst_20 : f32 to vector<8x8xf32>
    %37 = arith.subf %36, %1 : vector<8x8xf32>
    %cst_21 = arith.constant -1.000000e+09 : f32
    %38 = vector.broadcast %cst_21 : f32 to vector<8x8xf32>
    %39 = arith.mulf %37, %38 : vector<8x8xf32>
    %40 = arith.addf %35, %39 : vector<8x8xf32>
    %cst_22 = arith.constant dense<0xFF800000> : vector<8xf32>
    %41 = vector.multi_reduction <maximumf>, %40, %cst_22 [1] : vector<8x8xf32> to vector<8xf32>
    %42 = vector.shape_cast %41 : vector<8xf32> to vector<8x1xf32>
    %43 = vector.broadcast %42 : vector<8x1xf32> to vector<8x8xf32>
    %44 = arith.subf %40, %43 : vector<8x8xf32>
    %45 = math.exp %44 : vector<8x8xf32>
    %cst_23 = arith.constant dense<0.000000e+00> : vector<8xf32>
    %46 = vector.multi_reduction <add>, %45, %cst_23 [1] : vector<8x8xf32> to vector<8xf32>
    %47 = vector.shape_cast %46 : vector<8xf32> to vector<8x1xf32>
    %48 = tpu.reciprocal %47 : vector<8x1xf32> -> vector<8x1xf32>
    %49 = vector.broadcast %48 : vector<8x1xf32> to vector<8x8xf32>
    %50 = arith.mulf %45, %49 : vector<8x8xf32>
    %51 = vector.shape_cast %26 : vector<64x32xf32> to vector<8x8x32xf32>
    %52 = vector.shape_cast %50 : vector<8x8xf32> to vector<8x8x1xf32>
    %53 = vector.broadcast %52 : vector<8x8x1xf32> to vector<8x8x32xf32>
    %54 = arith.mulf %53, %51 : vector<8x8x32xf32>
    %cst_24 = arith.constant dense<0.000000e+00> : vector<8x32xf32>
    %55 = vector.multi_reduction <add>, %54, %cst_24 [1] : vector<8x8x32xf32> to vector<8x32xf32>
    %c0_25 = arith.constant 0 : index
    %c0_26 = arith.constant 0 : index
    %c0_27 = arith.constant 0 : index
    %56 = vector.load %arg3[%c0_25, %c0_26, %c0_27] : memref<8x14x16xf32, #tpu.memory_space<vmem>>, vector<8x14x16xf32>
    %c0_28 = arith.constant 0 : index
    %c0_29 = arith.constant 0 : index
    %57 = vector.load %arg4[%c0_28, %c0_29] : memref<8x12xf32, #tpu.memory_space<vmem>>, vector<8x12xf32>
    %c0_30 = arith.constant 0 : index
    %c0_31 = arith.constant 0 : index
    %58 = vector.load %arg11[%c0_30, %c0_31] : memref<48x32xf32, #tpu.memory_space<vmem>>, vector<48x32xf32>
    %c0_32 = arith.constant 0 : index
    %c0_33 = arith.constant 0 : index
    %59 = vector.load %arg12[%c0_32, %c0_33] : memref<1x32xf32, #tpu.memory_space<vmem>>, vector<1x32xf32>
    %c0_34 = arith.constant 0 : index
    %c0_35 = arith.constant 0 : index
    %60 = vector.load %arg13[%c0_34, %c0_35] : memref<32x16xf32, #tpu.memory_space<vmem>>, vector<32x16xf32>
    %c0_36 = arith.constant 0 : index
    %c0_37 = arith.constant 0 : index
    %61 = vector.load %arg14[%c0_36, %c0_37] : memref<1x16xf32, #tpu.memory_space<vmem>>, vector<1x16xf32>
    %c0_38 = arith.constant 0 : index
    %c0_39 = arith.constant 0 : index
    %62 = vector.load %arg15[%c0_38, %c0_39] : memref<1x16xf32, #tpu.memory_space<vmem>>, vector<1x16xf32>
    %cst_40 = arith.constant 0.000000e+00 : f32
    %63 = vector.broadcast %cst_40 : f32 to vector<96x32xf32>
    %64 = vector.extract_strided_slice %56 {offsets = [0, 0, 0], sizes = [8, 12, 16], strides = [1, 1, 1]} : vector<8x14x16xf32> to vector<8x12x16xf32>
    %65 = vector.shape_cast %64 : vector<8x12x16xf32> to vector<96x16xf32>
    %66 = vector.extract_strided_slice %58 {offsets = [0, 0], sizes = [16, 32], strides = [1, 1]} : vector<48x32xf32> to vector<16x32xf32>
    %cst_41 = arith.constant dense<0.000000e+00> : vector<96x32xf32>
    %67 = tpu.matmul %65, %66, %cst_41 {dimension_numbers = #tpu.dot_dimension_numbers<[1], [0], [0], [1], [0, 0, 1, 1], [], []>} : vector<96x16xf32>, vector<16x32xf32>, vector<96x32xf32> -> vector<96x32xf32>
    %68 = arith.addf %63, %67 : vector<96x32xf32>
    %69 = vector.extract_strided_slice %56 {offsets = [0, 1, 0], sizes = [8, 12, 16], strides = [1, 1, 1]} : vector<8x14x16xf32> to vector<8x12x16xf32>
    %70 = vector.shape_cast %69 : vector<8x12x16xf32> to vector<96x16xf32>
    %71 = vector.extract_strided_slice %58 {offsets = [16, 0], sizes = [16, 32], strides = [1, 1]} : vector<48x32xf32> to vector<16x32xf32>
    %cst_42 = arith.constant dense<0.000000e+00> : vector<96x32xf32>
    %72 = tpu.matmul %70, %71, %cst_42 {dimension_numbers = #tpu.dot_dimension_numbers<[1], [0], [0], [1], [0, 0, 1, 1], [], []>} : vector<96x16xf32>, vector<16x32xf32>, vector<96x32xf32> -> vector<96x32xf32>
    %73 = arith.addf %68, %72 : vector<96x32xf32>
    %74 = vector.extract_strided_slice %56 {offsets = [0, 2, 0], sizes = [8, 12, 16], strides = [1, 1, 1]} : vector<8x14x16xf32> to vector<8x12x16xf32>
    %75 = vector.shape_cast %74 : vector<8x12x16xf32> to vector<96x16xf32>
    %76 = vector.extract_strided_slice %58 {offsets = [32, 0], sizes = [16, 32], strides = [1, 1]} : vector<48x32xf32> to vector<16x32xf32>
    %cst_43 = arith.constant dense<0.000000e+00> : vector<96x32xf32>
    %77 = tpu.matmul %75, %76, %cst_43 {dimension_numbers = #tpu.dot_dimension_numbers<[1], [0], [0], [1], [0, 0, 1, 1], [], []>} : vector<96x16xf32>, vector<16x32xf32>, vector<96x32xf32> -> vector<96x32xf32>
    %78 = arith.addf %73, %77 : vector<96x32xf32>
    %79 = vector.broadcast %59 : vector<1x32xf32> to vector<96x32xf32>
    %80 = arith.addf %78, %79 : vector<96x32xf32>
    %cst_44 = arith.constant 0.000000e+00 : f32
    %81 = vector.broadcast %cst_44 : f32 to vector<96x32xf32>
    %82 = arith.maximumf %80, %81 : vector<96x32xf32>
    %cst_45 = arith.constant dense<0.000000e+00> : vector<96x16xf32>
    %83 = tpu.matmul %82, %60, %cst_45 {dimension_numbers = #tpu.dot_dimension_numbers<[1], [0], [0], [1], [0, 0, 1, 1], [], []>} : vector<96x32xf32>, vector<32x16xf32>, vector<96x16xf32> -> vector<96x16xf32>
    %84 = vector.broadcast %61 : vector<1x16xf32> to vector<96x16xf32>
    %85 = arith.addf %83, %84 : vector<96x16xf32>
    %86 = math.tanh %85 : vector<96x16xf32>
    %87 = vector.shape_cast %86 : vector<96x16xf32> to vector<8x12x16xf32>
    %88 = vector.shape_cast %62 : vector<1x16xf32> to vector<1x1x16xf32>
    %89 = vector.broadcast %88 : vector<1x1x16xf32> to vector<8x12x16xf32>
    %90 = arith.mulf %87, %89 : vector<8x12x16xf32>
    %cst_46 = arith.constant dense<0.000000e+00> : vector<8x12xf32>
    %91 = vector.multi_reduction <add>, %90, %cst_46 [2] : vector<8x12x16xf32> to vector<8x12xf32>
    %cst_47 = arith.constant 1.000000e+00 : f32
    %92 = vector.broadcast %cst_47 : f32 to vector<8x12xf32>
    %93 = arith.subf %92, %57 : vector<8x12xf32>
    %cst_48 = arith.constant -1.000000e+09 : f32
    %94 = vector.broadcast %cst_48 : f32 to vector<8x12xf32>
    %95 = arith.mulf %93, %94 : vector<8x12xf32>
    %96 = arith.addf %91, %95 : vector<8x12xf32>
    %cst_49 = arith.constant dense<0xFF800000> : vector<8xf32>
    %97 = vector.multi_reduction <maximumf>, %96, %cst_49 [1] : vector<8x12xf32> to vector<8xf32>
    %98 = vector.shape_cast %97 : vector<8xf32> to vector<8x1xf32>
    %99 = vector.broadcast %98 : vector<8x1xf32> to vector<8x12xf32>
    %100 = arith.subf %96, %99 : vector<8x12xf32>
    %101 = math.exp %100 : vector<8x12xf32>
    %cst_50 = arith.constant dense<0.000000e+00> : vector<8xf32>
    %102 = vector.multi_reduction <add>, %101, %cst_50 [1] : vector<8x12xf32> to vector<8xf32>
    %103 = vector.shape_cast %102 : vector<8xf32> to vector<8x1xf32>
    %104 = tpu.reciprocal %103 : vector<8x1xf32> -> vector<8x1xf32>
    %105 = vector.broadcast %104 : vector<8x1xf32> to vector<8x12xf32>
    %106 = arith.mulf %101, %105 : vector<8x12xf32>
    %107 = vector.shape_cast %82 : vector<96x32xf32> to vector<8x12x32xf32>
    %108 = vector.shape_cast %106 : vector<8x12xf32> to vector<8x12x1xf32>
    %109 = vector.broadcast %108 : vector<8x12x1xf32> to vector<8x12x32xf32>
    %110 = arith.mulf %109, %107 : vector<8x12x32xf32>
    %cst_51 = arith.constant dense<0.000000e+00> : vector<8x32xf32>
    %111 = vector.multi_reduction <add>, %110, %cst_51 [1] : vector<8x12x32xf32> to vector<8x32xf32>
    %c0_52 = arith.constant 0 : index
    %c0_53 = arith.constant 0 : index
    %112 = vector.load %arg5[%c0_52, %c0_53] : memref<8x8xf32, #tpu.memory_space<vmem>>, vector<8x8xf32>
    %cst_54 = arith.constant 0.000000e+00 : f32
    %113 = vector.broadcast %cst_54 : f32 to vector<8x56xf32>
    %114 = tpu.concatenate %55, %111, %112, %113 in 1 : vector<8x32xf32>, vector<8x32xf32>, vector<8x8xf32>, vector<8x56xf32> -> vector<8x128xf32>
    %c0_55 = arith.constant 0 : index
    %c0_56 = arith.constant 0 : index
    %115 = vector.load %arg16[%c0_55, %c0_56] : memref<8x128xf32, #tpu.memory_space<vmem>>, vector<8x128xf32>
    tpu.vector_store %arg16[%c0_55, %c0_56], %114 {strides = array<i32>} : memref<8x128xf32, #tpu.memory_space<vmem>>, vector<8x128xf32>,
    return
  }
  func.func @transform_0(%arg0: i32) -> (i32, i32, i32) {
    %c0_i32 = arith.constant 0 : i32
    %c0_i32_0 = arith.constant 0 : i32
    %c0_i32_1 = arith.constant 0 : i32
    return %arg0, %c0_i32, %c0_i32_0 : i32, i32, i32
  }
  func.func @transform_1(%arg0: i32) -> (i32, i32) {
    %c0_i32 = arith.constant 0 : i32
    %c0_i32_0 = arith.constant 0 : i32
    return %arg0, %c0_i32 : i32, i32
  }
  func.func @transform_2(%arg0: i32) -> (i32, i32, i32) {
    %c0_i32 = arith.constant 0 : i32
    %c0_i32_0 = arith.constant 0 : i32
    %c0_i32_1 = arith.constant 0 : i32
    return %arg0, %c0_i32, %c0_i32_0 : i32, i32, i32
  }
  func.func @transform_3(%arg0: i32) -> (i32, i32) {
    %c0_i32 = arith.constant 0 : i32
    %c0_i32_0 = arith.constant 0 : i32
    return %arg0, %c0_i32 : i32, i32
  }
  func.func @transform_4(%arg0: i32) -> (i32, i32) {
    %c0_i32 = arith.constant 0 : i32
    %c0_i32_0 = arith.constant 0 : i32
    return %arg0, %c0_i32 : i32, i32
  }
  func.func @transform_5(%arg0: i32) -> (i32, i32) {
    %c0_i32 = arith.constant 0 : i32
    %c0_i32_0 = arith.constant 0 : i32
    %c0_i32_1 = arith.constant 0 : i32
    return %c0_i32, %c0_i32_0 : i32, i32
  }
  func.func @transform_6(%arg0: i32) -> (i32, i32) {
    %c0_i32 = arith.constant 0 : i32
    %c0_i32_0 = arith.constant 0 : i32
    %c0_i32_1 = arith.constant 0 : i32
    return %c0_i32, %c0_i32_0 : i32, i32
  }
  func.func @transform_7(%arg0: i32) -> (i32, i32) {
    %c0_i32 = arith.constant 0 : i32
    %c0_i32_0 = arith.constant 0 : i32
    %c0_i32_1 = arith.constant 0 : i32
    return %c0_i32, %c0_i32_0 : i32, i32
  }
  func.func @transform_8(%arg0: i32) -> (i32, i32) {
    %c0_i32 = arith.constant 0 : i32
    %c0_i32_0 = arith.constant 0 : i32
    %c0_i32_1 = arith.constant 0 : i32
    return %c0_i32, %c0_i32_0 : i32, i32
  }
  func.func @transform_9(%arg0: i32) -> (i32, i32) {
    %c0_i32 = arith.constant 0 : i32
    %c0_i32_0 = arith.constant 0 : i32
    %c0_i32_1 = arith.constant 0 : i32
    return %c0_i32, %c0_i32_0 : i32, i32
  }
  func.func @transform_10(%arg0: i32) -> (i32, i32) {
    %c0_i32 = arith.constant 0 : i32
    %c0_i32_0 = arith.constant 0 : i32
    %c0_i32_1 = arith.constant 0 : i32
    return %c0_i32, %c0_i32_0 : i32, i32
  }
  func.func @transform_11(%arg0: i32) -> (i32, i32) {
    %c0_i32 = arith.constant 0 : i32
    %c0_i32_0 = arith.constant 0 : i32
    %c0_i32_1 = arith.constant 0 : i32
    return %c0_i32, %c0_i32_0 : i32, i32
  }
  func.func @transform_12(%arg0: i32) -> (i32, i32) {
    %c0_i32 = arith.constant 0 : i32
    %c0_i32_0 = arith.constant 0 : i32
    %c0_i32_1 = arith.constant 0 : i32
    return %c0_i32, %c0_i32_0 : i32, i32
  }
  func.func @transform_13(%arg0: i32) -> (i32, i32) {
    %c0_i32 = arith.constant 0 : i32
    %c0_i32_0 = arith.constant 0 : i32
    %c0_i32_1 = arith.constant 0 : i32
    return %c0_i32, %c0_i32_0 : i32, i32
  }
  func.func @transform_14(%arg0: i32) -> (i32, i32) {
    %c0_i32 = arith.constant 0 : i32
    %c0_i32_0 = arith.constant 0 : i32
    %c0_i32_1 = arith.constant 0 : i32
    return %c0_i32, %c0_i32_0 : i32, i32
  }
  func.func @transform_15(%arg0: i32) -> (i32, i32) {
    %c0_i32 = arith.constant 0 : i32
    %c0_i32_0 = arith.constant 0 : i32
    return %arg0, %c0_i32 : i32, i32
  }
}

module attributes {stable_mosaic.version = 11 : i64} {
  func.func @_user_score_kernel(%arg0: memref<2x3x128xf32, #tpu.memory_space<vmem>>, %arg1: memref<8x128xf32, #tpu.memory_space<vmem>>, %arg2: memref<8x1xf32, #tpu.memory_space<vmem>>, %arg3: memref<2x128xf32, #tpu.memory_space<vmem>>, %arg4: memref<128x384xf32, #tpu.memory_space<vmem>>, %arg5: memref<128x384xf32, #tpu.memory_space<vmem>>, %arg6: memref<1x384xf32, #tpu.memory_space<vmem>>, %arg7: memref<1x384xf32, #tpu.memory_space<vmem>>, %arg8: memref<2x3xf32, #tpu.memory_space<vmem>>) attributes {dimension_semantics = [], scalar_prefetch = 0 : i64, scratch_operands = 0 : i64, tpu.core_type = #tpu.core_type<tc>} {
    %c0 = arith.constant 0 : index
    %c0_0 = arith.constant 0 : index
    %0 = vector.load %arg4[%c0, %c0_0] : memref<128x384xf32, #tpu.memory_space<vmem>>, vector<128x384xf32>
    %c0_1 = arith.constant 0 : index
    %c0_2 = arith.constant 0 : index
    %1 = vector.load %arg5[%c0_1, %c0_2] : memref<128x384xf32, #tpu.memory_space<vmem>>, vector<128x384xf32>
    %c0_3 = arith.constant 0 : index
    %c0_4 = arith.constant 0 : index
    %2 = vector.load %arg6[%c0_3, %c0_4] : memref<1x384xf32, #tpu.memory_space<vmem>>, vector<1x384xf32>
    %c0_5 = arith.constant 0 : index
    %c0_6 = arith.constant 0 : index
    %3 = vector.load %arg7[%c0_5, %c0_6] : memref<1x384xf32, #tpu.memory_space<vmem>>, vector<1x384xf32>
    %c0_7 = arith.constant 0 : index
    %c0_8 = arith.constant 0 : index
    %4 = vector.load %arg1[%c0_7, %c0_8] : memref<8x128xf32, #tpu.memory_space<vmem>>, vector<8x128xf32>
    %cst = arith.constant dense<0.000000e+00> : vector<8x384xf32>
    %5 = tpu.matmul %4, %0, %cst {dimension_numbers = #tpu.dot_dimension_numbers<[1], [0], [0], [1], [0, 0, 1, 1], [], []>} : vector<8x128xf32>, vector<128x384xf32>, vector<8x384xf32> -> vector<8x384xf32>
    %6 = vector.broadcast %2 : vector<1x384xf32> to vector<8x384xf32>
    %7 = arith.addf %5, %6 : vector<8x384xf32>
    %8 = vector.extract_strided_slice %7 {offsets = [0, 0], sizes = [8, 128], strides = [1, 1]} : vector<8x384xf32> to vector<8x128xf32>
    %9 = vector.shape_cast %8 : vector<8x128xf32> to vector<4x2x128xf32>
    %10 = vector.extract_strided_slice %7 {offsets = [0, 128], sizes = [8, 128], strides = [1, 1]} : vector<8x384xf32> to vector<8x128xf32>
    %c0_9 = arith.constant 0 : index
    %c0_10 = arith.constant 0 : index
    %11 = vector.load %arg2[%c0_9, %c0_10] : memref<8x1xf32, #tpu.memory_space<vmem>>, vector<8x1xf32>
    %cst_11 = arith.constant 1.000000e+00 : f32
    %12 = vector.broadcast %cst_11 : f32 to vector<8x1xf32>
    %13 = arith.subf %12, %11 : vector<8x1xf32>
    %cst_12 = arith.constant 1.000000e+09 : f32
    %14 = vector.broadcast %cst_12 : f32 to vector<8x1xf32>
    %15 = arith.mulf %13, %14 : vector<8x1xf32>
    %16 = vector.broadcast %15 : vector<8x1xf32> to vector<8x128xf32>
    %17 = arith.addf %10, %16 : vector<8x128xf32>
    %18 = vector.shape_cast %17 : vector<8x128xf32> to vector<4x2x128xf32>
    %19 = vector.extract_strided_slice %7 {offsets = [0, 256], sizes = [8, 128], strides = [1, 1]} : vector<8x384xf32> to vector<8x128xf32>
    %20 = vector.shape_cast %19 : vector<8x128xf32> to vector<4x2x128xf32>
    %c0_13 = arith.constant 0 : index
    %c0_14 = arith.constant 0 : index
    %21 = vector.load %arg3[%c0_13, %c0_14] : memref<2x128xf32, #tpu.memory_space<vmem>>, vector<2x128xf32>
    %cst_15 = arith.constant dense<0.000000e+00> : vector<2x384xf32>
    %22 = tpu.matmul %21, %1, %cst_15 {dimension_numbers = #tpu.dot_dimension_numbers<[1], [0], [0], [1], [0, 0, 1, 1], [], []>} : vector<2x128xf32>, vector<128x384xf32>, vector<2x384xf32> -> vector<2x384xf32>
    %23 = vector.broadcast %3 : vector<1x384xf32> to vector<2x384xf32>
    %24 = arith.addf %22, %23 : vector<2x384xf32>
    %25 = vector.extract_strided_slice %9 {offsets = [0, 0, 0], sizes = [1, 2, 128], strides = [1, 1, 1]} : vector<4x2x128xf32> to vector<1x2x128xf32>
    %26 = vector.shape_cast %25 : vector<1x2x128xf32> to vector<2x128xf32>
    %27 = vector.extract_strided_slice %24 {offsets = [0, 0], sizes = [2, 128], strides = [1, 1]} : vector<2x384xf32> to vector<2x128xf32>
    %28 = arith.addf %26, %27 : vector<2x128xf32>
    %29 = arith.negf %28 : vector<2x128xf32>
    %30 = math.exp %29 : vector<2x128xf32>
    %cst_16 = arith.constant 1.000000e+00 : f32
    %31 = vector.broadcast %cst_16 : f32 to vector<2x128xf32>
    %32 = arith.addf %31, %30 : vector<2x128xf32>
    %33 = arith.divf %31, %32 : vector<2x128xf32>
    %34 = vector.extract_strided_slice %18 {offsets = [0, 0, 0], sizes = [1, 2, 128], strides = [1, 1, 1]} : vector<4x2x128xf32> to vector<1x2x128xf32>
    %35 = vector.shape_cast %34 : vector<1x2x128xf32> to vector<2x128xf32>
    %36 = vector.extract_strided_slice %24 {offsets = [0, 128], sizes = [2, 128], strides = [1, 1]} : vector<2x384xf32> to vector<2x128xf32>
    %37 = arith.addf %35, %36 : vector<2x128xf32>
    %38 = arith.negf %37 : vector<2x128xf32>
    %39 = math.exp %38 : vector<2x128xf32>
    %cst_17 = arith.constant 1.000000e+00 : f32
    %40 = vector.broadcast %cst_17 : f32 to vector<2x128xf32>
    %41 = arith.addf %40, %39 : vector<2x128xf32>
    %42 = arith.divf %40, %41 : vector<2x128xf32>
    %43 = vector.extract_strided_slice %20 {offsets = [0, 0, 0], sizes = [1, 2, 128], strides = [1, 1, 1]} : vector<4x2x128xf32> to vector<1x2x128xf32>
    %44 = vector.shape_cast %43 : vector<1x2x128xf32> to vector<2x128xf32>
    %45 = vector.extract_strided_slice %24 {offsets = [0, 256], sizes = [2, 128], strides = [1, 1]} : vector<2x384xf32> to vector<2x128xf32>
    %46 = arith.mulf %33, %45 : vector<2x128xf32>
    %47 = arith.addf %44, %46 : vector<2x128xf32>
    %48 = math.tanh %47 : vector<2x128xf32>
    %cst_18 = arith.constant 1.000000e+00 : f32
    %49 = vector.broadcast %cst_18 : f32 to vector<2x128xf32>
    %50 = arith.subf %49, %42 : vector<2x128xf32>
    %51 = arith.mulf %50, %48 : vector<2x128xf32>
    %52 = arith.mulf %42, %21 : vector<2x128xf32>
    %53 = arith.addf %51, %52 : vector<2x128xf32>
    %cst_19 = arith.constant dense<0.000000e+00> : vector<2x384xf32>
    %54 = tpu.matmul %53, %1, %cst_19 {dimension_numbers = #tpu.dot_dimension_numbers<[1], [0], [0], [1], [0, 0, 1, 1], [], []>} : vector<2x128xf32>, vector<128x384xf32>, vector<2x384xf32> -> vector<2x384xf32>
    %55 = vector.broadcast %3 : vector<1x384xf32> to vector<2x384xf32>
    %56 = arith.addf %54, %55 : vector<2x384xf32>
    %57 = vector.extract_strided_slice %9 {offsets = [1, 0, 0], sizes = [1, 2, 128], strides = [1, 1, 1]} : vector<4x2x128xf32> to vector<1x2x128xf32>
    %58 = vector.shape_cast %57 : vector<1x2x128xf32> to vector<2x128xf32>
    %59 = vector.extract_strided_slice %56 {offsets = [0, 0], sizes = [2, 128], strides = [1, 1]} : vector<2x384xf32> to vector<2x128xf32>
    %60 = arith.addf %58, %59 : vector<2x128xf32>
    %61 = arith.negf %60 : vector<2x128xf32>
    %62 = math.exp %61 : vector<2x128xf32>
    %cst_20 = arith.constant 1.000000e+00 : f32
    %63 = vector.broadcast %cst_20 : f32 to vector<2x128xf32>
    %64 = arith.addf %63, %62 : vector<2x128xf32>
    %65 = arith.divf %63, %64 : vector<2x128xf32>
    %66 = vector.extract_strided_slice %18 {offsets = [1, 0, 0], sizes = [1, 2, 128], strides = [1, 1, 1]} : vector<4x2x128xf32> to vector<1x2x128xf32>
    %67 = vector.shape_cast %66 : vector<1x2x128xf32> to vector<2x128xf32>
    %68 = vector.extract_strided_slice %56 {offsets = [0, 128], sizes = [2, 128], strides = [1, 1]} : vector<2x384xf32> to vector<2x128xf32>
    %69 = arith.addf %67, %68 : vector<2x128xf32>
    %70 = arith.negf %69 : vector<2x128xf32>
    %71 = math.exp %70 : vector<2x128xf32>
    %cst_21 = arith.constant 1.000000e+00 : f32
    %72 = vector.broadcast %cst_21 : f32 to vector<2x128xf32>
    %73 = arith.addf %72, %71 : vector<2x128xf32>
    %74 = arith.divf %72, %73 : vector<2x128xf32>
    %75 = vector.extract_strided_slice %20 {offsets = [1, 0, 0], sizes = [1, 2, 128], strides = [1, 1, 1]} : vector<4x2x128xf32> to vector<1x2x128xf32>
    %76 = vector.shape_cast %75 : vector<1x2x128xf32> to vector<2x128xf32>
    %77 = vector.extract_strided_slice %56 {offsets = [0, 256], sizes = [2, 128], strides = [1, 1]} : vector<2x384xf32> to vector<2x128xf32>
    %78 = arith.mulf %65, %77 : vector<2x128xf32>
    %79 = arith.addf %76, %78 : vector<2x128xf32>
    %80 = math.tanh %79 : vector<2x128xf32>
    %cst_22 = arith.constant 1.000000e+00 : f32
    %81 = vector.broadcast %cst_22 : f32 to vector<2x128xf32>
    %82 = arith.subf %81, %74 : vector<2x128xf32>
    %83 = arith.mulf %82, %80 : vector<2x128xf32>
    %84 = arith.mulf %74, %53 : vector<2x128xf32>
    %85 = arith.addf %83, %84 : vector<2x128xf32>
    %cst_23 = arith.constant dense<0.000000e+00> : vector<2x384xf32>
    %86 = tpu.matmul %85, %1, %cst_23 {dimension_numbers = #tpu.dot_dimension_numbers<[1], [0], [0], [1], [0, 0, 1, 1], [], []>} : vector<2x128xf32>, vector<128x384xf32>, vector<2x384xf32> -> vector<2x384xf32>
    %87 = vector.broadcast %3 : vector<1x384xf32> to vector<2x384xf32>
    %88 = arith.addf %86, %87 : vector<2x384xf32>
    %89 = vector.extract_strided_slice %9 {offsets = [2, 0, 0], sizes = [1, 2, 128], strides = [1, 1, 1]} : vector<4x2x128xf32> to vector<1x2x128xf32>
    %90 = vector.shape_cast %89 : vector<1x2x128xf32> to vector<2x128xf32>
    %91 = vector.extract_strided_slice %88 {offsets = [0, 0], sizes = [2, 128], strides = [1, 1]} : vector<2x384xf32> to vector<2x128xf32>
    %92 = arith.addf %90, %91 : vector<2x128xf32>
    %93 = arith.negf %92 : vector<2x128xf32>
    %94 = math.exp %93 : vector<2x128xf32>
    %cst_24 = arith.constant 1.000000e+00 : f32
    %95 = vector.broadcast %cst_24 : f32 to vector<2x128xf32>
    %96 = arith.addf %95, %94 : vector<2x128xf32>
    %97 = arith.divf %95, %96 : vector<2x128xf32>
    %98 = vector.extract_strided_slice %18 {offsets = [2, 0, 0], sizes = [1, 2, 128], strides = [1, 1, 1]} : vector<4x2x128xf32> to vector<1x2x128xf32>
    %99 = vector.shape_cast %98 : vector<1x2x128xf32> to vector<2x128xf32>
    %100 = vector.extract_strided_slice %88 {offsets = [0, 128], sizes = [2, 128], strides = [1, 1]} : vector<2x384xf32> to vector<2x128xf32>
    %101 = arith.addf %99, %100 : vector<2x128xf32>
    %102 = arith.negf %101 : vector<2x128xf32>
    %103 = math.exp %102 : vector<2x128xf32>
    %cst_25 = arith.constant 1.000000e+00 : f32
    %104 = vector.broadcast %cst_25 : f32 to vector<2x128xf32>
    %105 = arith.addf %104, %103 : vector<2x128xf32>
    %106 = arith.divf %104, %105 : vector<2x128xf32>
    %107 = vector.extract_strided_slice %20 {offsets = [2, 0, 0], sizes = [1, 2, 128], strides = [1, 1, 1]} : vector<4x2x128xf32> to vector<1x2x128xf32>
    %108 = vector.shape_cast %107 : vector<1x2x128xf32> to vector<2x128xf32>
    %109 = vector.extract_strided_slice %88 {offsets = [0, 256], sizes = [2, 128], strides = [1, 1]} : vector<2x384xf32> to vector<2x128xf32>
    %110 = arith.mulf %97, %109 : vector<2x128xf32>
    %111 = arith.addf %108, %110 : vector<2x128xf32>
    %112 = math.tanh %111 : vector<2x128xf32>
    %cst_26 = arith.constant 1.000000e+00 : f32
    %113 = vector.broadcast %cst_26 : f32 to vector<2x128xf32>
    %114 = arith.subf %113, %106 : vector<2x128xf32>
    %115 = arith.mulf %114, %112 : vector<2x128xf32>
    %116 = arith.mulf %106, %85 : vector<2x128xf32>
    %117 = arith.addf %115, %116 : vector<2x128xf32>
    %cst_27 = arith.constant dense<0.000000e+00> : vector<2x384xf32>
    %118 = tpu.matmul %117, %1, %cst_27 {dimension_numbers = #tpu.dot_dimension_numbers<[1], [0], [0], [1], [0, 0, 1, 1], [], []>} : vector<2x128xf32>, vector<128x384xf32>, vector<2x384xf32> -> vector<2x384xf32>
    %119 = vector.broadcast %3 : vector<1x384xf32> to vector<2x384xf32>
    %120 = arith.addf %118, %119 : vector<2x384xf32>
    %121 = vector.extract_strided_slice %9 {offsets = [3, 0, 0], sizes = [1, 2, 128], strides = [1, 1, 1]} : vector<4x2x128xf32> to vector<1x2x128xf32>
    %122 = vector.shape_cast %121 : vector<1x2x128xf32> to vector<2x128xf32>
    %123 = vector.extract_strided_slice %120 {offsets = [0, 0], sizes = [2, 128], strides = [1, 1]} : vector<2x384xf32> to vector<2x128xf32>
    %124 = arith.addf %122, %123 : vector<2x128xf32>
    %125 = arith.negf %124 : vector<2x128xf32>
    %126 = math.exp %125 : vector<2x128xf32>
    %cst_28 = arith.constant 1.000000e+00 : f32
    %127 = vector.broadcast %cst_28 : f32 to vector<2x128xf32>
    %128 = arith.addf %127, %126 : vector<2x128xf32>
    %129 = arith.divf %127, %128 : vector<2x128xf32>
    %130 = vector.extract_strided_slice %18 {offsets = [3, 0, 0], sizes = [1, 2, 128], strides = [1, 1, 1]} : vector<4x2x128xf32> to vector<1x2x128xf32>
    %131 = vector.shape_cast %130 : vector<1x2x128xf32> to vector<2x128xf32>
    %132 = vector.extract_strided_slice %120 {offsets = [0, 128], sizes = [2, 128], strides = [1, 1]} : vector<2x384xf32> to vector<2x128xf32>
    %133 = arith.addf %131, %132 : vector<2x128xf32>
    %134 = arith.negf %133 : vector<2x128xf32>
    %135 = math.exp %134 : vector<2x128xf32>
    %cst_29 = arith.constant 1.000000e+00 : f32
    %136 = vector.broadcast %cst_29 : f32 to vector<2x128xf32>
    %137 = arith.addf %136, %135 : vector<2x128xf32>
    %138 = arith.divf %136, %137 : vector<2x128xf32>
    %139 = vector.extract_strided_slice %20 {offsets = [3, 0, 0], sizes = [1, 2, 128], strides = [1, 1, 1]} : vector<4x2x128xf32> to vector<1x2x128xf32>
    %140 = vector.shape_cast %139 : vector<1x2x128xf32> to vector<2x128xf32>
    %141 = vector.extract_strided_slice %120 {offsets = [0, 256], sizes = [2, 128], strides = [1, 1]} : vector<2x384xf32> to vector<2x128xf32>
    %142 = arith.mulf %129, %141 : vector<2x128xf32>
    %143 = arith.addf %140, %142 : vector<2x128xf32>
    %144 = math.tanh %143 : vector<2x128xf32>
    %cst_30 = arith.constant 1.000000e+00 : f32
    %145 = vector.broadcast %cst_30 : f32 to vector<2x128xf32>
    %146 = arith.subf %145, %138 : vector<2x128xf32>
    %147 = arith.mulf %146, %144 : vector<2x128xf32>
    %148 = arith.mulf %138, %117 : vector<2x128xf32>
    %149 = arith.addf %147, %148 : vector<2x128xf32>
    %c0_31 = arith.constant 0 : index
    %c0_32 = arith.constant 0 : index
    %c0_33 = arith.constant 0 : index
    %150 = vector.load %arg0[%c0_31, %c0_32, %c0_33] : memref<2x3x128xf32, #tpu.memory_space<vmem>>, vector<2x3x128xf32>
    %151 = vector.shape_cast %149 : vector<2x128xf32> to vector<2x1x128xf32>
    %152 = vector.broadcast %151 : vector<2x1x128xf32> to vector<2x3x128xf32>
    %153 = arith.mulf %150, %152 : vector<2x3x128xf32>
    %cst_34 = arith.constant dense<0.000000e+00> : vector<2x3xf32>
    %154 = vector.multi_reduction <add>, %153, %cst_34 [2] : vector<2x3x128xf32> to vector<2x3xf32>
    %c0_35 = arith.constant 0 : index
    %c0_36 = arith.constant 0 : index
    %155 = vector.load %arg8[%c0_35, %c0_36] : memref<2x3xf32, #tpu.memory_space<vmem>>, vector<2x3xf32>
    tpu.vector_store %arg8[%c0_35, %c0_36], %154 {strides = array<i32>} : memref<2x3xf32, #tpu.memory_space<vmem>>, vector<2x3xf32>,
    return
  }
}

</mosaic_0001>

<llo_original>
// kernel: lstur_forward.2
$region0: #{lstur_forward.2}
  #allocation0 [shape = 'u32[]', space=smem, size = 0x4, offset = 0x4, fixed_abs, tag = 'smem constant byte address 0x4 - core index']
  #allocation1 [shape = 'u32[144,128]{1,0:T(1,128)}', space=vmem, size = 0x12000, scoped, tag = 'internal scratch']
  %s0 = inlined_call_operand.vmem [shape: f32[16,10,16], index: 0, kind: input, shape index: {}]
  %s1 = inlined_call_operand.vmem [shape: f32[16,8], index: 1, kind: input, shape index: {}]
  %s2 = inlined_call_operand.vmem [shape: f32[16,14,16], index: 2, kind: input, shape index: {}]
  %s3 = inlined_call_operand.vmem [shape: f32[16,12], index: 3, kind: input, shape index: {}]
  %s4 = inlined_call_operand.vmem [shape: f32[16,8], index: 4, kind: input, shape index: {}]
  %s5 = inlined_call_operand.vmem [shape: f32[48,32], index: 5, kind: input, shape index: {}]
  %s6 = inlined_call_operand.vmem [shape: f32[1,32], index: 6, kind: input, shape index: {}]
  %s7 = inlined_call_operand.vmem [shape: f32[32,16], index: 7, kind: input, shape index: {}]
  %s8 = inlined_call_operand.vmem [shape: f32[1,16], index: 8, kind: input, shape index: {}]
  %s9 = inlined_call_operand.vmem [shape: f32[1,16], index: 9, kind: input, shape index: {}]
  %s10 = inlined_call_operand.vmem [shape: f32[48,32], index: 10, kind: input, shape index: {}]
  %s11 = inlined_call_operand.vmem [shape: f32[1,32], index: 11, kind: input, shape index: {}]
  %s12 = inlined_call_operand.vmem [shape: f32[32,16], index: 12, kind: input, shape index: {}]
  %s13 = inlined_call_operand.vmem [shape: f32[1,16], index: 13, kind: input, shape index: {}]
  %s14 = inlined_call_operand.vmem [shape: f32[1,16], index: 14, kind: input, shape index: {}]
  %s15 = inlined_call_operand.vmem [shape: f32[16,128], index: 15, kind: output, shape index: {}]
  %s16 = sld [smem:[#allocation0]]
  $region93: #{lstur_forward.2} parent=0
    _
  %s18 = ssub.s32 1, %s16
  %s19 = scalar_select 0, %s18, %s16
  loop: start=0, step=1, limit=4
  $region2: #{lstur_forward.2} parent=0 // loop_pre_header
    _
  $region3: #{lstur_forward.2} parent=0 // loop_header
    %s21 = sphi 0, %s25
    %p22 = scmp.ge.s32.totalorder %s21, 4
    %s31 = sphi 0, %s33
    %s34 = sphi 0, %s31
    %s35 = sphi 0, %s34
    %s51 = sphi 0, %s35
    %s57 = sphi 0, %s59
    %s60 = sphi 0, %s57
    %s61 = sphi 0, %s60
    %s77 = sphi 0, %s61
    %s83 = sphi 0, %s85
    %s86 = sphi 0, %s83
    %s87 = sphi 0, %s86
    %s103 = sphi 0, %s87
    %s109 = sphi 0, %s111
    %s112 = sphi 0, %s109
    %s113 = sphi 0, %s112
    %s129 = sphi 0, %s113
    %s135 = sphi 0, %s137
    %s138 = sphi 0, %s135
    %s139 = sphi 0, %s138
    %s155 = sphi 0, %s139
    %s159 = sphi 0, %s159
    %s161 = sphi 0, %s159
    %s162 = sphi 0, %s161
    %s176 = sphi 0, %s162
    %s180 = sphi 0, %s180
    %s182 = sphi 0, %s180
    %s183 = sphi 0, %s182
    %s197 = sphi 0, %s183
    %s201 = sphi 0, %s201
    %s203 = sphi 0, %s201
    %s204 = sphi 0, %s203
    %s218 = sphi 0, %s204
    %s222 = sphi 0, %s222
    %s224 = sphi 0, %s222
    %s225 = sphi 0, %s224
    %s239 = sphi 0, %s225
    %s243 = sphi 0, %s243
    %s245 = sphi 0, %s243
    %s246 = sphi 0, %s245
    %s260 = sphi 0, %s246
    %s264 = sphi 0, %s264
    %s266 = sphi 0, %s264
    %s267 = sphi 0, %s266
    %s281 = sphi 0, %s267
    %s285 = sphi 0, %s285
    %s287 = sphi 0, %s285
    %s288 = sphi 0, %s287
    %s302 = sphi 0, %s288
    %s306 = sphi 0, %s306
    %s308 = sphi 0, %s306
    %s309 = sphi 0, %s308
    %s323 = sphi 0, %s309
    %s327 = sphi 0, %s327
    %s329 = sphi 0, %s327
    %s330 = sphi 0, %s329
    %s344 = sphi 0, %s330
    %s348 = sphi 0, %s348
    %s350 = sphi 0, %s348
    %s351 = sphi 0, %s350
    %s365 = sphi 0, %s351
    %s371 = sphi 0, %s373
    %s374 = sphi 0, %s371
    %s375 = sphi 0, %s374
    %s391 = sphi 0, %s375
  $region4: #{lstur_forward.2} parent=0 // loop_header_branch
    %24 = sbr.rel (%p22) target = $region8
  $region5: #{lstur_forward.2} parent=0 // loop_body
    %s26 = ssub.s32 %s21, 1
    %s27 = ssub.s32 %s21, 2
    %s28 = sadd.s32 %s21, 1
    %s29 = ssub.s32 %s21, %s28
    %p30 = scmp.eq.s32.totalorder %s29, 0
    %s32 = sadd.s32 %s31, 1
    %s33 = scalar_select %p30, %s31, %s32
    %p36 = pneg %p30
    %p37 = scmp.eq.s32.totalorder %s21, 1
    %p38 = por %p36, %p37
    %p39 = scmp.ne.s32.totalorder %s31, %s34
    %p40 = scmp.eq.s32.totalorder %s21, 0
    %p41 = por %p39, %p40
    %p42 = scmp.ne.s32.totalorder %s31, %s34
    %p43 = scmp.eq.s32.totalorder %s26, 1
    %p44 = por %p42, %p43
    %p45 = scmp.ne.s32.totalorder %s34, %s35
    %p46 = scmp.eq.s32.totalorder %s26, 0
    %p47 = por %p45, %p46
    %p48 = scmp.ne.s32.totalorder %s34, %s35
    %p49 = scmp.eq.s32.totalorder %s27, 1
    %p50 = por %p48, %p49
    %p52 = scmp.ne.s32.totalorder %s35, %s51
    %p53 = scmp.eq.s32.totalorder %s27, 0
    %p54 = por %p52, %p53
    %s55 = ssub.s32 %s21, %s28
    %p56 = scmp.eq.s32.totalorder %s55, 0
    %s58 = sadd.s32 %s57, 1
    %s59 = scalar_select %p56, %s57, %s58
    %p62 = pneg %p56
    %p63 = scmp.eq.s32.totalorder %s21, 1
    %p64 = por %p62, %p63
    %p65 = scmp.ne.s32.totalorder %s57, %s60
    %p66 = scmp.eq.s32.totalorder %s21, 0
    %p67 = por %p65, %p66
    %p68 = scmp.ne.s32.totalorder %s57, %s60
    %p69 = scmp.eq.s32.totalorder %s26, 1
    %p70 = por %p68, %p69
    %p71 = scmp.ne.s32.totalorder %s60, %s61
    %p72 = scmp.eq.s32.totalorder %s26, 0
    %p73 = por %p71, %p72
    %p74 = scmp.ne.s32.totalorder %s60, %s61
    %p75 = scmp.eq.s32.totalorder %s27, 1
    %p76 = por %p74, %p75
    %p78 = scmp.ne.s32.totalorder %s61, %s77
    %p79 = scmp.eq.s32.totalorder %s27, 0
    %p80 = por %p78, %p79
    %s81 = ssub.s32 %s21, %s28
    %p82 = scmp.eq.s32.totalorder %s81, 0
    %s84 = sadd.s32 %s83, 1
    %s85 = scalar_select %p82, %s83, %s84
    %p88 = pneg %p82
    %p89 = scmp.eq.s32.totalorder %s21, 1
    %p90 = por %p88, %p89
    %p91 = scmp.ne.s32.totalorder %s83, %s86
    %p92 = scmp.eq.s32.totalorder %s21, 0
    %p93 = por %p91, %p92
    %p94 = scmp.ne.s32.totalorder %s83, %s86
    %p95 = scmp.eq.s32.totalorder %s26, 1
    %p96 = por %p94, %p95
    %p97 = scmp.ne.s32.totalorder %s86, %s87
    %p98 = scmp.eq.s32.totalorder %s26, 0
    %p99 = por %p97, %p98
    %p100 = scmp.ne.s32.totalorder %s86, %s87
    %p101 = scmp.eq.s32.totalorder %s27, 1
    %p102 = por %p100, %p101
    %p104 = scmp.ne.s32.totalorder %s87, %s103
    %p105 = scmp.eq.s32.totalorder %s27, 0
    %p106 = por %p104, %p105
    %s107 = ssub.s32 %s21, %s28
    %p108 = scmp.eq.s32.totalorder %s107, 0
    %s110 = sadd.s32 %s109, 1
    %s111 = scalar_select %p108, %s109, %s110
    %p114 = pneg %p108
    %p115 = scmp.eq.s32.totalorder %s21, 1
    %p116 = por %p114, %p115
    %p117 = scmp.ne.s32.totalorder %s109, %s112
    %p118 = scmp.eq.s32.totalorder %s21, 0
    %p119 = por %p117, %p118
    %p120 = scmp.ne.s32.totalorder %s109, %s112
    %p121 = scmp.eq.s32.totalorder %s26, 1
    %p122 = por %p120, %p121
    %p123 = scmp.ne.s32.totalorder %s112, %s113
    %p124 = scmp.eq.s32.totalorder %s26, 0
    %p125 = por %p123, %p124
    %p126 = scmp.ne.s32.totalorder %s112, %s113
    %p127 = scmp.eq.s32.totalorder %s27, 1
    %p128 = por %p126, %p127
    %p130 = scmp.ne.s32.totalorder %s113, %s129
    %p131 = scmp.eq.s32.totalorder %s27, 0
    %p132 = por %p130, %p131
    %s133 = ssub.s32 %s21, %s28
    %p134 = scmp.eq.s32.totalorder %s133, 0
    %s136 = sadd.s32 %s135, 1
    %s137 = scalar_select %p134, %s135, %s136
    %p140 = pneg %p134
    %p141 = scmp.eq.s32.totalorder %s21, 1
    %p142 = por %p140, %p141
    %p143 = scmp.ne.s32.totalorder %s135, %s138
    %p144 = scmp.eq.s32.totalorder %s21, 0
    %p145 = por %p143, %p144
    %p146 = scmp.ne.s32.totalorder %s135, %s138
    %p147 = scmp.eq.s32.totalorder %s26, 1
    %p148 = por %p146, %p147
    %p149 = scmp.ne.s32.totalorder %s138, %s139
    %p150 = scmp.eq.s32.totalorder %s26, 0
    %p151 = por %p149, %p150
    %p152 = scmp.ne.s32.totalorder %s138, %s139
    %p153 = scmp.eq.s32.totalorder %s27, 1
    %p154 = por %p152, %p153
    %p156 = scmp.ne.s32.totalorder %s139, %s155
    %p157 = scmp.eq.s32.totalorder %s27, 0
    %p158 = por %p156, %p157
    %s160 = sadd.s32 %s159, 1
    %p163 = scmp.eq.s32.totalorder %s21, 1
    %p164 = scmp.ne.s32.totalorder %s159, %s161
    %p165 = scmp.eq.s32.totalorder %s21, 0
    %p166 = por %p164, %p165
    %p167 = scmp.ne.s32.totalorder %s159, %s161
    %p168 = scmp.eq.s32.totalorder %s26, 1
    %p169 = por %p167, %p168
    %p170 = scmp.ne.s32.totalorder %s161, %s162
    %p171 = scmp.eq.s32.totalorder %s26, 0
    %p172 = por %p170, %p171
    %p173 = scmp.ne.s32.totalorder %s161, %s162
    %p174 = scmp.eq.s32.totalorder %s27, 1
    %p175 = por %p173, %p174
    %p177 = scmp.ne.s32.totalorder %s162, %s176
    %p178 = scmp.eq.s32.totalorder %s27, 0
    %p179 = por %p177, %p178
    %s181 = sadd.s32 %s180, 1
    %p184 = scmp.eq.s32.totalorder %s21, 1
    %p185 = scmp.ne.s32.totalorder %s180, %s182
    %p186 = scmp.eq.s32.totalorder %s21, 0
    %p187 = por %p185, %p186
    %p188 = scmp.ne.s32.totalorder %s180, %s182
    %p189 = scmp.eq.s32.totalorder %s26, 1
    %p190 = por %p188, %p189
    %p191 = scmp.ne.s32.totalorder %s182, %s183
    %p192 = scmp.eq.s32.totalorder %s26, 0
    %p193 = por %p191, %p192
    %p194 = scmp.ne.s32.totalorder %s182, %s183
    %p195 = scmp.eq.s32.totalorder %s27, 1
    %p196 = por %p194, %p195
    %p198 = scmp.ne.s32.totalorder %s183, %s197
    %p199 = scmp.eq.s32.totalorder %s27, 0
    %p200 = por %p198, %p199
    %s202 = sadd.s32 %s201, 1
    %p205 = scmp.eq.s32.totalorder %s21, 1
    %p206 = scmp.ne.s32.totalorder %s201, %s203
    %p207 = scmp.eq.s32.totalorder %s21, 0
    %p208 = por %p206, %p207
    %p209 = scmp.ne.s32.totalorder %s201, %s203
    %p210 = scmp.eq.s32.totalorder %s26, 1
    %p211 = por %p209, %p210
    %p212 = scmp.ne.s32.totalorder %s203, %s204
    %p213 = scmp.eq.s32.totalorder %s26, 0
    %p214 = por %p212, %p213
    %p215 = scmp.ne.s32.totalorder %s203, %s204
    %p216 = scmp.eq.s32.totalorder %s27, 1
    %p217 = por %p215, %p216
    %p219 = scmp.ne.s32.totalorder %s204, %s218
    %p220 = scmp.eq.s32.totalorder %s27, 0
    %p221 = por %p219, %p220
    %s223 = sadd.s32 %s222, 1
    %p226 = scmp.eq.s32.totalorder %s21, 1
    %p227 = scmp.ne.s32.totalorder %s222, %s224
    %p228 = scmp.eq.s32.totalorder %s21, 0
    %p229 = por %p227, %p228
    %p230 = scmp.ne.s32.totalorder %s222, %s224
    %p231 = scmp.eq.s32.totalorder %s26, 1
    %p232 = por %p230, %p231
    %p233 = scmp.ne.s32.totalorder %s224, %s225
    %p234 = scmp.eq.s32.totalorder %s26, 0
    %p235 = por %p233, %p234
    %p236 = scmp.ne.s32.totalorder %s224, %s225
    %p237 = scmp.eq.s32.totalorder %s27, 1
    %p238 = por %p236, %p237
    %p240 = scmp.ne.s32.totalorder %s225, %s239
    %p241 = scmp.eq.s32.totalorder %s27, 0
    %p242 = por %p240, %p241
    %s244 = sadd.s32 %s243, 1
    %p247 = scmp.eq.s32.totalorder %s21, 1
    %p248 = scmp.ne.s32.totalorder %s243, %s245
    %p249 = scmp.eq.s32.totalorder %s21, 0
    %p250 = por %p248, %p249
    %p251 = scmp.ne.s32.totalorder %s243, %s245
    %p252 = scmp.eq.s32.totalorder %s26, 1
    %p253 = por %p251, %p252
    %p254 = scmp.ne.s32.totalorder %s245, %s246
    %p255 = scmp.eq.s32.totalorder %s26, 0
    %p256 = por %p254, %p255
    %p257 = scmp.ne.s32.totalorder %s245, %s246
    %p258 = scmp.eq.s32.totalorder %s27, 1
    %p259 = por %p257, %p258
    %p261 = scmp.ne.s32.totalorder %s246, %s260
    %p262 = scmp.eq.s32.totalorder %s27, 0
    %p263 = por %p261, %p262
    %s265 = sadd.s32 %s264, 1
    %p268 = scmp.eq.s32.totalorder %s21, 1
    %p269 = scmp.ne.s32.totalorder %s264, %s266
    %p270 = scmp.eq.s32.totalorder %s21, 0
    %p271 = por %p269, %p270
    %p272 = scmp.ne.s32.totalorder %s264, %s266
    %p273 = scmp.eq.s32.totalorder %s26, 1
    %p274 = por %p272, %p273
    %p275 = scmp.ne.s32.totalorder %s266, %s267
    %p276 = scmp.eq.s32.totalorder %s26, 0
    %p277 = por %p275, %p276
    %p278 = scmp.ne.s32.totalorder %s266, %s267
    %p279 = scmp.eq.s32.totalorder %s27, 1
    %p280 = por %p278, %p279
    %p282 = scmp.ne.s32.totalorder %s267, %s281
    %p283 = scmp.eq.s32.totalorder %s27, 0
    %p284 = por %p282, %p283
    %s286 = sadd.s32 %s285, 1
    %p289 = scmp.eq.s32.totalorder %s21, 1
    %p290 = scmp.ne.s32.totalorder %s285, %s287
    %p291 = scmp.eq.s32.totalorder %s21, 0
    %p292 = por %p290, %p291
    %p293 = scmp.ne.s32.totalorder %s285, %s287
    %p294 = scmp.eq.s32.totalorder %s26, 1
    %p295 = por %p293, %p294
    %p296 = scmp.ne.s32.totalorder %s287, %s288
    %p297 = scmp.eq.s32.totalorder %s26, 0
    %p298 = por %p296, %p297
    %p299 = scmp.ne.s32.totalorder %s287, %s288
    %p300 = scmp.eq.s32.totalorder %s27, 1
    %p301 = por %p299, %p300
    %p303 = scmp.ne.s32.totalorder %s288, %s302
    %p304 = scmp.eq.s32.totalorder %s27, 0
    %p305 = por %p303, %p304
    %s307 = sadd.s32 %s306, 1
    %p310 = scmp.eq.s32.totalorder %s21, 1
    %p311 = scmp.ne.s32.totalorder %s306, %s308
    %p312 = scmp.eq.s32.totalorder %s21, 0
    %p313 = por %p311, %p312
    %p314 = scmp.ne.s32.totalorder %s306, %s308
    %p315 = scmp.eq.s32.totalorder %s26, 1
    %p316 = por %p314, %p315
    %p317 = scmp.ne.s32.totalorder %s308, %s309
    %p318 = scmp.eq.s32.totalorder %s26, 0
    %p319 = por %p317, %p318
    %p320 = scmp.ne.s32.totalorder %s308, %s309
    %p321 = scmp.eq.s32.totalorder %s27, 1
    %p322 = por %p320, %p321
    %p324 = scmp.ne.s32.totalorder %s309, %s323
    %p325 = scmp.eq.s32.totalorder %s27, 0
    %p326 = por %p324, %p325
    %s328 = sadd.s32 %s327, 1
    %p331 = scmp.eq.s32.totalorder %s21, 1
    %p332 = scmp.ne.s32.totalorder %s327, %s329
    %p333 = scmp.eq.s32.totalorder %s21, 0
    %p334 = por %p332, %p333
    %p335 = scmp.ne.s32.totalorder %s327, %s329
    %p336 = scmp.eq.s32.totalorder %s26, 1
    %p337 = por %p335, %p336
    %p338 = scmp.ne.s32.totalorder %s329, %s330
    %p339 = scmp.eq.s32.totalorder %s26, 0
    %p340 = por %p338, %p339
    %p341 = scmp.ne.s32.totalorder %s329, %s330
    %p342 = scmp.eq.s32.totalorder %s27, 1
    %p343 = por %p341, %p342
    %p345 = scmp.ne.s32.totalorder %s330, %s344
    %p346 = scmp.eq.s32.totalorder %s27, 0
    %p347 = por %p345, %p346
    %s349 = sadd.s32 %s348, 1
    %p352 = scmp.eq.s32.totalorder %s21, 1
    %p353 = scmp.ne.s32.totalorder %s348, %s350
    %p354 = scmp.eq.s32.totalorder %s21, 0
    %p355 = por %p353, %p354
    %p356 = scmp.ne.s32.totalorder %s348, %s350
    %p357 = scmp.eq.s32.totalorder %s26, 1
    %p358 = por %p356, %p357
    %p359 = scmp.ne.s32.totalorder %s350, %s351
    %p360 = scmp.eq.s32.totalorder %s26, 0
    %p361 = por %p359, %p360
    %p362 = scmp.ne.s32.totalorder %s350, %s351
    %p363 = scmp.eq.s32.totalorder %s27, 1
    %p364 = por %p362, %p363
    %p366 = scmp.ne.s32.totalorder %s351, %s365
    %p367 = scmp.eq.s32.totalorder %s27, 0
    %p368 = por %p366, %p367
    %s369 = ssub.s32 %s21, %s28
    %p370 = scmp.eq.s32.totalorder %s369, 0
    %s372 = sadd.s32 %s371, 1
    %s373 = scalar_select %p370, %s371, %s372
    %p376 = pneg %p370
    %p377 = scmp.eq.s32.totalorder %s21, 1
    %p378 = por %p376, %p377
    %p379 = scmp.ne.s32.totalorder %s371, %s374
    %p380 = scmp.eq.s32.totalorder %s21, 0
    %p381 = por %p379, %p380
    %p382 = scmp.ne.s32.totalorder %s371, %s374
    %p383 = scmp.eq.s32.totalorder %s26, 1
    %p384 = por %p382, %p383
    %p385 = scmp.ne.s32.totalorder %s374, %s375
    %p386 = scmp.eq.s32.totalorder %s26, 0
    %p387 = por %p385, %p386
    %p388 = scmp.ne.s32.totalorder %s374, %s375
    %p389 = scmp.eq.s32.totalorder %s27, 1
    %p390 = por %p388, %p389
    %p392 = scmp.ne.s32.totalorder %s375, %s391
    %p393 = scmp.eq.s32.totalorder %s27, 0
    %p394 = por %p392, %p393
    %p395 = scmp.le.s32.totalorder 1, %s21
    %p396 = scmp.lt.s32.totalorder %s21, 3
    %p397 = pnand %p395, %p396
    %p398 = pneg %p397
    // Predicated region
    $region9: #{lstur_forward.2} parent=5 // pred_check
      _
    $region10: #{lstur_forward.2} parent=5 // pred_check_branch
      %400 = sbr.rel (%p397) target = $region12
    $region11: #{lstur_forward.2} parent=5 // pred_region
      %s401 = ssub.s32 %s21, 1
      // Predicated region
      $region13: #{lstur_forward.2} parent=11 // pred_check
        %p402 = pneg %p172
      $region14: #{lstur_forward.2} parent=11 // pred_check_branch
        %404 = sbr.rel (%p402) target = $region16
      $region15: #{lstur_forward.2} parent=11 // pred_region
        _
      $region16: #{lstur_forward.2} parent=11 // pred_fallthru
        _
      // Predicated region
      $region17: #{lstur_forward.2} parent=11 // pred_check
        %p405 = pneg %p193
      $region18: #{lstur_forward.2} parent=11 // pred_check_branch
        %407 = sbr.rel (%p405) target = $region20
      $region19: #{lstur_forward.2} parent=11 // pred_region
        _
      $region20: #{lstur_forward.2} parent=11 // pred_fallthru
        _
      // Predicated region
      $region21: #{lstur_forward.2} parent=11 // pred_check
        %p408 = pneg %p214
      $region22: #{lstur_forward.2} parent=11 // pred_check_branch
        %410 = sbr.rel (%p408) target = $region24
      $region23: #{lstur_forward.2} parent=11 // pred_region
        _
      $region24: #{lstur_forward.2} parent=11 // pred_fallthru
        _
      // Predicated region
      $region25: #{lstur_forward.2} parent=11 // pred_check
        %p411 = pneg %p235
      $region26: #{lstur_forward.2} parent=11 // pred_check_branch
        %413 = sbr.rel (%p411) target = $region28
      $region27: #{lstur_forward.2} parent=11 // pred_region
        _
      $region28: #{lstur_forward.2} parent=11 // pred_fallthru
        _
      // Predicated region
      $region29: #{lstur_forward.2} parent=11 // pred_check
        %p414 = pneg %p256
      $region30: #{lstur_forward.2} parent=11 // pred_check_branch
        %416 = sbr.rel (%p414) target = $region32
      $region31: #{lstur_forward.2} parent=11 // pred_region
        _
      $region32: #{lstur_forward.2} parent=11 // pred_fallthru
        _
      // Predicated region
      $region33: #{lstur_forward.2} parent=11 // pred_check
        %p417 = pneg %p277
      $region34: #{lstur_forward.2} parent=11 // pred_check_branch
        %419 = sbr.rel (%p417) target = $region36
      $region35: #{lstur_forward.2} parent=11 // pred_region
        _
      $region36: #{lstur_forward.2} parent=11 // pred_fallthru
        _
      // Predicated region
      $region37: #{lstur_forward.2} parent=11 // pred_check
        %p420 = pneg %p298
      $region38: #{lstur_forward.2} parent=11 // pred_check_branch
        %422 = sbr.rel (%p420) target = $region40
      $region39: #{lstur_forward.2} parent=11 // pred_region
        _
      $region40: #{lstur_forward.2} parent=11 // pred_fallthru
        _
      // Predicated region
      $region41: #{lstur_forward.2} parent=11 // pred_check
        %p423 = pneg %p319
      $region42: #{lstur_forward.2} parent=11 // pred_check_branch
        %425 = sbr.rel (%p423) target = $region44
      $region43: #{lstur_forward.2} parent=11 // pred_region
        _
      $region44: #{lstur_forward.2} parent=11 // pred_fallthru
        _
      // Predicated region
      $region45: #{lstur_forward.2} parent=11 // pred_check
        %p426 = pneg %p340
      $region46: #{lstur_forward.2} parent=11 // pred_check_branch
        %428 = sbr.rel (%p426) target = $region48
      $region47: #{lstur_forward.2} parent=11 // pred_region
        _
      $region48: #{lstur_forward.2} parent=11 // pred_fallthru
        _
      // Predicated region
      $region49: #{lstur_forward.2} parent=11 // pred_check
        %p429 = pneg %p361
      $region50: #{lstur_forward.2} parent=11 // pred_check_branch
        %431 = sbr.rel (%p429) target = $region52
      $region51: #{lstur_forward.2} parent=11 // pred_region
        _
      $region52: #{lstur_forward.2} parent=11 // pred_fallthru
        _
    $region12: #{lstur_forward.2} parent=5 // pred_fallthru
      _
    %p432 = scmp.lt.s32.totalorder %s21, 2
    // Predicated region
    $region53: #{lstur_forward.2} parent=5 // pred_check
      %p433 = pneg %p432
    $region54: #{lstur_forward.2} parent=5 // pred_check_branch
      %435 = sbr.rel (%p433) target = $region56
    $region55: #{lstur_forward.2} parent=5 // pred_region
      // Predicated region
      $region57: #{lstur_forward.2} parent=55 // pred_check
        %p436 = pneg %p41
      $region58: #{lstur_forward.2} parent=55 // pred_check_branch
        %438 = sbr.rel (%p436) target = $region60
      $region59: #{lstur_forward.2} parent=55 // pred_region
        %s439 = smul.u32 8, %s21
        %p440 = scmp.lt.s32.totalorder %s439, 15
        %s441 = scalar_select %p440, %s439, 15
        %s442 = smul.addr %s441, 2
        %s443 = smul.addr %s442, 8
        %s444 = scalar_lea.vmem %s0, %s443
        %s445 = smul.u32 8, %s21
      $region60: #{lstur_forward.2} parent=55 // pred_fallthru
        _
      // Predicated region
      $region61: #{lstur_forward.2} parent=55 // pred_check
        %p446 = pneg %p67
      $region62: #{lstur_forward.2} parent=55 // pred_check_branch
        %448 = sbr.rel (%p446) target = $region64
      $region63: #{lstur_forward.2} parent=55 // pred_region
        %p449 = scmp.lt.s32.totalorder %s21, 1
        %s450 = scalar_select %p449, %s21, 1
        %s451 = smul.addr %s450, 8
        %s452 = scalar_lea.vmem %s1, %s451
      $region64: #{lstur_forward.2} parent=55 // pred_fallthru
        _
      // Predicated region
      $region65: #{lstur_forward.2} parent=55 // pred_check
        %p453 = pneg %p93
      $region66: #{lstur_forward.2} parent=55 // pred_check_branch
        %455 = sbr.rel (%p453) target = $region68
      $region67: #{lstur_forward.2} parent=55 // pred_region
        %s456 = smul.u32 8, %s21
        %p457 = scmp.lt.s32.totalorder %s456, 15
        %s458 = scalar_select %p457, %s456, 15
        %s459 = smul.addr %s458, 2
        %s460 = smul.addr %s459, 8
        %s461 = scalar_lea.vmem %s2, %s460
        %s462 = smul.u32 8, %s21
      $region68: #{lstur_forward.2} parent=55 // pred_fallthru
        _
      // Predicated region
      $region69: #{lstur_forward.2} parent=55 // pred_check
        %p463 = pneg %p119
      $region70: #{lstur_forward.2} parent=55 // pred_check_branch
        %465 = sbr.rel (%p463) target = $region72
      $region71: #{lstur_forward.2} parent=55 // pred_region
        %p466 = scmp.lt.s32.totalorder %s21, 1
        %s467 = scalar_select %p466, %s21, 1
        %s468 = smul.addr %s467, 8
        %s469 = scalar_lea.vmem %s3, %s468
      $region72: #{lstur_forward.2} parent=55 // pred_fallthru
        _
      // Predicated region
      $region73: #{lstur_forward.2} parent=55 // pred_check
        %p470 = pneg %p145
      $region74: #{lstur_forward.2} parent=55 // pred_check_branch
        %472 = sbr.rel (%p470) target = $region76
      $region75: #{lstur_forward.2} parent=55 // pred_region
        %p473 = scmp.lt.s32.totalorder %s21, 1
        %s474 = scalar_select %p473, %s21, 1
        %s475 = smul.addr %s474, 8
        %s476 = scalar_lea.vmem %s4, %s475
      $region76: #{lstur_forward.2} parent=55 // pred_fallthru
        _
    $region56: #{lstur_forward.2} parent=5 // pred_fallthru
      _
    %p477 = scmp.le.s32.totalorder 1, %s21
    %p478 = scmp.lt.s32.totalorder %s21, 3
    %p479 = pnand %p477, %p478
    %p480 = pneg %p479
    // Predicated region
    $region77: #{lstur_forward.2} parent=5 // pred_check
      _
    $region78: #{lstur_forward.2} parent=5 // pred_check_branch
      %482 = sbr.rel (%p479) target = $region80
    $region79: #{lstur_forward.2} parent=5 // pred_region
      %s483 = ssub.s32 %s21, 1
      %s484 = smul.u32 8, %s26
      %p485 = scmp.lt.s32.totalorder %s484, 15
      %s486 = scalar_select %p485, %s484, 15
      %s487 = smul.addr %s486, 2
      %s488 = smul.addr %s487, 8
      %s489 = scalar_lea.vmem %s0, %s488
      %p490 = pneg %p47
      %p491 = pneg %p44
      %p492 = scmp.lt.s32.totalorder %s26, 1
      %s493 = scalar_select %p492, %s26, 1
      %s494 = smul.addr %s493, 8
      %s495 = scalar_lea.vmem %s1, %s494
      %p496 = pneg %p73
      %p497 = pneg %p70
      %s498 = smul.u32 8, %s26
      %p499 = scmp.lt.s32.totalorder %s498, 15
      %s500 = scalar_select %p499, %s498, 15
      %s501 = smul.addr %s500, 2
      %s502 = smul.addr %s501, 8
      %s503 = scalar_lea.vmem %s2, %s502
      %p504 = pneg %p99
      %p505 = pneg %p96
      %p506 = scmp.lt.s32.totalorder %s26, 1
      %s507 = scalar_select %p506, %s26, 1
      %s508 = smul.addr %s507, 8
      %s509 = scalar_lea.vmem %s3, %s508
      %p510 = pneg %p125
      %p511 = pneg %p122
      %p512 = scmp.lt.s32.totalorder %s26, 1
      %s513 = scalar_select %p512, %s26, 1
      %s514 = smul.addr %s513, 8
      %s515 = scalar_lea.vmem %s4, %s514
      %p516 = pneg %p151
      %p517 = pneg %p148
      %p518 = pneg %p172
      %p519 = pneg %p169
      %p520 = pneg %p193
      %p521 = pneg %p190
      %p522 = pneg %p214
      %p523 = pneg %p211
      %p524 = pneg %p235
      %p525 = pneg %p232
      %p526 = pneg %p256
      %p527 = pneg %p253
      %p528 = pneg %p277
      %p529 = pneg %p274
      %p530 = pneg %p298
      %p531 = pneg %p295
      %p532 = pneg %p319
      %p533 = pneg %p316
      %p534 = pneg %p340
      %p535 = pneg %p337
      %p536 = pneg %p361
      %p537 = pneg %p358
      %p538 = pneg %p387
      %p539 = pneg %p384
      %p540 = scmp.lt.s32.totalorder %s26, 1
      %s541 = scalar_select %p540, %s26, 1
      %s542 = smul.addr %s541, 8
      %s543 = scalar_lea.vmem %s15, %s542
      %s544 = smul.u32 8, %s26
      %p545 = scmp.lt.s32.totalorder %s544, 15
      %s546 = scalar_select %p545, %s544, 15
      %s547 = smul.addr %s546, 2
      %s548 = smul.addr %s547, 8
      %s549 = scalar_lea.vmem %s0, %s548
      %s550 = smul.u32 8, %s26
      %p551 = scmp.lt.s32.totalorder %s26, 1
      %s552 = scalar_select %p551, %s26, 1
      %s553 = smul.addr %s552, 8
      %s554 = scalar_lea.vmem %s1, %s553
      %s555 = smul.u32 8, %s26
      %p556 = scmp.lt.s32.totalorder %s555, 15
      %s557 = scalar_select %p556, %s555, 15
      %s558 = smul.addr %s557, 2
      %s559 = smul.addr %s558, 8
      %s560 = scalar_lea.vmem %s2, %s559
      %s561 = smul.u32 8, %s26
      %p562 = scmp.lt.s32.totalorder %s26, 1
      %s563 = scalar_select %p562, %s26, 1
      %s564 = smul.addr %s563, 8
      %s565 = scalar_lea.vmem %s3, %s564
      %p566 = scmp.lt.s32.totalorder %s26, 1
      %s567 = scalar_select %p566, %s26, 1
      %s568 = smul.addr %s567, 8
      %s569 = scalar_lea.vmem %s4, %s568
      %p570 = scmp.lt.s32.totalorder %s26, 1
      %s571 = scalar_select %p570, %s26, 1
      %s572 = smul.addr %s571, 8
      %s573 = scalar_lea.vmem %s15, %s572
      %v574 = vld [vmem:[%s549] sm:$0xff]
      %v575 = vld [vmem:[%s549 + $0x8] sm:$0x3]
      %v576 = vld [vmem:[%s549 + $0x10] sm:$0xff]
      %v577 = vld [vmem:[%s549 + $0x18] sm:$0x3]
      %v578 = vld [vmem:[%s549 + $0x20] sm:$0xff]
      %v579 = vld [vmem:[%s549 + $0x28] sm:$0x3]
      %v580 = vld [vmem:[%s549 + $0x30] sm:$0xff]
      %v581 = vld [vmem:[%s549 + $0x38] sm:$0x3]
      %v582 = vld [vmem:[%s549 + $0x40] sm:$0xff]
      %v583 = vld [vmem:[%s549 + $0x48] sm:$0x3]
      %v584 = vld [vmem:[%s549 + $0x50] sm:$0xff]
      %v585 = vld [vmem:[%s549 + $0x58] sm:$0x3]
      %v586 = vld [vmem:[%s549 + $0x60] sm:$0xff]
      %v587 = vld [vmem:[%s549 + $0x68] sm:$0x3]
      %v588 = vld [vmem:[%s549 + $0x70] sm:$0xff]
      %v589 = vld [vmem:[%s549 + $0x78] sm:$0x3]
      %v590 = vld [vmem:[%s554] sm:$0xff]
      %v591 = vld [vmem:[%s5] sm:$0xff]
      %v592 = vld [vmem:[%s5 + $0x8] sm:$0xff]
      %v593 = vld [vmem:[%s5 + $0x10] sm:$0xff]
      %v594 = vld [vmem:[%s5 + $0x18] sm:$0xff]
      %v595 = vld [vmem:[%s5 + $0x20] sm:$0xff]
      %v596 = vld [vmem:[%s5 + $0x28] sm:$0xff]
      %v597 = vld [vmem:[%s6] sm:$0x1]
      %v598 = vld [vmem:[%s7] sm:$0xff]
      %v599 = vld [vmem:[%s7 + $0x8] sm:$0xff]
      %v600 = vld [vmem:[%s7 + $0x10] sm:$0xff]
      %v601 = vld [vmem:[%s7 + $0x18] sm:$0xff]
      %v602 = vld [vmem:[%s8] sm:$0x1]
      %v603 = vld [vmem:[%s9] sm:$0x1]
      %vm620 = vcmask 1046528
      %v621 = vrot.slane %v574, 1
      %v622 = vrot.slane %v575, 1
      %v623 = vsel %vm620, %v621, %v622
      %v624 = vrot.slane %v576, 1
      %v625 = vrot.slane %v577, 1
      %v626 = vsel %vm620, %v624, %v625
      %v627 = vrot.slane %v578, 1
      %v628 = vrot.slane %v579, 1
      %v629 = vsel %vm620, %v627, %v628
      %v630 = vrot.slane %v580, 1
      %v631 = vrot.slane %v581, 1
      %v632 = vsel %vm620, %v630, %v631
      %v633 = vrot.slane %v582, 1
      %v634 = vrot.slane %v583, 1
      %v635 = vsel %vm620, %v633, %v634
      %v636 = vrot.slane %v584, 1
      %v637 = vrot.slane %v585, 1
      %v638 = vsel %vm620, %v636, %v637
      %v639 = vrot.slane %v586, 1
      %v640 = vrot.slane %v587, 1
      %v641 = vsel %vm620, %v639, %v640
      %v642 = vrot.slane %v588, 1
      %v643 = vrot.slane %v589, 1
      %v644 = vsel %vm620, %v642, %v643
      %vm645 = vcmask 130048
      %v646 = vsel %vm645, %v623, 0
      %v648 = vsel %vm645, %v626, 0
      %v650 = vsel %vm645, %v629, 0
      %v652 = vsel %vm645, %v632, 0
      %v654 = vsel %vm645, %v635, 0
      %v656 = vsel %vm645, %v638, 0
      %v658 = vsel %vm645, %v641, 0
      %v660 = vsel %vm645, %v644, 0
      %662 = vmatprep.subr.mxu0 0.0
      %663 = vmatpush1.msra.mxu0 0.0
      %664 = vmatprep.subr.mxu0 0.0
      %665 = vmatpush1.msra.mxu0 0.0
      %666 = vmatprep.subr.mxu0 0.0
      %667 = vmatpush1.msra.mxu0 0.0
      %668 = vmatprep.subr.mxu0 0.0
      %669 = vmatpush1.msra.mxu0 0.0
      %670 = vmatprep.subr.mxu0 0.0
      %671 = vmatpush1.msra.mxu0 0.0
      %672 = vmatprep.subr.mxu0 0.0
      %673 = vmatpush1.msra.mxu0 0.0
      %674 = vmatprep.subr.mxu0 0.0
      %675 = vmatpush1.msra.mxu0 0.0
      %676 = vmatprep.subr.mxu0 0.0
      %677 = vmatpush1.msra.mxu0 0.0
      %678 = vmatprep.subr.mxu0 0.0
      %679 = vmatpush1.msra.mxu0 0.0
      %680 = vmatprep.subr.mxu0 0.0
      %681 = vmatpush1.msra.mxu0 0.0
      %682 = vmatprep.subr.mxu0 0.0
      %683 = vmatpush1.msra.mxu0 0.0
      %684 = vmatprep.subr.mxu0 0.0
      %685 = vmatpush1.msra.mxu0 0.0
      %686 = vmatprep.subr.mxu0 0.0
      %687 = vmatpush1.msra.mxu0 0.0
      %688 = vmatprep.subr.mxu0 0.0
      %689 = vmatpush1.msra.mxu0 0.0
      %690 = vmatprep.subr.mxu0 0.0
      %691 = vmatpush1.msra.mxu0 %v594
      %692 = vmatprep.subr.mxu0 0.0
      %693 = vmatpush1.msra.mxu0 %v593
      %694 = vmatprep.subr.mxu0 0.0
      %695 = vmatpush2.msra.mxu0 0.0
      %696 = vmatprep.subr.mxu0 0.0
      %697 = vmatpush2.msra.mxu0 0.0
      %698 = vmatprep.subr.mxu0 0.0
      %699 = vmatpush2.msra.mxu0 0.0
      %700 = vmatprep.subr.mxu0 0.0
      %701 = vmatpush2.msra.mxu0 0.0
      %702 = vmatprep.subr.mxu0 0.0
      %703 = vmatpush2.msra.mxu0 0.0
      %704 = vmatprep.subr.mxu0 0.0
      %705 = vmatpush2.msra.mxu0 0.0
      %706 = vmatprep.subr.mxu0 0.0
      %707 = vmatpush2.msra.mxu0 0.0
      %708 = vmatprep.subr.mxu0 0.0
      %709 = vmatpush2.msra.mxu0 0.0
      %710 = vmatprep.subr.mxu0 0.0
      %711 = vmatpush2.msra.mxu0 0.0
      %712 = vmatprep.subr.mxu0 0.0
      %713 = vmatpush2.msra.mxu0 0.0
      %714 = vmatprep.subr.mxu0 0.0
      %715 = vmatpush2.msra.mxu0 0.0
      %716 = vmatprep.subr.mxu0 0.0
      %717 = vmatpush2.msra.mxu0 0.0
      %718 = vmatprep.subr.mxu0 0.0
      %719 = vmatpush2.msra.mxu0 0.0
      %720 = vmatprep.subr.mxu0 0.0
      %721 = vmatpush2.msra.mxu0 0.0
      %722 = vmatprep.subr.mxu0 0.0
      %723 = vmatpush2.msra.mxu0 0.0
      %724 = vmatprep.subr.mxu0 0.0
      %725 = vmatpush2.msra.mxu0 0.0
      %726 = vmatprep.mubr.f32.mxu0 0.0
      %727 = vmatmul.mubr.f32.gmra.mxu0 %v646
      %v728 = vpop.f32.mrf.mxu0
      %v729 = vadd.f32 0.0, %v728
      %v730 = vpop.f32.mrf.mxu0
      %731 = vmatprep.mubr.f32.mxu0 0.0
      %732 = vmatmul.mubr.f32.gmra.mxu0 %v648
      %v733 = vpop.f32.mrf.mxu0
      %v734 = vadd.f32 0.0, %v733
      %v735 = vpop.f32.mrf.mxu0
      %736 = vmatprep.mubr.f32.mxu0 0.0
      %737 = vmatmul.mubr.f32.gmra.mxu0 %v650
      %v738 = vpop.f32.mrf.mxu0
      %v739 = vadd.f32 0.0, %v738
      %v740 = vpop.f32.mrf.mxu0
      %741 = vmatprep.mubr.f32.mxu0 0.0
      %742 = vmatmul.mubr.f32.gmra.mxu0 %v652
      %v743 = vpop.f32.mrf.mxu0
      %v744 = vadd.f32 0.0, %v743
      %v745 = vpop.f32.mrf.mxu0
      %746 = vmatprep.mubr.f32.mxu0 0.0
      %747 = vmatmul.mubr.f32.gmra.mxu0 %v654
      %v748 = vpop.f32.mrf.mxu0
      %v749 = vadd.f32 0.0, %v748
      %v750 = vpop.f32.mrf.mxu0
      %751 = vmatprep.mubr.f32.mxu0 0.0
      %752 = vmatmul.mubr.f32.gmra.mxu0 %v656
      %v753 = vpop.f32.mrf.mxu0
      %v754 = vadd.f32 0.0, %v753
      %v755 = vpop.f32.mrf.mxu0
      %756 = vmatprep.mubr.f32.mxu0 0.0
      %757 = vmatmul.mubr.f32.gmra.mxu0 %v658
      %v758 = vpop.f32.mrf.mxu0
      %v759 = vadd.f32 0.0, %v758
      %v760 = vpop.f32.mrf.mxu0
      %761 = vmatprep.mubr.f32.mxu0 0.0
      %762 = vmatmul.mubr.f32.gmra.mxu0 %v660
      %v763 = vpop.f32.mrf.mxu0
      %v764 = vadd.f32 0.0, %v763
      %v765 = vpop.f32.mrf.mxu0
      %766 = vdwg.mxu0
      %v767 = vsel %vm645, %v574, 0
      %v769 = vsel %vm645, %v576, 0
      %v771 = vsel %vm645, %v578, 0
      %v773 = vsel %vm645, %v580, 0
      %v775 = vsel %vm645, %v582, 0
      %v777 = vsel %vm645, %v584, 0
      %v779 = vsel %vm645, %v586, 0
      %v781 = vsel %vm645, %v588, 0
      %783 = vmatprep.subr.mxu0 0.0
      %784 = vmatpush1.msra.mxu0 0.0
      %785 = vmatprep.subr.mxu0 0.0
      %786 = vmatpush1.msra.mxu0 0.0
      %787 = vmatprep.subr.mxu0 0.0
      %788 = vmatpush1.msra.mxu0 0.0
      %789 = vmatprep.subr.mxu0 0.0
      %790 = vmatpush1.msra.mxu0 0.0
      %791 = vmatprep.subr.mxu0 0.0
      %792 = vmatpush1.msra.mxu0 0.0
      %793 = vmatprep.subr.mxu0 0.0
      %794 = vmatpush1.msra.mxu0 0.0
      %795 = vmatprep.subr.mxu0 0.0
      %796 = vmatpush1.msra.mxu0 0.0
      %797 = vmatprep.subr.mxu0 0.0
      %798 = vmatpush1.msra.mxu0 0.0
      %799 = vmatprep.subr.mxu0 0.0
      %800 = vmatpush1.msra.mxu0 0.0
      %801 = vmatprep.subr.mxu0 0.0
      %802 = vmatpush1.msra.mxu0 0.0
      %803 = vmatprep.subr.mxu0 0.0
      %804 = vmatpush1.msra.mxu0 0.0
      %805 = vmatprep.subr.mxu0 0.0
      %806 = vmatpush1.msra.mxu0 0.0
      %807 = vmatprep.subr.mxu0 0.0
      %808 = vmatpush1.msra.mxu0 0.0
      %809 = vmatprep.subr.mxu0 0.0
      %810 = vmatpush1.msra.mxu0 0.0
      %811 = vmatprep.subr.mxu0 0.0
      %812 = vmatpush1.msra.mxu0 %v592
      %813 = vmatprep.subr.mxu0 0.0
      %814 = vmatpush1.msra.mxu0 %v591
      %815 = vmatprep.subr.mxu0 0.0
      %816 = vmatpush2.msra.mxu0 0.0
      %817 = vmatprep.subr.mxu0 0.0
      %818 = vmatpush2.msra.mxu0 0.0
      %819 = vmatprep.subr.mxu0 0.0
      %820 = vmatpush2.msra.mxu0 0.0
      %821 = vmatprep.subr.mxu0 0.0
      %822 = vmatpush2.msra.mxu0 0.0
      %823 = vmatprep.subr.mxu0 0.0
      %824 = vmatpush2.msra.mxu0 0.0
      %825 = vmatprep.subr.mxu0 0.0
      %826 = vmatpush2.msra.mxu0 0.0
      %827 = vmatprep.subr.mxu0 0.0
      %828 = vmatpush2.msra.mxu0 0.0
      %829 = vmatprep.subr.mxu0 0.0
      %830 = vmatpush2.msra.mxu0 0.0
      %831 = vmatprep.subr.mxu0 0.0
      %832 = vmatpush2.msra.mxu0 0.0
      %833 = vmatprep.subr.mxu0 0.0
      %834 = vmatpush2.msra.mxu0 0.0
      %835 = vmatprep.subr.mxu0 0.0
      %836 = vmatpush2.msra.mxu0 0.0
      %837 = vmatprep.subr.mxu0 0.0
      %838 = vmatpush2.msra.mxu0 0.0
      %839 = vmatprep.subr.mxu0 0.0
      %840 = vmatpush2.msra.mxu0 0.0
      %841 = vmatprep.subr.mxu0 0.0
      %842 = vmatpush2.msra.mxu0 0.0
      %843 = vmatprep.subr.mxu0 0.0
      %844 = vmatpush2.msra.mxu0 0.0
      %845 = vmatprep.subr.mxu0 0.0
      %846 = vmatpush2.msra.mxu0 0.0
      %847 = vmatprep.mubr.f32.mxu0 0.0
      %848 = vmatmul.mubr.f32.gmra.mxu0 %v767
      %v849 = vpop.f32.mrf.mxu0
      %v850 = vadd.f32 %v729, %v849
      %v851 = vpop.f32.mrf.mxu0
      %852 = vmatprep.mubr.f32.mxu0 0.0
      %853 = vmatmul.mubr.f32.gmra.mxu0 %v769
      %v854 = vpop.f32.mrf.mxu0
      %v855 = vadd.f32 %v734, %v854
      %v856 = vpop.f32.mrf.mxu0
      %857 = vmatprep.mubr.f32.mxu0 0.0
      %858 = vmatmul.mubr.f32.gmra.mxu0 %v771
      %v859 = vpop.f32.mrf.mxu0
      %v860 = vadd.f32 %v739, %v859
      %v861 = vpop.f32.mrf.mxu0
      %862 = vmatprep.mubr.f32.mxu0 0.0
      %863 = vmatmul.mubr.f32.gmra.mxu0 %v773
      %v864 = vpop.f32.mrf.mxu0
      %v865 = vadd.f32 %v744, %v864
      %v866 = vpop.f32.mrf.mxu0
      %867 = vmatprep.mubr.f32.mxu0 0.0
      %868 = vmatmul.mubr.f32.gmra.mxu0 %v775
      %v869 = vpop.f32.mrf.mxu0
      %v870 = vadd.f32 %v749, %v869
      %v871 = vpop.f32.mrf.mxu0
      %872 = vmatprep.mubr.f32.mxu0 0.0
      %873 = vmatmul.mubr.f32.gmra.mxu0 %v777
      %v874 = vpop.f32.mrf.mxu0
      %v875 = vadd.f32 %v754, %v874
      %v876 = vpop.f32.mrf.mxu0
      %877 = vmatprep.mubr.f32.mxu0 0.0
      %878 = vmatmul.mubr.f32.gmra.mxu0 %v779
      %v879 = vpop.f32.mrf.mxu0
      %v880 = vadd.f32 %v759, %v879
      %v881 = vpop.f32.mrf.mxu0
      %882 = vmatprep.mubr.f32.mxu0 0.0
      %883 = vmatmul.mubr.f32.gmra.mxu0 %v781
      %v884 = vpop.f32.mrf.mxu0
      %v885 = vadd.f32 %v764, %v884
      %v886 = vpop.f32.mrf.mxu0
      %887 = vdwg.mxu0
      %vm888 = vcmask 1045504
      %v889 = vrot.slane %v574, 2
      %v890 = vrot.slane %v575, 2
      %v891 = vsel %vm888, %v889, %v890
      %v892 = vrot.slane %v576, 2
      %v893 = vrot.slane %v577, 2
      %v894 = vsel %vm888, %v892, %v893
      %v895 = vrot.slane %v578, 2
      %v896 = vrot.slane %v579, 2
      %v897 = vsel %vm888, %v895, %v896
      %v898 = vrot.slane %v580, 2
      %v899 = vrot.slane %v581, 2
      %v900 = vsel %vm888, %v898, %v899
      %v901 = vrot.slane %v582, 2
      %v902 = vrot.slane %v583, 2
      %v903 = vsel %vm888, %v901, %v902
      %v904 = vrot.slane %v584, 2
      %v905 = vrot.slane %v585, 2
      %v906 = vsel %vm888, %v904, %v905
      %v907 = vrot.slane %v586, 2
      %v908 = vrot.slane %v587, 2
      %v909 = vsel %vm888, %v907, %v908
      %v910 = vrot.slane %v588, 2
      %v911 = vrot.slane %v589, 2
      %v912 = vsel %vm888, %v910, %v911
      %v913 = vsel %vm645, %v891, 0
      %v915 = vsel %vm645, %v894, 0
      %v917 = vsel %vm645, %v897, 0
      %v919 = vsel %vm645, %v900, 0
      %v921 = vsel %vm645, %v903, 0
      %v923 = vsel %vm645, %v906, 0
      %v925 = vsel %vm645, %v909, 0
      %v927 = vsel %vm645, %v912, 0
      %929 = vmatprep.subr.mxu0 0.0
      %930 = vmatpush1.msra.mxu0 0.0
      %931 = vmatprep.subr.mxu0 0.0
      %932 = vmatpush1.msra.mxu0 0.0
      %933 = vmatprep.subr.mxu0 0.0
      %934 = vmatpush1.msra.mxu0 0.0
      %935 = vmatprep.subr.mxu0 0.0
      %936 = vmatpush1.msra.mxu0 0.0
      %937 = vmatprep.subr.mxu0 0.0
      %938 = vmatpush1.msra.mxu0 0.0
      %939 = vmatprep.subr.mxu0 0.0
      %940 = vmatpush1.msra.mxu0 0.0
      %941 = vmatprep.subr.mxu0 0.0
      %942 = vmatpush1.msra.mxu0 0.0
      %943 = vmatprep.subr.mxu0 0.0
      %944 = vmatpush1.msra.mxu0 0.0
      %945 = vmatprep.subr.mxu0 0.0
      %946 = vmatpush1.msra.mxu0 0.0
      %947 = vmatprep.subr.mxu0 0.0
      %948 = vmatpush1.msra.mxu0 0.0
      %949 = vmatprep.subr.mxu0 0.0
      %950 = vmatpush1.msra.mxu0 0.0
      %951 = vmatprep.subr.mxu0 0.0
      %952 = vmatpush1.msra.mxu0 0.0
      %953 = vmatprep.subr.mxu0 0.0
      %954 = vmatpush1.msra.mxu0 0.0
      %955 = vmatprep.subr.mxu0 0.0
      %956 = vmatpush1.msra.mxu0 0.0
      %957 = vmatprep.subr.mxu0 0.0
      %958 = vmatpush1.msra.mxu0 %v596
      %959 = vmatprep.subr.mxu0 0.0
      %960 = vmatpush1.msra.mxu0 %v595
      %961 = vmatprep.subr.mxu0 0.0
      %962 = vmatpush2.msra.mxu0 0.0
      %963 = vmatprep.subr.mxu0 0.0
      %964 = vmatpush2.msra.mxu0 0.0
      %965 = vmatprep.subr.mxu0 0.0
      %966 = vmatpush2.msra.mxu0 0.0
      %967 = vmatprep.subr.mxu0 0.0
      %968 = vmatpush2.msra.mxu0 0.0
      %969 = vmatprep.subr.mxu0 0.0
      %970 = vmatpush2.msra.mxu0 0.0
      %971 = vmatprep.subr.mxu0 0.0
      %972 = vmatpush2.msra.mxu0 0.0
      %973 = vmatprep.subr.mxu0 0.0
      %974 = vmatpush2.msra.mxu0 0.0
      %975 = vmatprep.subr.mxu0 0.0
      %976 = vmatpush2.msra.mxu0 0.0
      %977 = vmatprep.subr.mxu0 0.0
      %978 = vmatpush2.msra.mxu0 0.0
      %979 = vmatprep.subr.mxu0 0.0
      %980 = vmatpush2.msra.mxu0 0.0
      %981 = vmatprep.subr.mxu0 0.0
      %982 = vmatpush2.msra.mxu0 0.0
      %983 = vmatprep.subr.mxu0 0.0
      %984 = vmatpush2.msra.mxu0 0.0
      %985 = vmatprep.subr.mxu0 0.0
      %986 = vmatpush2.msra.mxu0 0.0
      %987 = vmatprep.subr.mxu0 0.0
      %988 = vmatpush2.msra.mxu0 0.0
      %989 = vmatprep.subr.mxu0 0.0
      %990 = vmatpush2.msra.mxu0 0.0
      %991 = vmatprep.subr.mxu0 0.0
      %992 = vmatpush2.msra.mxu0 0.0
      %993 = vmatprep.mubr.f32.mxu0 0.0
      %994 = vmatmul.mubr.f32.gmra.mxu0 %v913
      %v995 = vpop.f32.mrf.mxu0
      %v996 = vadd.f32 0.0, %v995
      %v997 = vpop.f32.mrf.mxu0
      %998 = vmatprep.mubr.f32.mxu0 0.0
      %999 = vmatmul.mubr.f32.gmra.mxu0 %v915
      %v1000 = vpop.f32.mrf.mxu0
      %v1001 = vadd.f32 0.0, %v1000
      %v1002 = vpop.f32.mrf.mxu0
      %1003 = vmatprep.mubr.f32.mxu0 0.0
      %1004 = vmatmul.mubr.f32.gmra.mxu0 %v917
      %v1005 = vpop.f32.mrf.mxu0
      %v1006 = vadd.f32 0.0, %v1005
      %v1007 = vpop.f32.mrf.mxu0
      %1008 = vmatprep.mubr.f32.mxu0 0.0
      %1009 = vmatmul.mubr.f32.gmra.mxu0 %v919
      %v1010 = vpop.f32.mrf.mxu0
      %v1011 = vadd.f32 0.0, %v1010
      %v1012 = vpop.f32.mrf.mxu0
      %1013 = vmatprep.mubr.f32.mxu0 0.0
      %1014 = vmatmul.mubr.f32.gmra.mxu0 %v921
      %v1015 = vpop.f32.mrf.mxu0
      %v1016 = vadd.f32 0.0, %v1015
      %v1017 = vpop.f32.mrf.mxu0
      %1018 = vmatprep.mubr.f32.mxu0 0.0
      %1019 = vmatmul.mubr.f32.gmra.mxu0 %v923
      %v1020 = vpop.f32.mrf.mxu0
      %v1021 = vadd.f32 0.0, %v1020
      %v1022 = vpop.f32.mrf.mxu0
      %1023 = vmatprep.mubr.f32.mxu0 0.0
      %1024 = vmatmul.mubr.f32.gmra.mxu0 %v925
      %v1025 = vpop.f32.mrf.mxu0
      %v1026 = vadd.f32 0.0, %v1025
      %v1027 = vpop.f32.mrf.mxu0
      %1028 = vmatprep.mubr.f32.mxu0 0.0
      %1029 = vmatmul.mubr.f32.gmra.mxu0 %v927
      %v1030 = vpop.f32.mrf.mxu0
      %v1031 = vadd.f32 0.0, %v1030
      %v1032 = vpop.f32.mrf.mxu0
      %1033 = vdwg.mxu0
      %v1034 = vadd.f32 %v850, %v996
      %v1035 = vadd.f32 %v855, %v1001
      %v1036 = vadd.f32 %v860, %v1006
      %v1037 = vadd.f32 %v865, %v1011
      %v1038 = vadd.f32 %v870, %v1016
      %v1039 = vadd.f32 %v875, %v1021
      %v1040 = vadd.f32 %v880, %v1026
      %v1041 = vadd.f32 %v885, %v1031
      %v1043 = vlaneseq
      %v1044 = vshrl.u32 %v1043, 7
      %v1045 = vsub.s32 0, %v1044
      %v1046 = vrot.slane %v597, %v1045
      %v1048 = vadd.f32 %v1034, %v1046
      %v1049 = vadd.f32 %v1035, %v1046
      %v1050 = vadd.f32 %v1036, %v1046
      %v1051 = vadd.f32 %v1037, %v1046
      %v1052 = vadd.f32 %v1038, %v1046
      %v1053 = vadd.f32 %v1039, %v1046
      %v1054 = vadd.f32 %v1040, %v1046
      %v1055 = vadd.f32 %v1041, %v1046
      %v1056 = vmax.f32 %v1048, 0.0
      %v1057 = vmax.f32 %v1049, 0.0
      %v1058 = vmax.f32 %v1050, 0.0
      %v1059 = vmax.f32 %v1051, 0.0
      %v1060 = vmax.f32 %v1052, 0.0
      %v1061 = vmax.f32 %v1053, 0.0
      %v1062 = vmax.f32 %v1054, 0.0
      %v1063 = vmax.f32 %v1055, 0.0
      %v1065 = vlaneseq
      %v1066 = vshrl.u32 %v1065, 7
      %v1067 = vsub.s32 0, %v1066
      %v1068 = vrot.slane %v602, %v1067
      %vm1070 = vcmask 261120
      %v1072 = vsel %vm1070, %v1056, 0
      %v1075 = vsel %vm1070, %v1057, 0
      %v1078 = vsel %vm1070, %v1058, 0
      %v1081 = vsel %vm1070, %v1059, 0
      %v1084 = vsel %vm1070, %v1060, 0
      %v1087 = vsel %vm1070, %v1061, 0
      %v1090 = vsel %vm1070, %v1062, 0
      %v1093 = vsel %vm1070, %v1063, 0
      %1095 = vmatprep.subr.mxu0 0.0
      %1096 = vmatpush1.msra.mxu0 0.0
      %1097 = vmatprep.subr.mxu0 0.0
      %1098 = vmatpush1.msra.mxu0 0.0
      %1099 = vmatprep.subr.mxu0 0.0
      %1100 = vmatpush1.msra.mxu0 0.0
      %1101 = vmatprep.subr.mxu0 0.0
      %1102 = vmatpush1.msra.mxu0 0.0
      %1103 = vmatprep.subr.mxu0 0.0
      %1104 = vmatpush1.msra.mxu0 0.0
      %1105 = vmatprep.subr.mxu0 0.0
      %1106 = vmatpush1.msra.mxu0 0.0
      %1107 = vmatprep.subr.mxu0 0.0
      %1108 = vmatpush1.msra.mxu0 0.0
      %1109 = vmatprep.subr.mxu0 0.0
      %1110 = vmatpush1.msra.mxu0 0.0
      %1111 = vmatprep.subr.mxu0 0.0
      %1112 = vmatpush1.msra.mxu0 0.0
      %1113 = vmatprep.subr.mxu0 0.0
      %1114 = vmatpush1.msra.mxu0 0.0
      %1115 = vmatprep.subr.mxu0 0.0
      %1116 = vmatpush1.msra.mxu0 0.0
      %1117 = vmatprep.subr.mxu0 0.0
      %1118 = vmatpush1.msra.mxu0 0.0
      %1119 = vmatprep.subr.mxu0 0.0
      %1120 = vmatpush1.msra.mxu0 %v601
      %1121 = vmatprep.subr.mxu0 0.0
      %1122 = vmatpush1.msra.mxu0 %v600
      %1123 = vmatprep.subr.mxu0 0.0
      %1124 = vmatpush1.msra.mxu0 %v599
      %1125 = vmatprep.subr.mxu0 0.0
      %1126 = vmatpush1.msra.mxu0 %v598
      %1127 = vmatprep.subr.mxu0 0.0
      %1128 = vmatpush2.msra.mxu0 0.0
      %1129 = vmatprep.subr.mxu0 0.0
      %1130 = vmatpush2.msra.mxu0 0.0
      %1131 = vmatprep.subr.mxu0 0.0
      %1132 = vmatpush2.msra.mxu0 0.0
      %1133 = vmatprep.subr.mxu0 0.0
      %1134 = vmatpush2.msra.mxu0 0.0
      %1135 = vmatprep.subr.mxu0 0.0
      %1136 = vmatpush2.msra.mxu0 0.0
      %1137 = vmatprep.subr.mxu0 0.0
      %1138 = vmatpush2.msra.mxu0 0.0
      %1139 = vmatprep.subr.mxu0 0.0
      %1140 = vmatpush2.msra.mxu0 0.0
      %1141 = vmatprep.subr.mxu0 0.0
      %1142 = vmatpush2.msra.mxu0 0.0
      %1143 = vmatprep.subr.mxu0 0.0
      %1144 = vmatpush2.msra.mxu0 0.0
      %1145 = vmatprep.subr.mxu0 0.0
      %1146 = vmatpush2.msra.mxu0 0.0
      %1147 = vmatprep.subr.mxu0 0.0
      %1148 = vmatpush2.msra.mxu0 0.0
      %1149 = vmatprep.subr.mxu0 0.0
      %1150 = vmatpush2.msra.mxu0 0.0
      %1151 = vmatprep.subr.mxu0 0.0
      %1152 = vmatpush2.msra.mxu0 0.0
      %1153 = vmatprep.subr.mxu0 0.0
      %1154 = vmatpush2.msra.mxu0 0.0
      %1155 = vmatprep.subr.mxu0 0.0
      %1156 = vmatpush2.msra.mxu0 0.0
      %1157 = vmatprep.subr.mxu0 0.0
      %1158 = vmatpush2.msra.mxu0 0.0
      %1159 = vmatprep.mubr.f32.mxu0 0.0
      %1160 = vmatmul.mubr.f32.gmra.mxu0 %v1072
      %v1161 = vpop.f32.mrf.mxu0
      %v1162 = vadd.f32 %v1068, %v1161
      %v1163 = vpop.f32.mrf.mxu0
      %1164 = vmatprep.mubr.f32.mxu0 0.0
      %1165 = vmatmul.mubr.f32.gmra.mxu0 %v1075
      %v1166 = vpop.f32.mrf.mxu0
      %v1167 = vadd.f32 %v1068, %v1166
      %v1168 = vpop.f32.mrf.mxu0
      %1169 = vmatprep.mubr.f32.mxu0 0.0
      %1170 = vmatmul.mubr.f32.gmra.mxu0 %v1078
      %v1171 = vpop.f32.mrf.mxu0
      %v1172 = vadd.f32 %v1068, %v1171
      %v1173 = vpop.f32.mrf.mxu0
      %1174 = vmatprep.mubr.f32.mxu0 0.0
      %1175 = vmatmul.mubr.f32.gmra.mxu0 %v1081
      %v1176 = vpop.f32.mrf.mxu0
      %v1177 = vadd.f32 %v1068, %v1176
      %v1178 = vpop.f32.mrf.mxu0
      %1179 = vmatprep.mubr.f32.mxu0 0.0
      %1180 = vmatmul.mubr.f32.gmra.mxu0 %v1084
      %v1181 = vpop.f32.mrf.mxu0
      %v1182 = vadd.f32 %v1068, %v1181
      %v1183 = vpop.f32.mrf.mxu0
      %1184 = vmatprep.mubr.f32.mxu0 0.0
      %1185 = vmatmul.mubr.f32.gmra.mxu0 %v1087
      %v1186 = vpop.f32.mrf.mxu0
      %v1187 = vadd.f32 %v1068, %v1186
      %v1188 = vpop.f32.mrf.mxu0
      %1189 = vmatprep.mubr.f32.mxu0 0.0
      %1190 = vmatmul.mubr.f32.gmra.mxu0 %v1090
      %v1191 = vpop.f32.mrf.mxu0
      %v1192 = vadd.f32 %v1068, %v1191
      %v1193 = vpop.f32.mrf.mxu0
      %1194 = vmatprep.mubr.f32.mxu0 0.0
      %1195 = vmatmul.mubr.f32.gmra.mxu0 %v1093
      %v1196 = vpop.f32.mrf.mxu0
      %v1197 = vadd.f32 %v1068, %v1196
      %v1198 = vpop.f32.mrf.mxu0
      %1199 = vdwg.mxu0
      %v1200 = vtanh.pop %v1162
      %v1201 = vtanh.pop %v1167
      %v1202 = vtanh.pop %v1172
      %v1203 = vtanh.pop %v1177
      %v1204 = vtanh.pop %v1182
      %v1205 = vtanh.pop %v1187
      %v1206 = vtanh.pop %v1192
      %v1207 = vtanh.pop %v1197
      %v1209 = vlaneseq
      %v1210 = vshrl.u32 %v1209, 7
      %v1211 = vsub.s32 0, %v1210
      %v1212 = vrot.slane %v603, %v1211
      %v1214 = vmul.f32 %v1200, %v1212
      %v1215 = vmul.f32 %v1201, %v1212
      %v1216 = vmul.f32 %v1202, %v1212
      %v1217 = vmul.f32 %v1203, %v1212
      %v1218 = vmul.f32 %v1204, %v1212
      %v1219 = vmul.f32 %v1205, %v1212
      %v1220 = vmul.f32 %v1206, %v1212
      %v1221 = vmul.f32 %v1207, %v1212
      %v1222 = vsel %vm645, %v1214, 0.0
      %1223 = vadd.xlane.f32.xlu0 %v1222
      %v1224 = vpop.xlane.xlu0 %1223
      %v1225 = vsel %vm645, %v1215, 0.0
      %1226 = vadd.xlane.f32.xlu0 %v1225
      %v1227 = vpop.xlane.xlu0 %1226
      %v1228 = vsel %vm645, %v1216, 0.0
      %1229 = vadd.xlane.f32.xlu0 %v1228
      %v1230 = vpop.xlane.xlu0 %1229
      %v1231 = vsel %vm645, %v1217, 0.0
      %1232 = vadd.xlane.f32.xlu0 %v1231
      %v1233 = vpop.xlane.xlu0 %1232
      %v1234 = vsel %vm645, %v1218, 0.0
      %1235 = vadd.xlane.f32.xlu0 %v1234
      %v1236 = vpop.xlane.xlu0 %1235
      %v1237 = vsel %vm645, %v1219, 0.0
      %1238 = vadd.xlane.f32.xlu0 %v1237
      %v1239 = vpop.xlane.xlu0 %1238
      %v1240 = vsel %vm645, %v1220, 0.0
      %1241 = vadd.xlane.f32.xlu0 %v1240
      %v1242 = vpop.xlane.xlu0 %1241
      %v1243 = vsel %vm645, %v1221, 0.0
      %1244 = vadd.xlane.f32.xlu0 %v1243
      %v1245 = vpop.xlane.xlu0 %1244
      %v1246 = vsub.f32 1.0, %v590
      %v1247 = vmul.f32 %v1246, -1e+09
      %v1249 = vlaneseq
      %v1250 = vshrl.u32 %v1249, 7
      %v1251 = vsub.s32 0, %v1250
      %v1252 = vrot.slane %v1247, %v1251
      %1254 = vbcast.lane.b32.xlu0 %v1252, 256
      %v1255 = vpop.permute.xlu0 %1254
      %v1256 = vlaneseq
      %v1257 = vshrl.u32 %v1256, 7
      %v1258 = vsub.s32 1, %v1257
      %v1259 = vrot.slane %v1247, %v1258
      %1261 = vbcast.lane.b32.xlu0 %v1259, 256
      %v1262 = vpop.permute.xlu0 %1261
      %v1263 = vlaneseq
      %v1264 = vshrl.u32 %v1263, 7
      %v1265 = vsub.s32 2, %v1264
      %v1266 = vrot.slane %v1247, %v1265
      %1268 = vbcast.lane.b32.xlu0 %v1266, 256
      %v1269 = vpop.permute.xlu0 %1268
      %v1270 = vlaneseq
      %v1271 = vshrl.u32 %v1270, 7
      %v1272 = vsub.s32 3, %v1271
      %v1273 = vrot.slane %v1247, %v1272
      %1275 = vbcast.lane.b32.xlu0 %v1273, 256
      %v1276 = vpop.permute.xlu0 %1275
      %v1277 = vlaneseq
      %v1278 = vshrl.u32 %v1277, 7
      %v1279 = vsub.s32 4, %v1278
      %v1280 = vrot.slane %v1247, %v1279
      %1282 = vbcast.lane.b32.xlu0 %v1280, 256
      %v1283 = vpop.permute.xlu0 %1282
      %v1284 = vlaneseq
      %v1285 = vshrl.u32 %v1284, 7
      %v1286 = vsub.s32 5, %v1285
      %v1287 = vrot.slane %v1247, %v1286
      %1289 = vbcast.lane.b32.xlu0 %v1287, 256
      %v1290 = vpop.permute.xlu0 %1289
      %v1291 = vlaneseq
      %v1292 = vshrl.u32 %v1291, 7
      %v1293 = vsub.s32 6, %v1292
      %v1294 = vrot.slane %v1247, %v1293
      %1296 = vbcast.lane.b32.xlu0 %v1294, 256
      %v1297 = vpop.permute.xlu0 %1296
      %v1298 = vlaneseq
      %v1299 = vshrl.u32 %v1298, 7
      %v1300 = vsub.s32 7, %v1299
      %v1301 = vrot.slane %v1247, %v1300
      %1303 = vbcast.lane.b32.xlu0 %v1301, 256
      %v1304 = vpop.permute.xlu0 %1303
      %v1313 = vadd.f32 %v1224, %v1255
      %v1314 = vadd.f32 %v1227, %v1262
      %v1315 = vadd.f32 %v1230, %v1269
      %v1316 = vadd.f32 %v1233, %v1276
      %v1317 = vadd.f32 %v1236, %v1283
      %v1318 = vadd.f32 %v1239, %v1290
      %v1319 = vadd.f32 %v1242, %v1297
      %v1320 = vadd.f32 %v1245, %v1304
      %1329 = vset.pattern.permute.xlu0 0
      %1330 = vperm.xlu0 %1329, %v1313
      %v1331 = vpop.permute.xlu0 %1330
      %1332 = vset.pattern.permute.xlu0 0
      %1333 = vperm.xlu0 %1332, %v1314
      %v1334 = vpop.permute.xlu0 %1333
      %1335 = vset.pattern.permute.xlu0 0
      %1336 = vperm.xlu0 %1335, %v1315
      %v1337 = vpop.permute.xlu0 %1336
      %1338 = vset.pattern.permute.xlu0 0
      %1339 = vperm.xlu0 %1338, %v1316
      %v1340 = vpop.permute.xlu0 %1339
      %1341 = vset.pattern.permute.xlu0 0
      %1342 = vperm.xlu0 %1341, %v1317
      %v1343 = vpop.permute.xlu0 %1342
      %1344 = vset.pattern.permute.xlu0 0
      %1345 = vperm.xlu0 %1344, %v1318
      %v1346 = vpop.permute.xlu0 %1345
      %1347 = vset.pattern.permute.xlu0 0
      %1348 = vperm.xlu0 %1347, %v1319
      %v1349 = vpop.permute.xlu0 %1348
      %1350 = vset.pattern.permute.xlu0 0
      %1351 = vperm.xlu0 %1350, %v1320
      %v1352 = vpop.permute.xlu0 %1351
      %v1353 = vlaneseq
      %v1354 = vand.u32 %v1353, 127
      %v1355 = vlaneseq
      %v1356 = vshrl.u32 %v1355, 7
      %v1357 = vsub.s32 %v1354, %v1356
      %v1358 = vrot.slane %v1331, %v1357
      %v1359 = vlaneseq
      %v1360 = vshrl.u32 %v1359, 7
      %v1361 = vsub.s32 %v1354, %v1360
      %v1362 = vrot.slane %v1334, %v1361
      %v1363 = vlaneseq
      %v1364 = vshrl.u32 %v1363, 7
      %v1365 = vsub.s32 %v1354, %v1364
      %v1366 = vrot.slane %v1337, %v1365
      %v1367 = vlaneseq
      %v1368 = vshrl.u32 %v1367, 7
      %v1369 = vsub.s32 %v1354, %v1368
      %v1370 = vrot.slane %v1340, %v1369
      %v1371 = vlaneseq
      %v1372 = vshrl.u32 %v1371, 7
      %v1373 = vsub.s32 %v1354, %v1372
      %v1374 = vrot.slane %v1343, %v1373
      %v1375 = vlaneseq
      %v1376 = vshrl.u32 %v1375, 7
      %v1377 = vsub.s32 %v1354, %v1376
      %v1378 = vrot.slane %v1346, %v1377
      %v1379 = vlaneseq
      %v1380 = vshrl.u32 %v1379, 7
      %v1381 = vsub.s32 %v1354, %v1380
      %v1382 = vrot.slane %v1349, %v1381
      %v1383 = vlaneseq
      %v1384 = vshrl.u32 %v1383, 7
      %v1385 = vsub.s32 %v1354, %v1384
      %v1386 = vrot.slane %v1352, %v1385
      %vm1387 = vcmask 1041409
      %v1388 = vsel %vm1387, %v1362, %v1358
      %vm1389 = vcmask 1042434
      %v1390 = vsel %vm1389, %v1366, %v1388
      %vm1391 = vcmask 1043459
      %v1392 = vsel %vm1391, %v1370, %v1390
      %vm1393 = vcmask 1044484
      %v1394 = vsel %vm1393, %v1374, %v1392
      %vm1395 = vcmask 1045509
      %v1396 = vsel %vm1395, %v1378, %v1394
      %vm1397 = vcmask 1046534
      %v1398 = vsel %vm1397, %v1382, %v1396
      %vm1399 = vcmask 1047559
      %v1400 = vsel %vm1399, %v1386, %v1398
      %vm1402 = vcmask 64512
      %v1403 = vsel %vm1402, %v1400, -inf
      %1404 = vmax.xlane.f32.xlu0 %v1403
      %v1405 = vpop.xlane.xlu0 %1404
      %v1407 = vlaneseq
      %v1408 = vshrl.u32 %v1407, 7
      %v1409 = vsub.s32 0, %v1408
      %v1410 = vrot.slane %v1405, %v1409
      %v1411 = vlaneseq
      %v1412 = vshrl.u32 %v1411, 7
      %v1413 = vsub.s32 1, %v1412
      %v1414 = vrot.slane %v1405, %v1413
      %v1415 = vlaneseq
      %v1416 = vshrl.u32 %v1415, 7
      %v1417 = vsub.s32 2, %v1416
      %v1418 = vrot.slane %v1405, %v1417
      %v1419 = vlaneseq
      %v1420 = vshrl.u32 %v1419, 7
      %v1421 = vsub.s32 3, %v1420
      %v1422 = vrot.slane %v1405, %v1421
      %v1423 = vlaneseq
      %v1424 = vshrl.u32 %v1423, 7
      %v1425 = vsub.s32 4, %v1424
      %v1426 = vrot.slane %v1405, %v1425
      %v1427 = vlaneseq
      %v1428 = vshrl.u32 %v1427, 7
      %v1429 = vsub.s32 5, %v1428
      %v1430 = vrot.slane %v1405, %v1429
      %v1431 = vlaneseq
      %v1432 = vshrl.u32 %v1431, 7
      %v1433 = vsub.s32 6, %v1432
      %v1434 = vrot.slane %v1405, %v1433
      %v1435 = vlaneseq
      %v1436 = vshrl.u32 %v1435, 7
      %v1437 = vsub.s32 7, %v1436
      %v1438 = vrot.slane %v1405, %v1437
      %v1447 = vsub.f32 %v1313, %v1410
      %v1448 = vsub.f32 %v1314, %v1414
      %v1449 = vsub.f32 %v1315, %v1418
      %v1450 = vsub.f32 %v1316, %v1422
      %v1451 = vsub.f32 %v1317, %v1426
      %v1452 = vsub.f32 %v1318, %v1430
      %v1453 = vsub.f32 %v1319, %v1434
      %v1454 = vsub.f32 %v1320, %v1438
      %v1455 = vmul.f32 %v1447, 1.442695
      %v1456 = vpow.pop %v1455
      %v1457 = vmul.f32 %v1448, 1.442695
      %v1458 = vpow.pop %v1457
      %v1459 = vmul.f32 %v1449, 1.442695
      %v1460 = vpow.pop %v1459
      %v1461 = vmul.f32 %v1450, 1.442695
      %v1462 = vpow.pop %v1461
      %v1463 = vmul.f32 %v1451, 1.442695
      %v1464 = vpow.pop %v1463
      %v1465 = vmul.f32 %v1452, 1.442695
      %v1466 = vpow.pop %v1465
      %v1467 = vmul.f32 %v1453, 1.442695
      %v1468 = vpow.pop %v1467
      %v1469 = vmul.f32 %v1454, 1.442695
      %v1470 = vpow.pop %v1469
      %1479 = vset.pattern.permute.xlu0 0
      %1480 = vperm.xlu0 %1479, %v1456
      %v1481 = vpop.permute.xlu0 %1480
      %1482 = vset.pattern.permute.xlu0 0
      %1483 = vperm.xlu0 %1482, %v1458
      %v1484 = vpop.permute.xlu0 %1483
      %1485 = vset.pattern.permute.xlu0 0
      %1486 = vperm.xlu0 %1485, %v1460
      %v1487 = vpop.permute.xlu0 %1486
      %1488 = vset.pattern.permute.xlu0 0
      %1489 = vperm.xlu0 %1488, %v1462
      %v1490 = vpop.permute.xlu0 %1489
      %1491 = vset.pattern.permute.xlu0 0
      %1492 = vperm.xlu0 %1491, %v1464
      %v1493 = vpop.permute.xlu0 %1492
      %1494 = vset.pattern.permute.xlu0 0
      %1495 = vperm.xlu0 %1494, %v1466
      %v1496 = vpop.permute.xlu0 %1495
      %1497 = vset.pattern.permute.xlu0 0
      %1498 = vperm.xlu0 %1497, %v1468
      %v1499 = vpop.permute.xlu0 %1498
      %1500 = vset.pattern.permute.xlu0 0
      %1501 = vperm.xlu0 %1500, %v1470
      %v1502 = vpop.permute.xlu0 %1501
      %v1503 = vlaneseq
      %v1504 = vshrl.u32 %v1503, 7
      %v1505 = vsub.s32 %v1354, %v1504
      %v1506 = vrot.slane %v1481, %v1505
      %v1507 = vlaneseq
      %v1508 = vshrl.u32 %v1507, 7
      %v1509 = vsub.s32 %v1354, %v1508
      %v1510 = vrot.slane %v1484, %v1509
      %v1511 = vlaneseq
      %v1512 = vshrl.u32 %v1511, 7
      %v1513 = vsub.s32 %v1354, %v1512
      %v1514 = vrot.slane %v1487, %v1513
      %v1515 = vlaneseq
      %v1516 = vshrl.u32 %v1515, 7
      %v1517 = vsub.s32 %v1354, %v1516
      %v1518 = vrot.slane %v1490, %v1517
      %v1519 = vlaneseq
      %v1520 = vshrl.u32 %v1519, 7
      %v1521 = vsub.s32 %v1354, %v1520
      %v1522 = vrot.slane %v1493, %v1521
      %v1523 = vlaneseq
      %v1524 = vshrl.u32 %v1523, 7
      %v1525 = vsub.s32 %v1354, %v1524
      %v1526 = vrot.slane %v1496, %v1525
      %v1527 = vlaneseq
      %v1528 = vshrl.u32 %v1527, 7
      %v1529 = vsub.s32 %v1354, %v1528
      %v1530 = vrot.slane %v1499, %v1529
      %v1531 = vlaneseq
      %v1532 = vshrl.u32 %v1531, 7
      %v1533 = vsub.s32 %v1354, %v1532
      %v1534 = vrot.slane %v1502, %v1533
      %v1535 = vsel %vm1387, %v1510, %v1506
      %v1536 = vsel %vm1389, %v1514, %v1535
      %v1537 = vsel %vm1391, %v1518, %v1536
      %v1538 = vsel %vm1393, %v1522, %v1537
      %v1539 = vsel %vm1395, %v1526, %v1538
      %v1540 = vsel %vm1397, %v1530, %v1539
      %v1541 = vsel %vm1399, %v1534, %v1540
      %v1543 = vsel %vm1402, %v1541, 0.0
      %1544 = vadd.xlane.f32.xlu0 %v1543
      %v1545 = vpop.xlane.xlu0 %1544
      %v1546 = vrcp.pop %v1545
      %v1548 = vlaneseq
      %v1549 = vshrl.u32 %v1548, 7
      %v1550 = vsub.s32 0, %v1549
      %v1551 = vrot.slane %v1546, %v1550
      %v1552 = vlaneseq
      %v1553 = vshrl.u32 %v1552, 7
      %v1554 = vsub.s32 1, %v1553
      %v1555 = vrot.slane %v1546, %v1554
      %v1556 = vlaneseq
      %v1557 = vshrl.u32 %v1556, 7
      %v1558 = vsub.s32 2, %v1557
      %v1559 = vrot.slane %v1546, %v1558
      %v1560 = vlaneseq
      %v1561 = vshrl.u32 %v1560, 7
      %v1562 = vsub.s32 3, %v1561
      %v1563 = vrot.slane %v1546, %v1562
      %v1564 = vlaneseq
      %v1565 = vshrl.u32 %v1564, 7
      %v1566 = vsub.s32 4, %v1565
      %v1567 = vrot.slane %v1546, %v1566
      %v1568 = vlaneseq
      %v1569 = vshrl.u32 %v1568, 7
      %v1570 = vsub.s32 5, %v1569
      %v1571 = vrot.slane %v1546, %v1570
      %v1572 = vlaneseq
      %v1573 = vshrl.u32 %v1572, 7
      %v1574 = vsub.s32 6, %v1573
      %v1575 = vrot.slane %v1546, %v1574
      %v1576 = vlaneseq
      %v1577 = vshrl.u32 %v1576, 7
      %v1578 = vsub.s32 7, %v1577
      %v1579 = vrot.slane %v1546, %v1578
      %v1588 = vmul.f32 %v1456, %v1551
      %v1589 = vmul.f32 %v1458, %v1555
      %v1590 = vmul.f32 %v1460, %v1559
      %v1591 = vmul.f32 %v1462, %v1563
      %v1592 = vmul.f32 %v1464, %v1567
      %v1593 = vmul.f32 %v1466, %v1571
      %v1594 = vmul.f32 %v1468, %v1575
      %v1595 = vmul.f32 %v1470, %v1579
      %1597 = vset.pattern.permute.xlu0 0
      %1598 = vperm.xlu0 %1597, %v1588
      %v1599 = vpop.permute.xlu0 %1598
      %1602 = vset.pattern.permute.xlu0 0
      %1603 = vperm.xlu0 %1602, %v1589
      %v1604 = vpop.permute.xlu0 %1603
      %1607 = vset.pattern.permute.xlu0 0
      %1608 = vperm.xlu0 %1607, %v1590
      %v1609 = vpop.permute.xlu0 %1608
      %1612 = vset.pattern.permute.xlu0 0
      %1613 = vperm.xlu0 %1612, %v1591
      %v1614 = vpop.permute.xlu0 %1613
      %1617 = vset.pattern.permute.xlu0 0
      %1618 = vperm.xlu0 %1617, %v1592
      %v1619 = vpop.permute.xlu0 %1618
      %1622 = vset.pattern.permute.xlu0 0
      %1623 = vperm.xlu0 %1622, %v1593
      %v1624 = vpop.permute.xlu0 %1623
      %1627 = vset.pattern.permute.xlu0 0
      %1628 = vperm.xlu0 %1627, %v1594
      %v1629 = vpop.permute.xlu0 %1628
      %1632 = vset.pattern.permute.xlu0 0
      %1633 = vperm.xlu0 %1632, %v1595
      %v1634 = vpop.permute.xlu0 %1633
      %v1636 = vmul.f32 %v1599, %v1056
      %v1637 = vmul.f32 %v1604, %v1057
      %v1638 = vmul.f32 %v1609, %v1058
      %v1639 = vmul.f32 %v1614, %v1059
      %v1640 = vmul.f32 %v1619, %v1060
      %v1641 = vmul.f32 %v1624, %v1061
      %v1642 = vmul.f32 %v1629, %v1062
      %v1643 = vmul.f32 %v1634, %v1063
      %v1644 = vsel %vm1070, %v1636, 0.0
      %v1645 = vrot.slane %v1644, 4
      %v1646 = vadd.f32 %v1644, %v1645
      %v1647 = vrot.slane %v1646, 2
      %v1648 = vadd.f32 %v1646, %v1647
      %v1649 = vrot.slane %v1648, 1
      %v1650 = vadd.f32 %v1648, %v1649
      %v1651 = vsel %vm1070, %v1637, 0.0
      %v1652 = vrot.slane %v1651, 4
      %v1653 = vadd.f32 %v1651, %v1652
      %v1654 = vrot.slane %v1653, 2
      %v1655 = vadd.f32 %v1653, %v1654
      %v1656 = vrot.slane %v1655, 1
      %v1657 = vadd.f32 %v1655, %v1656
      %v1658 = vsel %vm1070, %v1638, 0.0
      %v1659 = vrot.slane %v1658, 4
      %v1660 = vadd.f32 %v1658, %v1659
      %v1661 = vrot.slane %v1660, 2
      %v1662 = vadd.f32 %v1660, %v1661
      %v1663 = vrot.slane %v1662, 1
      %v1664 = vadd.f32 %v1662, %v1663
      %v1665 = vsel %vm1070, %v1639, 0.0
      %v1666 = vrot.slane %v1665, 4
      %v1667 = vadd.f32 %v1665, %v1666
      %v1668 = vrot.slane %v1667, 2
      %v1669 = vadd.f32 %v1667, %v1668
      %v1670 = vrot.slane %v1669, 1
      %v1671 = vadd.f32 %v1669, %v1670
      %v1672 = vsel %vm1070, %v1640, 0.0
      %v1673 = vrot.slane %v1672, 4
      %v1674 = vadd.f32 %v1672, %v1673
      %v1675 = vrot.slane %v1674, 2
      %v1676 = vadd.f32 %v1674, %v1675
      %v1677 = vrot.slane %v1676, 1
      %v1678 = vadd.f32 %v1676, %v1677
      %v1679 = vsel %vm1070, %v1641, 0.0
      %v1680 = vrot.slane %v1679, 4
      %v1681 = vadd.f32 %v1679, %v1680
      %v1682 = vrot.slane %v1681, 2
      %v1683 = vadd.f32 %v1681, %v1682
      %v1684 = vrot.slane %v1683, 1
      %v1685 = vadd.f32 %v1683, %v1684
      %v1686 = vsel %vm1070, %v1642, 0.0
      %v1687 = vrot.slane %v1686, 4
      %v1688 = vadd.f32 %v1686, %v1687
      %v1689 = vrot.slane %v1688, 2
      %v1690 = vadd.f32 %v1688, %v1689
      %v1691 = vrot.slane %v1690, 1
      %v1692 = vadd.f32 %v1690, %v1691
      %v1693 = vsel %vm1070, %v1643, 0.0
      %v1694 = vrot.slane %v1693, 4
      %v1695 = vadd.f32 %v1693, %v1694
      %v1696 = vrot.slane %v1695, 2
      %v1697 = vadd.f32 %v1695, %v1696
      %v1698 = vrot.slane %v1697, 1
      %v1699 = vadd.f32 %v1697, %v1698
      %v1700 = vld [vmem:[%s560] sm:$0xff]
      %v1701 = vld [vmem:[%s560 + $0x8] sm:$0x3f]
      %v1702 = vld [vmem:[%s560 + $0x10] sm:$0xff]
      %v1703 = vld [vmem:[%s560 + $0x18] sm:$0x3f]
      %v1704 = vld [vmem:[%s560 + $0x20] sm:$0xff]
      %v1705 = vld [vmem:[%s560 + $0x28] sm:$0x3f]
      %v1706 = vld [vmem:[%s560 + $0x30] sm:$0xff]
      %v1707 = vld [vmem:[%s560 + $0x38] sm:$0x3f]
      %v1708 = vld [vmem:[%s560 + $0x40] sm:$0xff]
      %v1709 = vld [vmem:[%s560 + $0x48] sm:$0x3f]
      %v1710 = vld [vmem:[%s560 + $0x50] sm:$0xff]
      %v1711 = vld [vmem:[%s560 + $0x58] sm:$0x3f]
      %v1712 = vld [vmem:[%s560 + $0x60] sm:$0xff]
      %v1713 = vld [vmem:[%s560 + $0x68] sm:$0x3f]
      %v1714 = vld [vmem:[%s560 + $0x70] sm:$0xff]
      %v1715 = vld [vmem:[%s560 + $0x78] sm:$0x3f]
      %v1716 = vld [vmem:[%s565] sm:$0xff]
      %v1717 = vld [vmem:[%s10] sm:$0xff]
      %v1718 = vld [vmem:[%s10 + $0x8] sm:$0xff]
      %v1719 = vld [vmem:[%s10 + $0x10] sm:$0xff]
      %v1720 = vld [vmem:[%s10 + $0x18] sm:$0xff]
      %v1721 = vld [vmem:[%s10 + $0x20] sm:$0xff]
      %v1722 = vld [vmem:[%s10 + $0x28] sm:$0xff]
      %v1723 = vld [vmem:[%s11] sm:$0x1]
      %v1724 = vld [vmem:[%s12] sm:$0xff]
      %v1725 = vld [vmem:[%s12 + $0x8] sm:$0xff]
      %v1726 = vld [vmem:[%s12 + $0x10] sm:$0xff]
      %v1727 = vld [vmem:[%s12 + $0x18] sm:$0xff]
      %v1728 = vld [vmem:[%s13] sm:$0x1]
      %v1729 = vld [vmem:[%s14] sm:$0x1]
      %v1746 = vcombine.high %v1700, %v1700
      %v1747 = vcombine.high %v1702, %v1702
      %v1748 = vcombine.high %v1704, %v1704
      %v1749 = vcombine.high %v1706, %v1706
      %v1750 = vcombine.high %v1708, %v1708
      %v1751 = vcombine.high %v1710, %v1710
      %v1752 = vcombine.high %v1712, %v1712
      %v1753 = vcombine.high %v1714, %v1714
      %v1754 = vcombine.high %v1701, %v1701
      %v1755 = vcombine.high %v1703, %v1703
      %v1756 = vcombine.high %v1705, %v1705
      %v1757 = vcombine.high %v1707, %v1707
      %v1758 = vcombine.high %v1709, %v1709
      %v1759 = vcombine.high %v1711, %v1711
      %v1760 = vcombine.high %v1713, %v1713
      %v1761 = vcombine.high %v1715, %v1715
      %vm1762 = vcmask 1042432
      %vm1763 = vcmask 1046532
      %vm1764 = vmor %vm1762, %vm1763
      %v1765 = vrot.slane %v1700, 5
      %v1766 = vrot.slane %v1765, 4
      %v1767 = vrot.slane %v1746, 5
      %v1768 = vsel %vm1764, %v1766, %v1767
      %v1769 = vrot.slane %v1767, 4
      %v1770 = vrot.slane %v1701, 5
      %v1771 = vsel %vm1764, %v1769, %v1770
      %v1772 = vrot.slane %v1770, 4
      %v1773 = vrot.slane %v1754, 5
      %v1774 = vsel %vm1764, %v1772, %v1773
      %v1775 = vrot.slane %v1702, 5
      %v1776 = vrot.slane %v1775, 4
      %v1777 = vrot.slane %v1747, 5
      %v1778 = vsel %vm1764, %v1776, %v1777
      %v1779 = vrot.slane %v1777, 4
      %v1780 = vrot.slane %v1703, 5
      %v1781 = vsel %vm1764, %v1779, %v1780
      %v1782 = vrot.slane %v1780, 4
      %v1783 = vrot.slane %v1755, 5
      %v1784 = vsel %vm1764, %v1782, %v1783
      %v1785 = vrot.slane %v1704, 5
      %v1786 = vrot.slane %v1785, 4
      %v1787 = vrot.slane %v1748, 5
      %v1788 = vsel %vm1764, %v1786, %v1787
      %v1789 = vrot.slane %v1787, 4
      %v1790 = vrot.slane %v1705, 5
      %v1791 = vsel %vm1764, %v1789, %v1790
      %v1792 = vrot.slane %v1790, 4
      %v1793 = vrot.slane %v1756, 5
      %v1794 = vsel %vm1764, %v1792, %v1793
      %v1795 = vrot.slane %v1706, 5
      %v1796 = vrot.slane %v1795, 4
      %v1797 = vrot.slane %v1749, 5
      %v1798 = vsel %vm1764, %v1796, %v1797
      %v1799 = vrot.slane %v1797, 4
      %v1800 = vrot.slane %v1707, 5
      %v1801 = vsel %vm1764, %v1799, %v1800
      %v1802 = vrot.slane %v1800, 4
      %v1803 = vrot.slane %v1757, 5
      %v1804 = vsel %vm1764, %v1802, %v1803
      %v1805 = vrot.slane %v1708, 5
      %v1806 = vrot.slane %v1805, 4
      %v1807 = vrot.slane %v1750, 5
      %v1808 = vsel %vm1764, %v1806, %v1807
      %v1809 = vrot.slane %v1807, 4
      %v1810 = vrot.slane %v1709, 5
      %v1811 = vsel %vm1764, %v1809, %v1810
      %v1812 = vrot.slane %v1810, 4
      %v1813 = vrot.slane %v1758, 5
      %v1814 = vsel %vm1764, %v1812, %v1813
      %v1815 = vrot.slane %v1710, 5
      %v1816 = vrot.slane %v1815, 4
      %v1817 = vrot.slane %v1751, 5
      %v1818 = vsel %vm1764, %v1816, %v1817
      %v1819 = vrot.slane %v1817, 4
      %v1820 = vrot.slane %v1711, 5
      %v1821 = vsel %vm1764, %v1819, %v1820
      %v1822 = vrot.slane %v1820, 4
      %v1823 = vrot.slane %v1759, 5
      %v1824 = vsel %vm1764, %v1822, %v1823
      %v1825 = vrot.slane %v1712, 5
      %v1826 = vrot.slane %v1825, 4
      %v1827 = vrot.slane %v1752, 5
      %v1828 = vsel %vm1764, %v1826, %v1827
      %v1829 = vrot.slane %v1827, 4
      %v1830 = vrot.slane %v1713, 5
      %v1831 = vsel %vm1764, %v1829, %v1830
      %v1832 = vrot.slane %v1830, 4
      %v1833 = vrot.slane %v1760, 5
      %v1834 = vsel %vm1764, %v1832, %v1833
      %v1835 = vrot.slane %v1714, 5
      %v1836 = vrot.slane %v1835, 4
      %v1837 = vrot.slane %v1753, 5
      %v1838 = vsel %vm1764, %v1836, %v1837
      %v1839 = vrot.slane %v1837, 4
      %v1840 = vrot.slane %v1715, 5
      %v1841 = vsel %vm1764, %v1839, %v1840
      %v1842 = vrot.slane %v1840, 4
      %v1843 = vrot.slane %v1761, 5
      %v1844 = vsel %vm1764, %v1842, %v1843
      %v1845 = vcombine.low %v1768, %v1771
      %v1846 = vcombine.low %v1774, %v1778
      %v1847 = vcombine.low %v1781, %v1784
      %v1848 = vcombine.low %v1788, %v1791
      %v1849 = vcombine.low %v1794, %v1798
      %v1850 = vcombine.low %v1801, %v1804
      %v1851 = vcombine.low %v1808, %v1811
      %v1852 = vcombine.low %v1814, %v1818
      %v1853 = vcombine.low %v1821, %v1824
      %v1854 = vcombine.low %v1828, %v1831
      %v1855 = vcombine.low %v1834, %v1838
      %v1856 = vcombine.low %v1841, %v1844
      %v1857 = vsel %vm645, %v1845, 0
      %v1859 = vsel %vm645, %v1846, 0
      %v1861 = vsel %vm645, %v1847, 0
      %v1863 = vsel %vm645, %v1848, 0
      %v1865 = vsel %vm645, %v1849, 0
      %v1867 = vsel %vm645, %v1850, 0
      %v1869 = vsel %vm645, %v1851, 0
      %v1871 = vsel %vm645, %v1852, 0
      %v1873 = vsel %vm645, %v1853, 0
      %v1875 = vsel %vm645, %v1854, 0
      %v1877 = vsel %vm645, %v1855, 0
      %v1879 = vsel %vm645, %v1856, 0
      %1881 = vmatprep.subr.mxu0 0.0
      %1882 = vmatpush1.msra.mxu0 0.0
      %1883 = vmatprep.subr.mxu0 0.0
      %1884 = vmatpush1.msra.mxu0 0.0
      %1885 = vmatprep.subr.mxu0 0.0
      %1886 = vmatpush1.msra.mxu0 0.0
      %1887 = vmatprep.subr.mxu0 0.0
      %1888 = vmatpush1.msra.mxu0 0.0
      %1889 = vmatprep.subr.mxu0 0.0
      %1890 = vmatpush1.msra.mxu0 0.0
      %1891 = vmatprep.subr.mxu0 0.0
      %1892 = vmatpush1.msra.mxu0 0.0
      %1893 = vmatprep.subr.mxu0 0.0
      %1894 = vmatpush1.msra.mxu0 0.0
      %1895 = vmatprep.subr.mxu0 0.0
      %1896 = vmatpush1.msra.mxu0 0.0
      %1897 = vmatprep.subr.mxu0 0.0
      %1898 = vmatpush1.msra.mxu0 0.0
      %1899 = vmatprep.subr.mxu0 0.0
      %1900 = vmatpush1.msra.mxu0 0.0
      %1901 = vmatprep.subr.mxu0 0.0
      %1902 = vmatpush1.msra.mxu0 0.0
      %1903 = vmatprep.subr.mxu0 0.0
      %1904 = vmatpush1.msra.mxu0 0.0
      %1905 = vmatprep.subr.mxu0 0.0
      %1906 = vmatpush1.msra.mxu0 0.0
      %1907 = vmatprep.subr.mxu0 0.0
      %1908 = vmatpush1.msra.mxu0 0.0
      %1909 = vmatprep.subr.mxu0 0.0
      %1910 = vmatpush1.msra.mxu0 %v1720
      %1911 = vmatprep.subr.mxu0 0.0
      %1912 = vmatpush1.msra.mxu0 %v1719
      %1913 = vmatprep.subr.mxu0 0.0
      %1914 = vmatpush2.msra.mxu0 0.0
      %1915 = vmatprep.subr.mxu0 0.0
      %1916 = vmatpush2.msra.mxu0 0.0
      %1917 = vmatprep.subr.mxu0 0.0
      %1918 = vmatpush2.msra.mxu0 0.0
      %1919 = vmatprep.subr.mxu0 0.0
      %1920 = vmatpush2.msra.mxu0 0.0
      %1921 = vmatprep.subr.mxu0 0.0
      %1922 = vmatpush2.msra.mxu0 0.0
      %1923 = vmatprep.subr.mxu0 0.0
      %1924 = vmatpush2.msra.mxu0 0.0
      %1925 = vmatprep.subr.mxu0 0.0
      %1926 = vmatpush2.msra.mxu0 0.0
      %1927 = vmatprep.subr.mxu0 0.0
      %1928 = vmatpush2.msra.mxu0 0.0
      %1929 = vmatprep.subr.mxu0 0.0
      %1930 = vmatpush2.msra.mxu0 0.0
      %1931 = vmatprep.subr.mxu0 0.0
      %1932 = vmatpush2.msra.mxu0 0.0
      %1933 = vmatprep.subr.mxu0 0.0
      %1934 = vmatpush2.msra.mxu0 0.0
      %1935 = vmatprep.subr.mxu0 0.0
      %1936 = vmatpush2.msra.mxu0 0.0
      %1937 = vmatprep.subr.mxu0 0.0
      %1938 = vmatpush2.msra.mxu0 0.0
      %1939 = vmatprep.subr.mxu0 0.0
      %1940 = vmatpush2.msra.mxu0 0.0
      %1941 = vmatprep.subr.mxu0 0.0
      %1942 = vmatpush2.msra.mxu0 0.0
      %1943 = vmatprep.subr.mxu0 0.0
      %1944 = vmatpush2.msra.mxu0 0.0
      %1945 = vmatprep.mubr.f32.mxu0 0.0
      %1946 = vmatmul.mubr.f32.gmra.mxu0 %v1857
      %v1947 = vpop.f32.mrf.mxu0
      %v1948 = vadd.f32 0.0, %v1947
      %v1949 = vpop.f32.mrf.mxu0
      %1950 = vmatprep.mubr.f32.mxu0 0.0
      %1951 = vmatmul.mubr.f32.gmra.mxu0 %v1859
      %v1952 = vpop.f32.mrf.mxu0
      %v1953 = vadd.f32 0.0, %v1952
      %v1954 = vpop.f32.mrf.mxu0
      %1955 = vmatprep.mubr.f32.mxu0 0.0
      %1956 = vmatmul.mubr.f32.gmra.mxu0 %v1861
      %v1957 = vpop.f32.mrf.mxu0
      %v1958 = vadd.f32 0.0, %v1957
      %v1959 = vpop.f32.mrf.mxu0
      %1960 = vmatprep.mubr.f32.mxu0 0.0
      %1961 = vmatmul.mubr.f32.gmra.mxu0 %v1863
      %v1962 = vpop.f32.mrf.mxu0
      %v1963 = vadd.f32 0.0, %v1962
      %v1964 = vpop.f32.mrf.mxu0
      %1965 = vmatprep.mubr.f32.mxu0 0.0
      %1966 = vmatmul.mubr.f32.gmra.mxu0 %v1865
      %v1967 = vpop.f32.mrf.mxu0
      %v1968 = vadd.f32 0.0, %v1967
      %v1969 = vpop.f32.mrf.mxu0
      %1970 = vmatprep.mubr.f32.mxu0 0.0
      %1971 = vmatmul.mubr.f32.gmra.mxu0 %v1867
      %v1972 = vpop.f32.mrf.mxu0
      %v1973 = vadd.f32 0.0, %v1972
      %v1974 = vpop.f32.mrf.mxu0
      %1975 = vmatprep.mubr.f32.mxu0 0.0
      %1976 = vmatmul.mubr.f32.gmra.mxu0 %v1869
      %v1977 = vpop.f32.mrf.mxu0
      %v1978 = vadd.f32 0.0, %v1977
      %v1979 = vpop.f32.mrf.mxu0
      %1980 = vmatprep.mubr.f32.mxu0 0.0
      %1981 = vmatmul.mubr.f32.gmra.mxu0 %v1871
      %v1982 = vpop.f32.mrf.mxu0
      %v1983 = vadd.f32 0.0, %v1982
      %v1984 = vpop.f32.mrf.mxu0
      %1985 = vmatprep.mubr.f32.mxu0 0.0
      %1986 = vmatmul.mubr.f32.gmra.mxu0 %v1873
      %v1987 = vpop.f32.mrf.mxu0
      %v1988 = vadd.f32 0.0, %v1987
      %v1989 = vpop.f32.mrf.mxu0
      %1990 = vmatprep.mubr.f32.mxu0 0.0
      %1991 = vmatmul.mubr.f32.gmra.mxu0 %v1875
      %v1992 = vpop.f32.mrf.mxu0
      %v1993 = vadd.f32 0.0, %v1992
      %v1994 = vpop.f32.mrf.mxu0
      %1995 = vmatprep.mubr.f32.mxu0 0.0
      %1996 = vmatmul.mubr.f32.gmra.mxu0 %v1877
      %v1997 = vpop.f32.mrf.mxu0
      %v1998 = vadd.f32 0.0, %v1997
      %v1999 = vpop.f32.mrf.mxu0
      %2000 = vmatprep.mubr.f32.mxu0 0.0
      %2001 = vmatmul.mubr.f32.gmra.mxu0 %v1879
      %v2002 = vpop.f32.mrf.mxu0
      %v2003 = vadd.f32 0.0, %v2002
      %v2004 = vpop.f32.mrf.mxu0
      %2005 = vdwg.mxu0
      %v2006 = vcombine.low %v1700, %v1746
      %v2007 = vcombine.low %v1701, %v1702
      %v2008 = vcombine.low %v1747, %v1703
      %v2009 = vcombine.low %v1704, %v1748
      %v2010 = vcombine.low %v1705, %v1706
      %v2011 = vcombine.low %v1749, %v1707
      %v2012 = vcombine.low %v1708, %v1750
      %v2013 = vcombine.low %v1709, %v1710
      %v2014 = vcombine.low %v1751, %v1711
      %v2015 = vcombine.low %v1712, %v1752
      %v2016 = vcombine.low %v1713, %v1714
      %v2017 = vcombine.low %v1753, %v1715
      %v2018 = vsel %vm645, %v2006, 0
      %v2020 = vsel %vm645, %v2007, 0
      %v2022 = vsel %vm645, %v2008, 0
      %v2024 = vsel %vm645, %v2009, 0
      %v2026 = vsel %vm645, %v2010, 0
      %v2028 = vsel %vm645, %v2011, 0
      %v2030 = vsel %vm645, %v2012, 0
      %v2032 = vsel %vm645, %v2013, 0
      %v2034 = vsel %vm645, %v2014, 0
      %v2036 = vsel %vm645, %v2015, 0
      %v2038 = vsel %vm645, %v2016, 0
      %v2040 = vsel %vm645, %v2017, 0
      %2042 = vmatprep.subr.mxu0 0.0
      %2043 = vmatpush1.msra.mxu0 0.0
      %2044 = vmatprep.subr.mxu0 0.0
      %2045 = vmatpush1.msra.mxu0 0.0
      %2046 = vmatprep.subr.mxu0 0.0
      %2047 = vmatpush1.msra.mxu0 0.0
      %2048 = vmatprep.subr.mxu0 0.0
      %2049 = vmatpush1.msra.mxu0 0.0
      %2050 = vmatprep.subr.mxu0 0.0
      %2051 = vmatpush1.msra.mxu0 0.0
      %2052 = vmatprep.subr.mxu0 0.0
      %2053 = vmatpush1.msra.mxu0 0.0
      %2054 = vmatprep.subr.mxu0 0.0
      %2055 = vmatpush1.msra.mxu0 0.0
      %2056 = vmatprep.subr.mxu0 0.0
      %2057 = vmatpush1.msra.mxu0 0.0
      %2058 = vmatprep.subr.mxu0 0.0
      %2059 = vmatpush1.msra.mxu0 0.0
      %2060 = vmatprep.subr.mxu0 0.0
      %2061 = vmatpush1.msra.mxu0 0.0
      %2062 = vmatprep.subr.mxu0 0.0
      %2063 = vmatpush1.msra.mxu0 0.0
      %2064 = vmatprep.subr.mxu0 0.0
      %2065 = vmatpush1.msra.mxu0 0.0
      %2066 = vmatprep.subr.mxu0 0.0
      %2067 = vmatpush1.msra.mxu0 0.0
      %2068 = vmatprep.subr.mxu0 0.0
      %2069 = vmatpush1.msra.mxu0 0.0
      %2070 = vmatprep.subr.mxu0 0.0
      %2071 = vmatpush1.msra.mxu0 %v1718
      %2072 = vmatprep.subr.mxu0 0.0
      %2073 = vmatpush1.msra.mxu0 %v1717
      %2074 = vmatprep.subr.mxu0 0.0
      %2075 = vmatpush2.msra.mxu0 0.0
      %2076 = vmatprep.subr.mxu0 0.0
      %2077 = vmatpush2.msra.mxu0 0.0
      %2078 = vmatprep.subr.mxu0 0.0
      %2079 = vmatpush2.msra.mxu0 0.0
      %2080 = vmatprep.subr.mxu0 0.0
      %2081 = vmatpush2.msra.mxu0 0.0
      %2082 = vmatprep.subr.mxu0 0.0
      %2083 = vmatpush2.msra.mxu0 0.0
      %2084 = vmatprep.subr.mxu0 0.0
      %2085 = vmatpush2.msra.mxu0 0.0
      %2086 = vmatprep.subr.mxu0 0.0
      %2087 = vmatpush2.msra.mxu0 0.0
      %2088 = vmatprep.subr.mxu0 0.0
      %2089 = vmatpush2.msra.mxu0 0.0
      %2090 = vmatprep.subr.mxu0 0.0
      %2091 = vmatpush2.msra.mxu0 0.0
      %2092 = vmatprep.subr.mxu0 0.0
      %2093 = vmatpush2.msra.mxu0 0.0
      %2094 = vmatprep.subr.mxu0 0.0
      %2095 = vmatpush2.msra.mxu0 0.0
      %2096 = vmatprep.subr.mxu0 0.0
      %2097 = vmatpush2.msra.mxu0 0.0
      %2098 = vmatprep.subr.mxu0 0.0
      %2099 = vmatpush2.msra.mxu0 0.0
      %2100 = vmatprep.subr.mxu0 0.0
      %2101 = vmatpush2.msra.mxu0 0.0
      %2102 = vmatprep.subr.mxu0 0.0
      %2103 = vmatpush2.msra.mxu0 0.0
      %2104 = vmatprep.subr.mxu0 0.0
      %2105 = vmatpush2.msra.mxu0 0.0
      %2106 = vmatprep.mubr.f32.mxu0 0.0
      %2107 = vmatmul.mubr.f32.gmra.mxu0 %v2018
      %v2108 = vpop.f32.mrf.mxu0
      %v2109 = vadd.f32 %v1948, %v2108
      %v2110 = vpop.f32.mrf.mxu0
      %2111 = vmatprep.mubr.f32.mxu0 0.0
      %2112 = vmatmul.mubr.f32.gmra.mxu0 %v2020
      %v2113 = vpop.f32.mrf.mxu0
      %v2114 = vadd.f32 %v1953, %v2113
      %v2115 = vpop.f32.mrf.mxu0
      %2116 = vmatprep.mubr.f32.mxu0 0.0
      %2117 = vmatmul.mubr.f32.gmra.mxu0 %v2022
      %v2118 = vpop.f32.mrf.mxu0
      %v2119 = vadd.f32 %v1958, %v2118
      %v2120 = vpop.f32.mrf.mxu0
      %2121 = vmatprep.mubr.f32.mxu0 0.0
      %2122 = vmatmul.mubr.f32.gmra.mxu0 %v2024
      %v2123 = vpop.f32.mrf.mxu0
      %v2124 = vadd.f32 %v1963, %v2123
      %v2125 = vpop.f32.mrf.mxu0
      %2126 = vmatprep.mubr.f32.mxu0 0.0
      %2127 = vmatmul.mubr.f32.gmra.mxu0 %v2026
      %v2128 = vpop.f32.mrf.mxu0
      %v2129 = vadd.f32 %v1968, %v2128
      %v2130 = vpop.f32.mrf.mxu0
      %2131 = vmatprep.mubr.f32.mxu0 0.0
      %2132 = vmatmul.mubr.f32.gmra.mxu0 %v2028
      %v2133 = vpop.f32.mrf.mxu0
      %v2134 = vadd.f32 %v1973, %v2133
      %v2135 = vpop.f32.mrf.mxu0
      %2136 = vmatprep.mubr.f32.mxu0 0.0
      %2137 = vmatmul.mubr.f32.gmra.mxu0 %v2030
      %v2138 = vpop.f32.mrf.mxu0
      %v2139 = vadd.f32 %v1978, %v2138
      %v2140 = vpop.f32.mrf.mxu0
      %2141 = vmatprep.mubr.f32.mxu0 0.0
      %2142 = vmatmul.mubr.f32.gmra.mxu0 %v2032
      %v2143 = vpop.f32.mrf.mxu0
      %v2144 = vadd.f32 %v1983, %v2143
      %v2145 = vpop.f32.mrf.mxu0
      %2146 = vmatprep.mubr.f32.mxu0 0.0
      %2147 = vmatmul.mubr.f32.gmra.mxu0 %v2034
      %v2148 = vpop.f32.mrf.mxu0
      %v2149 = vadd.f32 %v1988, %v2148
      %v2150 = vpop.f32.mrf.mxu0
      %2151 = vmatprep.mubr.f32.mxu0 0.0
      %2152 = vmatmul.mubr.f32.gmra.mxu0 %v2036
      %v2153 = vpop.f32.mrf.mxu0
      %v2154 = vadd.f32 %v1993, %v2153
      %v2155 = vpop.f32.mrf.mxu0
      %2156 = vmatprep.mubr.f32.mxu0 0.0
      %2157 = vmatmul.mubr.f32.gmra.mxu0 %v2038
      %v2158 = vpop.f32.mrf.mxu0
      %v2159 = vadd.f32 %v1998, %v2158
      %v2160 = vpop.f32.mrf.mxu0
      %2161 = vmatprep.mubr.f32.mxu0 0.0
      %2162 = vmatmul.mubr.f32.gmra.mxu0 %v2040
      %v2163 = vpop.f32.mrf.mxu0
      %v2164 = vadd.f32 %v2003, %v2163
      %v2165 = vpop.f32.mrf.mxu0
      %2166 = vdwg.mxu0
      %vm2167 = vcmask 1041408
      %vm2168 = vcmask 1045508
      %vm2169 = vmor %vm2167, %vm2168
      %v2170 = vrot.slane %v1700, 6
      %v2171 = vrot.slane %v2170, 4
      %v2172 = vrot.slane %v1746, 6
      %v2173 = vsel %vm2169, %v2171, %v2172
      %v2174 = vrot.slane %v2172, 4
      %v2175 = vrot.slane %v1701, 6
      %v2176 = vsel %vm2169, %v2174, %v2175
      %v2177 = vrot.slane %v2175, 4
      %v2178 = vrot.slane %v1754, 6
      %v2179 = vsel %vm2169, %v2177, %v2178
      %v2180 = vrot.slane %v1702, 6
      %v2181 = vrot.slane %v2180, 4
      %v2182 = vrot.slane %v1747, 6
      %v2183 = vsel %vm2169, %v2181, %v2182
      %v2184 = vrot.slane %v2182, 4
      %v2185 = vrot.slane %v1703, 6
      %v2186 = vsel %vm2169, %v2184, %v2185
      %v2187 = vrot.slane %v2185, 4
      %v2188 = vrot.slane %v1755, 6
      %v2189 = vsel %vm2169, %v2187, %v2188
      %v2190 = vrot.slane %v1704, 6
      %v2191 = vrot.slane %v2190, 4
      %v2192 = vrot.slane %v1748, 6
      %v2193 = vsel %vm2169, %v2191, %v2192
      %v2194 = vrot.slane %v2192, 4
      %v2195 = vrot.slane %v1705, 6
      %v2196 = vsel %vm2169, %v2194, %v2195
      %v2197 = vrot.slane %v2195, 4
      %v2198 = vrot.slane %v1756, 6
      %v2199 = vsel %vm2169, %v2197, %v2198
      %v2200 = vrot.slane %v1706, 6
      %v2201 = vrot.slane %v2200, 4
      %v2202 = vrot.slane %v1749, 6
      %v2203 = vsel %vm2169, %v2201, %v2202
      %v2204 = vrot.slane %v2202, 4
      %v2205 = vrot.slane %v1707, 6
      %v2206 = vsel %vm2169, %v2204, %v2205
      %v2207 = vrot.slane %v2205, 4
      %v2208 = vrot.slane %v1757, 6
      %v2209 = vsel %vm2169, %v2207, %v2208
      %v2210 = vrot.slane %v1708, 6
      %v2211 = vrot.slane %v2210, 4
      %v2212 = vrot.slane %v1750, 6
      %v2213 = vsel %vm2169, %v2211, %v2212
      %v2214 = vrot.slane %v2212, 4
      %v2215 = vrot.slane %v1709, 6
      %v2216 = vsel %vm2169, %v2214, %v2215
      %v2217 = vrot.slane %v2215, 4
      %v2218 = vrot.slane %v1758, 6
      %v2219 = vsel %vm2169, %v2217, %v2218
      %v2220 = vrot.slane %v1710, 6
      %v2221 = vrot.slane %v2220, 4
      %v2222 = vrot.slane %v1751, 6
      %v2223 = vsel %vm2169, %v2221, %v2222
      %v2224 = vrot.slane %v2222, 4
      %v2225 = vrot.slane %v1711, 6
      %v2226 = vsel %vm2169, %v2224, %v2225
      %v2227 = vrot.slane %v2225, 4
      %v2228 = vrot.slane %v1759, 6
      %v2229 = vsel %vm2169, %v2227, %v2228
      %v2230 = vrot.slane %v1712, 6
      %v2231 = vrot.slane %v2230, 4
      %v2232 = vrot.slane %v1752, 6
      %v2233 = vsel %vm2169, %v2231, %v2232
      %v2234 = vrot.slane %v2232, 4
      %v2235 = vrot.slane %v1713, 6
      %v2236 = vsel %vm2169, %v2234, %v2235
      %v2237 = vrot.slane %v2235, 4
      %v2238 = vrot.slane %v1760, 6
      %v2239 = vsel %vm2169, %v2237, %v2238
      %v2240 = vrot.slane %v1714, 6
      %v2241 = vrot.slane %v2240, 4
      %v2242 = vrot.slane %v1753, 6
      %v2243 = vsel %vm2169, %v2241, %v2242
      %v2244 = vrot.slane %v2242, 4
      %v2245 = vrot.slane %v1715, 6
      %v2246 = vsel %vm2169, %v2244, %v2245
      %v2247 = vrot.slane %v2245, 4
      %v2248 = vrot.slane %v1761, 6
      %v2249 = vsel %vm2169, %v2247, %v2248
      %v2250 = vcombine.low %v2173, %v2176
      %v2251 = vcombine.low %v2179, %v2183
      %v2252 = vcombine.low %v2186, %v2189
      %v2253 = vcombine.low %v2193, %v2196
      %v2254 = vcombine.low %v2199, %v2203
      %v2255 = vcombine.low %v2206, %v2209
      %v2256 = vcombine.low %v2213, %v2216
      %v2257 = vcombine.low %v2219, %v2223
      %v2258 = vcombine.low %v2226, %v2229
      %v2259 = vcombine.low %v2233, %v2236
      %v2260 = vcombine.low %v2239, %v2243
      %v2261 = vcombine.low %v2246, %v2249
      %v2262 = vsel %vm645, %v2250, 0
      %v2264 = vsel %vm645, %v2251, 0
      %v2266 = vsel %vm645, %v2252, 0
      %v2268 = vsel %vm645, %v2253, 0
      %v2270 = vsel %vm645, %v2254, 0
      %v2272 = vsel %vm645, %v2255, 0
      %v2274 = vsel %vm645, %v2256, 0
      %v2276 = vsel %vm645, %v2257, 0
      %v2278 = vsel %vm645, %v2258, 0
      %v2280 = vsel %vm645, %v2259, 0
      %v2282 = vsel %vm645, %v2260, 0
      %v2284 = vsel %vm645, %v2261, 0
      %2286 = vmatprep.subr.mxu0 0.0
      %2287 = vmatpush1.msra.mxu0 0.0
      %2288 = vmatprep.subr.mxu0 0.0
      %2289 = vmatpush1.msra.mxu0 0.0
      %2290 = vmatprep.subr.mxu0 0.0
      %2291 = vmatpush1.msra.mxu0 0.0
      %2292 = vmatprep.subr.mxu0 0.0
      %2293 = vmatpush1.msra.mxu0 0.0
      %2294 = vmatprep.subr.mxu0 0.0
      %2295 = vmatpush1.msra.mxu0 0.0
      %2296 = vmatprep.subr.mxu0 0.0
      %2297 = vmatpush1.msra.mxu0 0.0
      %2298 = vmatprep.subr.mxu0 0.0
      %2299 = vmatpush1.msra.mxu0 0.0
      %2300 = vmatprep.subr.mxu0 0.0
      %2301 = vmatpush1.msra.mxu0 0.0
      %2302 = vmatprep.subr.mxu0 0.0
      %2303 = vmatpush1.msra.mxu0 0.0
      %2304 = vmatprep.subr.mxu0 0.0
      %2305 = vmatpush1.msra.mxu0 0.0
      %2306 = vmatprep.subr.mxu0 0.0
      %2307 = vmatpush1.msra.mxu0 0.0
      %2308 = vmatprep.subr.mxu0 0.0
      %2309 = vmatpush1.msra.mxu0 0.0
      %2310 = vmatprep.subr.mxu0 0.0
      %2311 = vmatpush1.msra.mxu0 0.0
      %2312 = vmatprep.subr.mxu0 0.0
      %2313 = vmatpush1.msra.mxu0 0.0
      %2314 = vmatprep.subr.mxu0 0.0
      %2315 = vmatpush1.msra.mxu0 %v1722
      %2316 = vmatprep.subr.mxu0 0.0
      %2317 = vmatpush1.msra.mxu0 %v1721
      %2318 = vmatprep.subr.mxu0 0.0
      %2319 = vmatpush2.msra.mxu0 0.0
      %2320 = vmatprep.subr.mxu0 0.0
      %2321 = vmatpush2.msra.mxu0 0.0
      %2322 = vmatprep.subr.mxu0 0.0
      %2323 = vmatpush2.msra.mxu0 0.0
      %2324 = vmatprep.subr.mxu0 0.0
      %2325 = vmatpush2.msra.mxu0 0.0
      %2326 = vmatprep.subr.mxu0 0.0
      %2327 = vmatpush2.msra.mxu0 0.0
      %2328 = vmatprep.subr.mxu0 0.0
      %2329 = vmatpush2.msra.mxu0 0.0
      %2330 = vmatprep.subr.mxu0 0.0
      %2331 = vmatpush2.msra.mxu0 0.0
      %2332 = vmatprep.subr.mxu0 0.0
      %2333 = vmatpush2.msra.mxu0 0.0
      %2334 = vmatprep.subr.mxu0 0.0
      %2335 = vmatpush2.msra.mxu0 0.0
      %2336 = vmatprep.subr.mxu0 0.0
      %2337 = vmatpush2.msra.mxu0 0.0
      %2338 = vmatprep.subr.mxu0 0.0
      %2339 = vmatpush2.msra.mxu0 0.0
      %2340 = vmatprep.subr.mxu0 0.0
      %2341 = vmatpush2.msra.mxu0 0.0
      %2342 = vmatprep.subr.mxu0 0.0
      %2343 = vmatpush2.msra.mxu0 0.0
      %2344 = vmatprep.subr.mxu0 0.0
      %2345 = vmatpush2.msra.mxu0 0.0
      %2346 = vmatprep.subr.mxu0 0.0
      %2347 = vmatpush2.msra.mxu0 0.0
      %2348 = vmatprep.subr.mxu0 0.0
      %2349 = vmatpush2.msra.mxu0 0.0
      %2350 = vmatprep.mubr.f32.mxu0 0.0
      %2351 = vmatmul.mubr.f32.gmra.mxu0 %v2262
      %v2352 = vpop.f32.mrf.mxu0
      %v2353 = vadd.f32 0.0, %v2352
      %v2354 = vpop.f32.mrf.mxu0
      %2355 = vmatprep.mubr.f32.mxu0 0.0
      %2356 = vmatmul.mubr.f32.gmra.mxu0 %v2264
      %v2357 = vpop.f32.mrf.mxu0
      %v2358 = vadd.f32 0.0, %v2357
      %v2359 = vpop.f32.mrf.mxu0
      %2360 = vmatprep.mubr.f32.mxu0 0.0
      %2361 = vmatmul.mubr.f32.gmra.mxu0 %v2266
      %v2362 = vpop.f32.mrf.mxu0
      %v2363 = vadd.f32 0.0, %v2362
      %v2364 = vpop.f32.mrf.mxu0
      %2365 = vmatprep.mubr.f32.mxu0 0.0
      %2366 = vmatmul.mubr.f32.gmra.mxu0 %v2268
      %v2367 = vpop.f32.mrf.mxu0
      %v2368 = vadd.f32 0.0, %v2367
      %v2369 = vpop.f32.mrf.mxu0
      %2370 = vmatprep.mubr.f32.mxu0 0.0
      %2371 = vmatmul.mubr.f32.gmra.mxu0 %v2270
      %v2372 = vpop.f32.mrf.mxu0
      %v2373 = vadd.f32 0.0, %v2372
      %v2374 = vpop.f32.mrf.mxu0
      %2375 = vmatprep.mubr.f32.mxu0 0.0
      %2376 = vmatmul.mubr.f32.gmra.mxu0 %v2272
      %v2377 = vpop.f32.mrf.mxu0
      %v2378 = vadd.f32 0.0, %v2377
      %v2379 = vpop.f32.mrf.mxu0
      %2380 = vmatprep.mubr.f32.mxu0 0.0
      %2381 = vmatmul.mubr.f32.gmra.mxu0 %v2274
      %v2382 = vpop.f32.mrf.mxu0
      %v2383 = vadd.f32 0.0, %v2382
      %v2384 = vpop.f32.mrf.mxu0
      %2385 = vmatprep.mubr.f32.mxu0 0.0
      %2386 = vmatmul.mubr.f32.gmra.mxu0 %v2276
      %v2387 = vpop.f32.mrf.mxu0
      %v2388 = vadd.f32 0.0, %v2387
      %v2389 = vpop.f32.mrf.mxu0
      %2390 = vmatprep.mubr.f32.mxu0 0.0
      %2391 = vmatmul.mubr.f32.gmra.mxu0 %v2278
      %v2392 = vpop.f32.mrf.mxu0
      %v2393 = vadd.f32 0.0, %v2392
      %v2394 = vpop.f32.mrf.mxu0
      %2395 = vmatprep.mubr.f32.mxu0 0.0
      %2396 = vmatmul.mubr.f32.gmra.mxu0 %v2280
      %v2397 = vpop.f32.mrf.mxu0
      %v2398 = vadd.f32 0.0, %v2397
      %v2399 = vpop.f32.mrf.mxu0
      %2400 = vmatprep.mubr.f32.mxu0 0.0
      %2401 = vmatmul.mubr.f32.gmra.mxu0 %v2282
      %v2402 = vpop.f32.mrf.mxu0
      %v2403 = vadd.f32 0.0, %v2402
      %v2404 = vpop.f32.mrf.mxu0
      %2405 = vmatprep.mubr.f32.mxu0 0.0
      %2406 = vmatmul.mubr.f32.gmra.mxu0 %v2284
      %v2407 = vpop.f32.mrf.mxu0
      %v2408 = vadd.f32 0.0, %v2407
      %v2409 = vpop.f32.mrf.mxu0
      %2410 = vdwg.mxu0
      %v2411 = vadd.f32 %v2109, %v2353
      %v2412 = vadd.f32 %v2114, %v2358
      %v2413 = vadd.f32 %v2119, %v2363
      %v2414 = vadd.f32 %v2124, %v2368
      %v2415 = vadd.f32 %v2129, %v2373
      %v2416 = vadd.f32 %v2134, %v2378
      %v2417 = vadd.f32 %v2139, %v2383
      %v2418 = vadd.f32 %v2144, %v2388
      %v2419 = vadd.f32 %v2149, %v2393
      %v2420 = vadd.f32 %v2154, %v2398
      %v2421 = vadd.f32 %v2159, %v2403
      %v2422 = vadd.f32 %v2164, %v2408
      %v2424 = vlaneseq
      %v2425 = vshrl.u32 %v2424, 7
      %v2426 = vsub.s32 0, %v2425
      %v2427 = vrot.slane %v1723, %v2426
      %v2429 = vadd.f32 %v2411, %v2427
      %v2430 = vadd.f32 %v2412, %v2427
      %v2431 = vadd.f32 %v2413, %v2427
      %v2432 = vadd.f32 %v2414, %v2427
      %v2433 = vadd.f32 %v2415, %v2427
      %v2434 = vadd.f32 %v2416, %v2427
      %v2435 = vadd.f32 %v2417, %v2427
      %v2436 = vadd.f32 %v2418, %v2427
      %v2437 = vadd.f32 %v2419, %v2427
      %v2438 = vadd.f32 %v2420, %v2427
      %v2439 = vadd.f32 %v2421, %v2427
      %v2440 = vadd.f32 %v2422, %v2427
      %v2441 = vmax.f32 %v2429, 0.0
      %v2442 = vmax.f32 %v2430, 0.0
      %v2443 = vmax.f32 %v2431, 0.0
      %v2444 = vmax.f32 %v2432, 0.0
      %v2445 = vmax.f32 %v2433, 0.0
      %v2446 = vmax.f32 %v2434, 0.0
      %v2447 = vmax.f32 %v2435, 0.0
      %v2448 = vmax.f32 %v2436, 0.0
      %v2449 = vmax.f32 %v2437, 0.0
      %v2450 = vmax.f32 %v2438, 0.0
      %v2451 = vmax.f32 %v2439, 0.0
      %v2452 = vmax.f32 %v2440, 0.0
      %v2454 = vlaneseq
      %v2455 = vshrl.u32 %v2454, 7
      %v2456 = vsub.s32 0, %v2455
      %v2457 = vrot.slane %v1728, %v2456
      %v2460 = vsel %vm1070, %v2441, 0
      %v2463 = vsel %vm1070, %v2442, 0
      %v2466 = vsel %vm1070, %v2443, 0
      %v2469 = vsel %vm1070, %v2444, 0
      %v2472 = vsel %vm1070, %v2445, 0
      %v2475 = vsel %vm1070, %v2446, 0
      %v2478 = vsel %vm1070, %v2447, 0
      %v2481 = vsel %vm1070, %v2448, 0
      %v2484 = vsel %vm1070, %v2449, 0
      %v2487 = vsel %vm1070, %v2450, 0
      %v2490 = vsel %vm1070, %v2451, 0
      %v2493 = vsel %vm1070, %v2452, 0
      %2495 = vmatprep.subr.mxu0 0.0
      %2496 = vmatpush1.msra.mxu0 0.0
      %2497 = vmatprep.subr.mxu0 0.0
      %2498 = vmatpush1.msra.mxu0 0.0
      %2499 = vmatprep.subr.mxu0 0.0
      %2500 = vmatpush1.msra.mxu0 0.0
      %2501 = vmatprep.subr.mxu0 0.0
      %2502 = vmatpush1.msra.mxu0 0.0
      %2503 = vmatprep.subr.mxu0 0.0
      %2504 = vmatpush1.msra.mxu0 0.0
      %2505 = vmatprep.subr.mxu0 0.0
      %2506 = vmatpush1.msra.mxu0 0.0
      %2507 = vmatprep.subr.mxu0 0.0
      %2508 = vmatpush1.msra.mxu0 0.0
      %2509 = vmatprep.subr.mxu0 0.0
      %2510 = vmatpush1.msra.mxu0 0.0
      %2511 = vmatprep.subr.mxu0 0.0
      %2512 = vmatpush1.msra.mxu0 0.0
      %2513 = vmatprep.subr.mxu0 0.0
      %2514 = vmatpush1.msra.mxu0 0.0
      %2515 = vmatprep.subr.mxu0 0.0
      %2516 = vmatpush1.msra.mxu0 0.0
      %2517 = vmatprep.subr.mxu0 0.0
      %2518 = vmatpush1.msra.mxu0 0.0
      %2519 = vmatprep.subr.mxu0 0.0
      %2520 = vmatpush1.msra.mxu0 %v1727
      %2521 = vmatprep.subr.mxu0 0.0
      %2522 = vmatpush1.msra.mxu0 %v1726
      %2523 = vmatprep.subr.mxu0 0.0
      %2524 = vmatpush1.msra.mxu0 %v1725
      %2525 = vmatprep.subr.mxu0 0.0
      %2526 = vmatpush1.msra.mxu0 %v1724
      %2527 = vmatprep.subr.mxu0 0.0
      %2528 = vmatpush2.msra.mxu0 0.0
      %2529 = vmatprep.subr.mxu0 0.0
      %2530 = vmatpush2.msra.mxu0 0.0
      %2531 = vmatprep.subr.mxu0 0.0
      %2532 = vmatpush2.msra.mxu0 0.0
      %2533 = vmatprep.subr.mxu0 0.0
      %2534 = vmatpush2.msra.mxu0 0.0
      %2535 = vmatprep.subr.mxu0 0.0
      %2536 = vmatpush2.msra.mxu0 0.0
      %2537 = vmatprep.subr.mxu0 0.0
      %2538 = vmatpush2.msra.mxu0 0.0
      %2539 = vmatprep.subr.mxu0 0.0
      %2540 = vmatpush2.msra.mxu0 0.0
      %2541 = vmatprep.subr.mxu0 0.0
      %2542 = vmatpush2.msra.mxu0 0.0
      %2543 = vmatprep.subr.mxu0 0.0
      %2544 = vmatpush2.msra.mxu0 0.0
      %2545 = vmatprep.subr.mxu0 0.0
      %2546 = vmatpush2.msra.mxu0 0.0
      %2547 = vmatprep.subr.mxu0 0.0
      %2548 = vmatpush2.msra.mxu0 0.0
      %2549 = vmatprep.subr.mxu0 0.0
      %2550 = vmatpush2.msra.mxu0 0.0
      %2551 = vmatprep.subr.mxu0 0.0
      %2552 = vmatpush2.msra.mxu0 0.0
      %2553 = vmatprep.subr.mxu0 0.0
      %2554 = vmatpush2.msra.mxu0 0.0
      %2555 = vmatprep.subr.mxu0 0.0
      %2556 = vmatpush2.msra.mxu0 0.0
      %2557 = vmatprep.subr.mxu0 0.0
      %2558 = vmatpush2.msra.mxu0 0.0
      %2559 = vmatprep.mubr.f32.mxu0 0.0
      %2560 = vmatmul.mubr.f32.gmra.mxu0 %v2460
      %v2561 = vpop.f32.mrf.mxu0
      %v2562 = vadd.f32 %v2457, %v2561
      %v2563 = vpop.f32.mrf.mxu0
      %2564 = vmatprep.mubr.f32.mxu0 0.0
      %2565 = vmatmul.mubr.f32.gmra.mxu0 %v2463
      %v2566 = vpop.f32.mrf.mxu0
      %v2567 = vadd.f32 %v2457, %v2566
      %v2568 = vpop.f32.mrf.mxu0
      %2569 = vmatprep.mubr.f32.mxu0 0.0
      %2570 = vmatmul.mubr.f32.gmra.mxu0 %v2466
      %v2571 = vpop.f32.mrf.mxu0
      %v2572 = vadd.f32 %v2457, %v2571
      %v2573 = vpop.f32.mrf.mxu0
      %2574 = vmatprep.mubr.f32.mxu0 0.0
      %2575 = vmatmul.mubr.f32.gmra.mxu0 %v2469
      %v2576 = vpop.f32.mrf.mxu0
      %v2577 = vadd.f32 %v2457, %v2576
      %v2578 = vpop.f32.mrf.mxu0
      %2579 = vmatprep.mubr.f32.mxu0 0.0
      %2580 = vmatmul.mubr.f32.gmra.mxu0 %v2472
      %v2581 = vpop.f32.mrf.mxu0
      %v2582 = vadd.f32 %v2457, %v2581
      %v2583 = vpop.f32.mrf.mxu0
      %2584 = vmatprep.mubr.f32.mxu0 0.0
      %2585 = vmatmul.mubr.f32.gmra.mxu0 %v2475
      %v2586 = vpop.f32.mrf.mxu0
      %v2587 = vadd.f32 %v2457, %v2586
      %v2588 = vpop.f32.mrf.mxu0
      %2589 = vmatprep.mubr.f32.mxu0 0.0
      %2590 = vmatmul.mubr.f32.gmra.mxu0 %v2478
      %v2591 = vpop.f32.mrf.mxu0
      %v2592 = vadd.f32 %v2457, %v2591
      %v2593 = vpop.f32.mrf.mxu0
      %2594 = vmatprep.mubr.f32.mxu0 0.0
      %2595 = vmatmul.mubr.f32.gmra.mxu0 %v2481
      %v2596 = vpop.f32.mrf.mxu0
      %v2597 = vadd.f32 %v2457, %v2596
      %v2598 = vpop.f32.mrf.mxu0
      %2599 = vmatprep.mubr.f32.mxu0 0.0
      %2600 = vmatmul.mubr.f32.gmra.mxu0 %v2484
      %v2601 = vpop.f32.mrf.mxu0
      %v2602 = vadd.f32 %v2457, %v2601
      %v2603 = vpop.f32.mrf.mxu0
      %2604 = vmatprep.mubr.f32.mxu0 0.0
      %2605 = vmatmul.mubr.f32.gmra.mxu0 %v2487
      %v2606 = vpop.f32.mrf.mxu0
      %v2607 = vadd.f32 %v2457, %v2606
      %v2608 = vpop.f32.mrf.mxu0
      %2609 = vmatprep.mubr.f32.mxu0 0.0
      %2610 = vmatmul.mubr.f32.gmra.mxu0 %v2490
      %v2611 = vpop.f32.mrf.mxu0
      %v2612 = vadd.f32 %v2457, %v2611
      %v2613 = vpop.f32.mrf.mxu0
      %2614 = vmatprep.mubr.f32.mxu0 0.0
      %2615 = vmatmul.mubr.f32.gmra.mxu0 %v2493
      %v2616 = vpop.f32.mrf.mxu0
      %v2617 = vadd.f32 %v2457, %v2616
      %v2618 = vpop.f32.mrf.mxu0
      %2619 = vdwg.mxu0
      %v2620 = vtanh.pop %v2562
      %v2621 = vtanh.pop %v2567
      %v2622 = vtanh.pop %v2572
      %v2623 = vtanh.pop %v2577
      %v2624 = vtanh.pop %v2582
      %v2625 = vtanh.pop %v2587
      %v2626 = vtanh.pop %v2592
      %v2627 = vtanh.pop %v2597
      %v2628 = vtanh.pop %v2602
      %v2629 = vtanh.pop %v2607
      %v2630 = vtanh.pop %v2612
      %v2631 = vtanh.pop %v2617
      %v2644 = vcombine.high %v2620, %v2620
      %v2645 = vcombine.high %v2621, %v2621
      %v2646 = vcombine.high %v2622, %v2622
      %v2647 = vcombine.high %v2623, %v2623
      %v2648 = vcombine.high %v2624, %v2624
      %v2649 = vcombine.high %v2625, %v2625
      %v2650 = vcombine.high %v2626, %v2626
      %v2651 = vcombine.high %v2627, %v2627
      %v2652 = vcombine.high %v2628, %v2628
      %v2653 = vcombine.high %v2629, %v2629
      %v2654 = vcombine.high %v2630, %v2630
      %v2655 = vcombine.high %v2631, %v2631
      %v2669 = vlaneseq
      %v2670 = vshrl.u32 %v2669, 7
      %v2671 = vsub.s32 0, %v2670
      %v2672 = vrot.slane %v1729, %v2671
      %v2674 = vcombine.high %v2672, %v2672
      %v2676 = vmul.f32 %v2620, %v2672
      %v2677 = vmul.f32 %v2644, %v2674
      %v2678 = vmul.f32 %v2621, %v2672
      %v2679 = vmul.f32 %v2645, %v2672
      %v2680 = vmul.f32 %v2622, %v2674
      %v2681 = vmul.f32 %v2646, %v2672
      %v2682 = vmul.f32 %v2623, %v2672
      %v2683 = vmul.f32 %v2647, %v2674
      %v2684 = vmul.f32 %v2624, %v2672
      %v2685 = vmul.f32 %v2648, %v2672
      %v2686 = vmul.f32 %v2625, %v2674
      %v2687 = vmul.f32 %v2649, %v2672
      %v2688 = vmul.f32 %v2626, %v2672
      %v2689 = vmul.f32 %v2650, %v2674
      %v2690 = vmul.f32 %v2627, %v2672
      %v2691 = vmul.f32 %v2651, %v2672
      %v2692 = vmul.f32 %v2628, %v2674
      %v2693 = vmul.f32 %v2652, %v2672
      %v2694 = vmul.f32 %v2629, %v2672
      %v2695 = vmul.f32 %v2653, %v2674
      %v2696 = vmul.f32 %v2630, %v2672
      %v2697 = vmul.f32 %v2654, %v2672
      %v2698 = vmul.f32 %v2631, %v2674
      %v2699 = vmul.f32 %v2655, %v2672
      %v2716 = vcombine.low %v2676, %v2677
      %v2717 = vcombine.low %v2679, %v2680
      %v2718 = vcombine.low %v2682, %v2683
      %v2719 = vcombine.low %v2685, %v2686
      %v2720 = vcombine.low %v2688, %v2689
      %v2721 = vcombine.low %v2691, %v2692
      %v2722 = vcombine.low %v2694, %v2695
      %v2723 = vcombine.low %v2697, %v2698
      %v2732 = vsel %vm645, %v2716, 0.0
      %2733 = vadd.xlane.f32.xlu0 %v2732
      %v2734 = vpop.xlane.xlu0 %2733
      %vm2735 = vcmask 125952
      %v2736 = vsel %vm2735, %v2678, 0.0
      %2737 = vadd.xlane.f32.xlu0 %v2736
      %v2738 = vpop.xlane.xlu0 %2737
      %v2739 = vsel %vm645, %v2717, 0.0
      %2740 = vadd.xlane.f32.xlu0 %v2739
      %v2741 = vpop.xlane.xlu0 %2740
      %v2742 = vsel %vm2735, %v2681, 0.0
      %2743 = vadd.xlane.f32.xlu0 %v2742
      %v2744 = vpop.xlane.xlu0 %2743
      %v2745 = vsel %vm645, %v2718, 0.0
      %2746 = vadd.xlane.f32.xlu0 %v2745
      %v2747 = vpop.xlane.xlu0 %2746
      %v2748 = vsel %vm2735, %v2684, 0.0
      %2749 = vadd.xlane.f32.xlu0 %v2748
      %v2750 = vpop.xlane.xlu0 %2749
      %v2751 = vsel %vm645, %v2719, 0.0
      %2752 = vadd.xlane.f32.xlu0 %v2751
      %v2753 = vpop.xlane.xlu0 %2752
      %v2754 = vsel %vm2735, %v2687, 0.0
      %2755 = vadd.xlane.f32.xlu0 %v2754
      %v2756 = vpop.xlane.xlu0 %2755
      %v2757 = vsel %vm645, %v2720, 0.0
      %2758 = vadd.xlane.f32.xlu0 %v2757
      %v2759 = vpop.xlane.xlu0 %2758
      %v2760 = vsel %vm2735, %v2690, 0.0
      %2761 = vadd.xlane.f32.xlu0 %v2760
      %v2762 = vpop.xlane.xlu0 %2761
      %v2763 = vsel %vm645, %v2721, 0.0
      %2764 = vadd.xlane.f32.xlu0 %v2763
      %v2765 = vpop.xlane.xlu0 %2764
      %v2766 = vsel %vm2735, %v2693, 0.0
      %2767 = vadd.xlane.f32.xlu0 %v2766
      %v2768 = vpop.xlane.xlu0 %2767
      %v2769 = vsel %vm645, %v2722, 0.0
      %2770 = vadd.xlane.f32.xlu0 %v2769
      %v2771 = vpop.xlane.xlu0 %2770
      %v2772 = vsel %vm2735, %v2696, 0.0
      %2773 = vadd.xlane.f32.xlu0 %v2772
      %v2774 = vpop.xlane.xlu0 %2773
      %v2775 = vsel %vm645, %v2723, 0.0
      %2776 = vadd.xlane.f32.xlu0 %v2775
      %v2777 = vpop.xlane.xlu0 %2776
      %v2778 = vsel %vm2735, %v2699, 0.0
      %2779 = vadd.xlane.f32.xlu0 %v2778
      %v2780 = vpop.xlane.xlu0 %2779
      %v2781 = vsub.f32 1.0, %v1716
      %v2782 = vmul.f32 %v2781, -1e+09
      %v2784 = vlaneseq
      %v2785 = vshrl.u32 %v2784, 7
      %v2786 = vsub.s32 0, %v2785
      %v2787 = vrot.slane %v2782, %v2786
      %2789 = vbcast.lane.b32.xlu0 %v2787, 256
      %v2790 = vpop.permute.xlu0 %2789
      %s2792 = sor.u32 256, 8
      %2793 = vbcast.lane.b32.xlu0 %v2787, %s2792
      %v2794 = vpop.permute.xlu0 %2793
      %v2795 = vlaneseq
      %v2796 = vshrl.u32 %v2795, 7
      %v2797 = vsub.s32 1, %v2796
      %v2798 = vrot.slane %v2782, %v2797
      %2800 = vbcast.lane.b32.xlu0 %v2798, 256
      %v2801 = vpop.permute.xlu0 %2800
      %s2803 = sor.u32 256, 8
      %2804 = vbcast.lane.b32.xlu0 %v2798, %s2803
      %v2805 = vpop.permute.xlu0 %2804
      %v2806 = vlaneseq
      %v2807 = vshrl.u32 %v2806, 7
      %v2808 = vsub.s32 2, %v2807
      %v2809 = vrot.slane %v2782, %v2808
      %2811 = vbcast.lane.b32.xlu0 %v2809, 256
      %v2812 = vpop.permute.xlu0 %2811
      %s2814 = sor.u32 256, 8
      %2815 = vbcast.lane.b32.xlu0 %v2809, %s2814
      %v2816 = vpop.permute.xlu0 %2815
      %v2817 = vlaneseq
      %v2818 = vshrl.u32 %v2817, 7
      %v2819 = vsub.s32 3, %v2818
      %v2820 = vrot.slane %v2782, %v2819
      %2822 = vbcast.lane.b32.xlu0 %v2820, 256
      %v2823 = vpop.permute.xlu0 %2822
      %s2825 = sor.u32 256, 8
      %2826 = vbcast.lane.b32.xlu0 %v2820, %s2825
      %v2827 = vpop.permute.xlu0 %2826
      %v2828 = vlaneseq
      %v2829 = vshrl.u32 %v2828, 7
      %v2830 = vsub.s32 4, %v2829
      %v2831 = vrot.slane %v2782, %v2830
      %2833 = vbcast.lane.b32.xlu0 %v2831, 256
      %v2834 = vpop.permute.xlu0 %2833
      %s2836 = sor.u32 256, 8
      %2837 = vbcast.lane.b32.xlu0 %v2831, %s2836
      %v2838 = vpop.permute.xlu0 %2837
      %v2839 = vlaneseq
      %v2840 = vshrl.u32 %v2839, 7
      %v2841 = vsub.s32 5, %v2840
      %v2842 = vrot.slane %v2782, %v2841
      %2844 = vbcast.lane.b32.xlu0 %v2842, 256
      %v2845 = vpop.permute.xlu0 %2844
      %s2847 = sor.u32 256, 8
      %2848 = vbcast.lane.b32.xlu0 %v2842, %s2847
      %v2849 = vpop.permute.xlu0 %2848
      %v2850 = vlaneseq
      %v2851 = vshrl.u32 %v2850, 7
      %v2852 = vsub.s32 6, %v2851
      %v2853 = vrot.slane %v2782, %v2852
      %2855 = vbcast.lane.b32.xlu0 %v2853, 256
      %v2856 = vpop.permute.xlu0 %2855
      %s2858 = sor.u32 256, 8
      %2859 = vbcast.lane.b32.xlu0 %v2853, %s2858
      %v2860 = vpop.permute.xlu0 %2859
      %v2861 = vlaneseq
      %v2862 = vshrl.u32 %v2861, 7
      %v2863 = vsub.s32 7, %v2862
      %v2864 = vrot.slane %v2782, %v2863
      %2866 = vbcast.lane.b32.xlu0 %v2864, 256
      %v2867 = vpop.permute.xlu0 %2866
      %s2869 = sor.u32 256, 8
      %2870 = vbcast.lane.b32.xlu0 %v2864, %s2869
      %v2871 = vpop.permute.xlu0 %2870
      %v2888 = vadd.f32 %v2734, %v2790
      %v2889 = vadd.f32 %v2738, %v2794
      %v2890 = vadd.f32 %v2741, %v2801
      %v2891 = vadd.f32 %v2744, %v2805
      %v2892 = vadd.f32 %v2747, %v2812
      %v2893 = vadd.f32 %v2750, %v2816
      %v2894 = vadd.f32 %v2753, %v2823
      %v2895 = vadd.f32 %v2756, %v2827
      %v2896 = vadd.f32 %v2759, %v2834
      %v2897 = vadd.f32 %v2762, %v2838
      %v2898 = vadd.f32 %v2765, %v2845
      %v2899 = vadd.f32 %v2768, %v2849
      %v2900 = vadd.f32 %v2771, %v2856
      %v2901 = vadd.f32 %v2774, %v2860
      %v2902 = vadd.f32 %v2777, %v2867
      %v2903 = vadd.f32 %v2780, %v2871
      %2920 = vset.pattern.permute.xlu0 0
      %2921 = vperm.xlu0 %2920, %v2888
      %v2922 = vpop.permute.xlu0 %2921
      %2923 = vset.pattern.permute.xlu0 0
      %2924 = vperm.xlu0 %2923, %v2889
      %v2925 = vpop.permute.xlu0 %2924
      %2926 = vset.pattern.permute.xlu0 0
      %2927 = vperm.xlu0 %2926, %v2890
      %v2928 = vpop.permute.xlu0 %2927
      %2929 = vset.pattern.permute.xlu0 0
      %2930 = vperm.xlu0 %2929, %v2891
      %v2931 = vpop.permute.xlu0 %2930
      %2932 = vset.pattern.permute.xlu0 0
      %2933 = vperm.xlu0 %2932, %v2892
      %v2934 = vpop.permute.xlu0 %2933
      %2935 = vset.pattern.permute.xlu0 0
      %2936 = vperm.xlu0 %2935, %v2893
      %v2937 = vpop.permute.xlu0 %2936
      %2938 = vset.pattern.permute.xlu0 0
      %2939 = vperm.xlu0 %2938, %v2894
      %v2940 = vpop.permute.xlu0 %2939
      %2941 = vset.pattern.permute.xlu0 0
      %2942 = vperm.xlu0 %2941, %v2895
      %v2943 = vpop.permute.xlu0 %2942
      %2944 = vset.pattern.permute.xlu0 0
      %2945 = vperm.xlu0 %2944, %v2896
      %v2946 = vpop.permute.xlu0 %2945
      %2947 = vset.pattern.permute.xlu0 0
      %2948 = vperm.xlu0 %2947, %v2897
      %v2949 = vpop.permute.xlu0 %2948
      %2950 = vset.pattern.permute.xlu0 0
      %2951 = vperm.xlu0 %2950, %v2898
      %v2952 = vpop.permute.xlu0 %2951
      %2953 = vset.pattern.permute.xlu0 0
      %2954 = vperm.xlu0 %2953, %v2899
      %v2955 = vpop.permute.xlu0 %2954
      %2956 = vset.pattern.permute.xlu0 0
      %2957 = vperm.xlu0 %2956, %v2900
      %v2958 = vpop.permute.xlu0 %2957
      %2959 = vset.pattern.permute.xlu0 0
      %2960 = vperm.xlu0 %2959, %v2901
      %v2961 = vpop.permute.xlu0 %2960
      %2962 = vset.pattern.permute.xlu0 0
      %2963 = vperm.xlu0 %2962, %v2902
      %v2964 = vpop.permute.xlu0 %2963
      %2965 = vset.pattern.permute.xlu0 0
      %2966 = vperm.xlu0 %2965, %v2903
      %v2967 = vpop.permute.xlu0 %2966
      %v2968 = vlaneseq
      %v2969 = vshrl.u32 %v2968, 7
      %v2970 = vsub.s32 %v1354, %v2969
      %v2971 = vrot.slane %v2922, %v2970
      %v2972 = vadd.s32 %v1354, 4294967288
      %v2973 = vlaneseq
      %v2974 = vshrl.u32 %v2973, 7
      %v2975 = vsub.s32 %v2972, %v2974
      %v2976 = vrot.slane %v2925, %v2975
      %vm2977 = vcmask 130112
      %v2978 = vsel %vm2977, %v2976, %v2971
      %v2979 = vlaneseq
      %v2980 = vshrl.u32 %v2979, 7
      %v2981 = vsub.s32 %v1354, %v2980
      %v2982 = vrot.slane %v2928, %v2981
      %v2983 = vlaneseq
      %v2984 = vshrl.u32 %v2983, 7
      %v2985 = vsub.s32 %v2972, %v2984
      %v2986 = vrot.slane %v2931, %v2985
      %v2987 = vsel %vm2977, %v2986, %v2982
      %v2988 = vlaneseq
      %v2989 = vshrl.u32 %v2988, 7
      %v2990 = vsub.s32 %v1354, %v2989
      %v2991 = vrot.slane %v2934, %v2990
      %v2992 = vlaneseq
      %v2993 = vshrl.u32 %v2992, 7
      %v2994 = vsub.s32 %v2972, %v2993
      %v2995 = vrot.slane %v2937, %v2994
      %v2996 = vsel %vm2977, %v2995, %v2991
      %v2997 = vlaneseq
      %v2998 = vshrl.u32 %v2997, 7
      %v2999 = vsub.s32 %v1354, %v2998
      %v3000 = vrot.slane %v2940, %v2999
      %v3001 = vlaneseq
      %v3002 = vshrl.u32 %v3001, 7
      %v3003 = vsub.s32 %v2972, %v3002
      %v3004 = vrot.slane %v2943, %v3003
      %v3005 = vsel %vm2977, %v3004, %v3000
      %v3006 = vlaneseq
      %v3007 = vshrl.u32 %v3006, 7
      %v3008 = vsub.s32 %v1354, %v3007
      %v3009 = vrot.slane %v2946, %v3008
      %v3010 = vlaneseq
      %v3011 = vshrl.u32 %v3010, 7
      %v3012 = vsub.s32 %v2972, %v3011
      %v3013 = vrot.slane %v2949, %v3012
      %v3014 = vsel %vm2977, %v3013, %v3009
      %v3015 = vlaneseq
      %v3016 = vshrl.u32 %v3015, 7
      %v3017 = vsub.s32 %v1354, %v3016
      %v3018 = vrot.slane %v2952, %v3017
      %v3019 = vlaneseq
      %v3020 = vshrl.u32 %v3019, 7
      %v3021 = vsub.s32 %v2972, %v3020
      %v3022 = vrot.slane %v2955, %v3021
      %v3023 = vsel %vm2977, %v3022, %v3018
      %v3024 = vlaneseq
      %v3025 = vshrl.u32 %v3024, 7
      %v3026 = vsub.s32 %v1354, %v3025
      %v3027 = vrot.slane %v2958, %v3026
      %v3028 = vlaneseq
      %v3029 = vshrl.u32 %v3028, 7
      %v3030 = vsub.s32 %v2972, %v3029
      %v3031 = vrot.slane %v2961, %v3030
      %v3032 = vsel %vm2977, %v3031, %v3027
      %v3033 = vlaneseq
      %v3034 = vshrl.u32 %v3033, 7
      %v3035 = vsub.s32 %v1354, %v3034
      %v3036 = vrot.slane %v2964, %v3035
      %v3037 = vlaneseq
      %v3038 = vshrl.u32 %v3037, 7
      %v3039 = vsub.s32 %v2972, %v3038
      %v3040 = vrot.slane %v2967, %v3039
      %v3041 = vsel %vm2977, %v3040, %v3036
      %v3042 = vsel %vm1387, %v2987, %v2978
      %v3043 = vsel %vm1389, %v2996, %v3042
      %v3044 = vsel %vm1391, %v3005, %v3043
      %v3045 = vsel %vm1393, %v3014, %v3044
      %v3046 = vsel %vm1395, %v3023, %v3045
      %v3047 = vsel %vm1397, %v3032, %v3046
      %v3048 = vsel %vm1399, %v3041, %v3047
      %vm3050 = vcmask 97280
      %v3051 = vsel %vm3050, %v3048, -inf
      %3052 = vmax.xlane.f32.xlu0 %v3051
      %v3053 = vpop.xlane.xlu0 %3052
      %v3055 = vlaneseq
      %v3056 = vshrl.u32 %v3055, 7
      %v3057 = vsub.s32 0, %v3056
      %v3058 = vrot.slane %v3053, %v3057
      %v3059 = vlaneseq
      %v3060 = vshrl.u32 %v3059, 7
      %v3061 = vsub.s32 1, %v3060
      %v3062 = vrot.slane %v3053, %v3061
      %v3063 = vlaneseq
      %v3064 = vshrl.u32 %v3063, 7
      %v3065 = vsub.s32 2, %v3064
      %v3066 = vrot.slane %v3053, %v3065
      %v3067 = vlaneseq
      %v3068 = vshrl.u32 %v3067, 7
      %v3069 = vsub.s32 3, %v3068
      %v3070 = vrot.slane %v3053, %v3069
      %v3071 = vlaneseq
      %v3072 = vshrl.u32 %v3071, 7
      %v3073 = vsub.s32 4, %v3072
      %v3074 = vrot.slane %v3053, %v3073
      %v3075 = vlaneseq
      %v3076 = vshrl.u32 %v3075, 7
      %v3077 = vsub.s32 5, %v3076
      %v3078 = vrot.slane %v3053, %v3077
      %v3079 = vlaneseq
      %v3080 = vshrl.u32 %v3079, 7
      %v3081 = vsub.s32 6, %v3080
      %v3082 = vrot.slane %v3053, %v3081
      %v3083 = vlaneseq
      %v3084 = vshrl.u32 %v3083, 7
      %v3085 = vsub.s32 7, %v3084
      %v3086 = vrot.slane %v3053, %v3085
      %v3095 = vsub.f32 %v2888, %v3058
      %v3096 = vsub.f32 %v2889, %v3058
      %v3097 = vsub.f32 %v2890, %v3062
      %v3098 = vsub.f32 %v2891, %v3062
      %v3099 = vsub.f32 %v2892, %v3066
      %v3100 = vsub.f32 %v2893, %v3066
      %v3101 = vsub.f32 %v2894, %v3070
      %v3102 = vsub.f32 %v2895, %v3070
      %v3103 = vsub.f32 %v2896, %v3074
      %v3104 = vsub.f32 %v2897, %v3074
      %v3105 = vsub.f32 %v2898, %v3078
      %v3106 = vsub.f32 %v2899, %v3078
      %v3107 = vsub.f32 %v2900, %v3082
      %v3108 = vsub.f32 %v2901, %v3082
      %v3109 = vsub.f32 %v2902, %v3086
      %v3110 = vsub.f32 %v2903, %v3086
      %v3111 = vmul.f32 %v3095, 1.442695
      %v3112 = vpow.pop %v3111
      %v3113 = vmul.f32 %v3096, 1.442695
      %v3114 = vpow.pop %v3113
      %v3115 = vmul.f32 %v3097, 1.442695
      %v3116 = vpow.pop %v3115
      %v3117 = vmul.f32 %v3098, 1.442695
      %v3118 = vpow.pop %v3117
      %v3119 = vmul.f32 %v3099, 1.442695
      %v3120 = vpow.pop %v3119
      %v3121 = vmul.f32 %v3100, 1.442695
      %v3122 = vpow.pop %v3121
      %v3123 = vmul.f32 %v3101, 1.442695
      %v3124 = vpow.pop %v3123
      %v3125 = vmul.f32 %v3102, 1.442695
      %v3126 = vpow.pop %v3125
      %v3127 = vmul.f32 %v3103, 1.442695
      %v3128 = vpow.pop %v3127
      %v3129 = vmul.f32 %v3104, 1.442695
      %v3130 = vpow.pop %v3129
      %v3131 = vmul.f32 %v3105, 1.442695
      %v3132 = vpow.pop %v3131
      %v3133 = vmul.f32 %v3106, 1.442695
      %v3134 = vpow.pop %v3133
      %v3135 = vmul.f32 %v3107, 1.442695
      %v3136 = vpow.pop %v3135
      %v3137 = vmul.f32 %v3108, 1.442695
      %v3138 = vpow.pop %v3137
      %v3139 = vmul.f32 %v3109, 1.442695
      %v3140 = vpow.pop %v3139
      %v3141 = vmul.f32 %v3110, 1.442695
      %v3142 = vpow.pop %v3141
      %3159 = vset.pattern.permute.xlu0 0
      %3160 = vperm.xlu0 %3159, %v3112
      %v3161 = vpop.permute.xlu0 %3160
      %3162 = vset.pattern.permute.xlu0 0
      %3163 = vperm.xlu0 %3162, %v3114
      %v3164 = vpop.permute.xlu0 %3163
      %3165 = vset.pattern.permute.xlu0 0
      %3166 = vperm.xlu0 %3165, %v3116
      %v3167 = vpop.permute.xlu0 %3166
      %3168 = vset.pattern.permute.xlu0 0
      %3169 = vperm.xlu0 %3168, %v3118
      %v3170 = vpop.permute.xlu0 %3169
      %3171 = vset.pattern.permute.xlu0 0
      %3172 = vperm.xlu0 %3171, %v3120
      %v3173 = vpop.permute.xlu0 %3172
      %3174 = vset.pattern.permute.xlu0 0
      %3175 = vperm.xlu0 %3174, %v3122
      %v3176 = vpop.permute.xlu0 %3175
      %3177 = vset.pattern.permute.xlu0 0
      %3178 = vperm.xlu0 %3177, %v3124
      %v3179 = vpop.permute.xlu0 %3178
      %3180 = vset.pattern.permute.xlu0 0
      %3181 = vperm.xlu0 %3180, %v3126
      %v3182 = vpop.permute.xlu0 %3181
      %3183 = vset.pattern.permute.xlu0 0
      %3184 = vperm.xlu0 %3183, %v3128
      %v3185 = vpop.permute.xlu0 %3184
      %3186 = vset.pattern.permute.xlu0 0
      %3187 = vperm.xlu0 %3186, %v3130
      %v3188 = vpop.permute.xlu0 %3187
      %3189 = vset.pattern.permute.xlu0 0
      %3190 = vperm.xlu0 %3189, %v3132
      %v3191 = vpop.permute.xlu0 %3190
      %3192 = vset.pattern.permute.xlu0 0
      %3193 = vperm.xlu0 %3192, %v3134
      %v3194 = vpop.permute.xlu0 %3193
      %3195 = vset.pattern.permute.xlu0 0
      %3196 = vperm.xlu0 %3195, %v3136
      %v3197 = vpop.permute.xlu0 %3196
      %3198 = vset.pattern.permute.xlu0 0
      %3199 = vperm.xlu0 %3198, %v3138
      %v3200 = vpop.permute.xlu0 %3199
      %3201 = vset.pattern.permute.xlu0 0
      %3202 = vperm.xlu0 %3201, %v3140
      %v3203 = vpop.permute.xlu0 %3202
      %3204 = vset.pattern.permute.xlu0 0
      %3205 = vperm.xlu0 %3204, %v3142
      %v3206 = vpop.permute.xlu0 %3205
      %v3207 = vlaneseq
      %v3208 = vshrl.u32 %v3207, 7
      %v3209 = vsub.s32 %v1354, %v3208
      %v3210 = vrot.slane %v3161, %v3209
      %v3211 = vlaneseq
      %v3212 = vshrl.u32 %v3211, 7
      %v3213 = vsub.s32 %v2972, %v3212
      %v3214 = vrot.slane %v3164, %v3213
      %v3215 = vsel %vm2977, %v3214, %v3210
      %v3216 = vlaneseq
      %v3217 = vshrl.u32 %v3216, 7
      %v3218 = vsub.s32 %v1354, %v3217
      %v3219 = vrot.slane %v3167, %v3218
      %v3220 = vlaneseq
      %v3221 = vshrl.u32 %v3220, 7
      %v3222 = vsub.s32 %v2972, %v3221
      %v3223 = vrot.slane %v3170, %v3222
      %v3224 = vsel %vm2977, %v3223, %v3219
      %v3225 = vlaneseq
      %v3226 = vshrl.u32 %v3225, 7
      %v3227 = vsub.s32 %v1354, %v3226
      %v3228 = vrot.slane %v3173, %v3227
      %v3229 = vlaneseq
      %v3230 = vshrl.u32 %v3229, 7
      %v3231 = vsub.s32 %v2972, %v3230
      %v3232 = vrot.slane %v3176, %v3231
      %v3233 = vsel %vm2977, %v3232, %v3228
      %v3234 = vlaneseq
      %v3235 = vshrl.u32 %v3234, 7
      %v3236 = vsub.s32 %v1354, %v3235
      %v3237 = vrot.slane %v3179, %v3236
      %v3238 = vlaneseq
      %v3239 = vshrl.u32 %v3238, 7
      %v3240 = vsub.s32 %v2972, %v3239
      %v3241 = vrot.slane %v3182, %v3240
      %v3242 = vsel %vm2977, %v3241, %v3237
      %v3243 = vlaneseq
      %v3244 = vshrl.u32 %v3243, 7
      %v3245 = vsub.s32 %v1354, %v3244
      %v3246 = vrot.slane %v3185, %v3245
      %v3247 = vlaneseq
      %v3248 = vshrl.u32 %v3247, 7
      %v3249 = vsub.s32 %v2972, %v3248
      %v3250 = vrot.slane %v3188, %v3249
      %v3251 = vsel %vm2977, %v3250, %v3246
      %v3252 = vlaneseq
      %v3253 = vshrl.u32 %v3252, 7
      %v3254 = vsub.s32 %v1354, %v3253
      %v3255 = vrot.slane %v3191, %v3254
      %v3256 = vlaneseq
      %v3257 = vshrl.u32 %v3256, 7
      %v3258 = vsub.s32 %v2972, %v3257
      %v3259 = vrot.slane %v3194, %v3258
      %v3260 = vsel %vm2977, %v3259, %v3255
      %v3261 = vlaneseq
      %v3262 = vshrl.u32 %v3261, 7
      %v3263 = vsub.s32 %v1354, %v3262
      %v3264 = vrot.slane %v3197, %v3263
      %v3265 = vlaneseq
      %v3266 = vshrl.u32 %v3265, 7
      %v3267 = vsub.s32 %v2972, %v3266
      %v3268 = vrot.slane %v3200, %v3267
      %v3269 = vsel %vm2977, %v3268, %v3264
      %v3270 = vlaneseq
      %v3271 = vshrl.u32 %v3270, 7
      %v3272 = vsub.s32 %v1354, %v3271
      %v3273 = vrot.slane %v3203, %v3272
      %v3274 = vlaneseq
      %v3275 = vshrl.u32 %v3274, 7
      %v3276 = vsub.s32 %v2972, %v3275
      %v3277 = vrot.slane %v3206, %v3276
      %v3278 = vsel %vm2977, %v3277, %v3273
      %v3279 = vsel %vm1387, %v3224, %v3215
      %v3280 = vsel %vm1389, %v3233, %v3279
      %v3281 = vsel %vm1391, %v3242, %v3280
      %v3282 = vsel %vm1393, %v3251, %v3281
      %v3283 = vsel %vm1395, %v3260, %v3282
      %v3284 = vsel %vm1397, %v3269, %v3283
      %v3285 = vsel %vm1399, %v3278, %v3284
      %v3287 = vsel %vm3050, %v3285, 0.0
      %3288 = vadd.xlane.f32.xlu0 %v3287
      %v3289 = vpop.xlane.xlu0 %3288
      %v3290 = vrcp.pop %v3289
      %v3292 = vlaneseq
      %v3293 = vshrl.u32 %v3292, 7
      %v3294 = vsub.s32 0, %v3293
      %v3295 = vrot.slane %v3290, %v3294
      %v3296 = vlaneseq
      %v3297 = vshrl.u32 %v3296, 7
      %v3298 = vsub.s32 1, %v3297
      %v3299 = vrot.slane %v3290, %v3298
      %v3300 = vlaneseq
      %v3301 = vshrl.u32 %v3300, 7
      %v3302 = vsub.s32 2, %v3301
      %v3303 = vrot.slane %v3290, %v3302
      %v3304 = vlaneseq
      %v3305 = vshrl.u32 %v3304, 7
      %v3306 = vsub.s32 3, %v3305
      %v3307 = vrot.slane %v3290, %v3306
      %v3308 = vlaneseq
      %v3309 = vshrl.u32 %v3308, 7
      %v3310 = vsub.s32 4, %v3309
      %v3311 = vrot.slane %v3290, %v3310
      %v3312 = vlaneseq
      %v3313 = vshrl.u32 %v3312, 7
      %v3314 = vsub.s32 5, %v3313
      %v3315 = vrot.slane %v3290, %v3314
      %v3316 = vlaneseq
      %v3317 = vshrl.u32 %v3316, 7
      %v3318 = vsub.s32 6, %v3317
      %v3319 = vrot.slane %v3290, %v3318
      %v3320 = vlaneseq
      %v3321 = vshrl.u32 %v3320, 7
      %v3322 = vsub.s32 7, %v3321
      %v3323 = vrot.slane %v3290, %v3322
      %v3332 = vmul.f32 %v3112, %v3295
      %v3333 = vmul.f32 %v3114, %v3295
      %v3334 = vmul.f32 %v3116, %v3299
      %v3335 = vmul.f32 %v3118, %v3299
      %v3336 = vmul.f32 %v3120, %v3303
      %v3337 = vmul.f32 %v3122, %v3303
      %v3338 = vmul.f32 %v3124, %v3307
      %v3339 = vmul.f32 %v3126, %v3307
      %v3340 = vmul.f32 %v3128, %v3311
      %v3341 = vmul.f32 %v3130, %v3311
      %v3342 = vmul.f32 %v3132, %v3315
      %v3343 = vmul.f32 %v3134, %v3315
      %v3344 = vmul.f32 %v3136, %v3319
      %v3345 = vmul.f32 %v3138, %v3319
      %v3346 = vmul.f32 %v3140, %v3323
      %v3347 = vmul.f32 %v3142, %v3323
      %v3348 = vcombine.high %v2441, %v2441
      %v3349 = vcombine.high %v2442, %v2442
      %v3350 = vcombine.high %v2443, %v2443
      %v3351 = vcombine.high %v2444, %v2444
      %v3352 = vcombine.high %v2445, %v2445
      %v3353 = vcombine.high %v2446, %v2446
      %v3354 = vcombine.high %v2447, %v2447
      %v3355 = vcombine.high %v2448, %v2448
      %v3356 = vcombine.high %v2449, %v2449
      %v3357 = vcombine.high %v2450, %v2450
      %v3358 = vcombine.high %v2451, %v2451
      %v3359 = vcombine.high %v2452, %v2452
      %3365 = vset.pattern.permute.xlu0 0
      %3366 = vperm.xlu0 %3365, %v3332
      %v3367 = vpop.permute.xlu0 %3366
      %3370 = vset.pattern.permute.xlu0 0
      %3371 = vperm.xlu0 %3370, %v3333
      %v3372 = vpop.permute.xlu0 %3371
      %3375 = vset.pattern.permute.xlu0 0
      %3376 = vperm.xlu0 %3375, %v3334
      %v3377 = vpop.permute.xlu0 %3376
      %3380 = vset.pattern.permute.xlu0 0
      %3381 = vperm.xlu0 %3380, %v3335
      %v3382 = vpop.permute.xlu0 %3381
      %3385 = vset.pattern.permute.xlu0 0
      %3386 = vperm.xlu0 %3385, %v3336
      %v3387 = vpop.permute.xlu0 %3386
      %3390 = vset.pattern.permute.xlu0 0
      %3391 = vperm.xlu0 %3390, %v3337
      %v3392 = vpop.permute.xlu0 %3391
      %3395 = vset.pattern.permute.xlu0 0
      %3396 = vperm.xlu0 %3395, %v3338
      %v3397 = vpop.permute.xlu0 %3396
      %3400 = vset.pattern.permute.xlu0 0
      %3401 = vperm.xlu0 %3400, %v3339
      %v3402 = vpop.permute.xlu0 %3401
      %3405 = vset.pattern.permute.xlu0 0
      %3406 = vperm.xlu0 %3405, %v3340
      %v3407 = vpop.permute.xlu0 %3406
      %3410 = vset.pattern.permute.xlu0 0
      %3411 = vperm.xlu0 %3410, %v3341
      %v3412 = vpop.permute.xlu0 %3411
      %3415 = vset.pattern.permute.xlu0 0
      %3416 = vperm.xlu0 %3415, %v3342
      %v3417 = vpop.permute.xlu0 %3416
      %3420 = vset.pattern.permute.xlu0 0
      %3421 = vperm.xlu0 %3420, %v3343
      %v3422 = vpop.permute.xlu0 %3421
      %3425 = vset.pattern.permute.xlu0 0
      %3426 = vperm.xlu0 %3425, %v3344
      %v3427 = vpop.permute.xlu0 %3426
      %3430 = vset.pattern.permute.xlu0 0
      %3431 = vperm.xlu0 %3430, %v3345
      %v3432 = vpop.permute.xlu0 %3431
      %3435 = vset.pattern.permute.xlu0 0
      %3436 = vperm.xlu0 %3435, %v3346
      %v3437 = vpop.permute.xlu0 %3436
      %3440 = vset.pattern.permute.xlu0 0
      %3441 = vperm.xlu0 %3440, %v3347
      %v3442 = vpop.permute.xlu0 %3441
      %v3444 = vcombine.low %v2441, %v3348
      %v3445 = vcombine.low %v3349, %v2443
      %v3446 = vcombine.low %v2444, %v3351
      %v3447 = vcombine.low %v3352, %v2446
      %v3448 = vcombine.low %v2447, %v3354
      %v3449 = vcombine.low %v3355, %v2449
      %v3450 = vcombine.low %v2450, %v3357
      %v3451 = vcombine.low %v3358, %v2452
      %v3460 = vmul.f32 %v3367, %v3444
      %v3461 = vmul.f32 %v3372, %v2442
      %v3462 = vmul.f32 %v3377, %v3445
      %v3463 = vmul.f32 %v3382, %v3350
      %v3464 = vmul.f32 %v3387, %v3446
      %v3465 = vmul.f32 %v3392, %v2445
      %v3466 = vmul.f32 %v3397, %v3447
      %v3467 = vmul.f32 %v3402, %v3353
      %v3468 = vmul.f32 %v3407, %v3448
      %v3469 = vmul.f32 %v3412, %v2448
      %v3470 = vmul.f32 %v3417, %v3449
      %v3471 = vmul.f32 %v3422, %v3356
      %v3472 = vmul.f32 %v3427, %v3450
      %v3473 = vmul.f32 %v3432, %v2451
      %v3474 = vmul.f32 %v3437, %v3451
      %v3475 = vmul.f32 %v3442, %v3359
      %v3476 = vsel %vm1070, %v3460, 0.0
      %vm3477 = vcmask 257024
      %v3478 = vsel %vm3477, %v3461, 0.0
      %v3479 = vadd.f32 %v3476, %v3478
      %v3480 = vrot.slane %v3479, 4
      %v3481 = vadd.f32 %v3479, %v3480
      %v3482 = vrot.slane %v3481, 2
      %v3483 = vadd.f32 %v3481, %v3482
      %v3484 = vrot.slane %v3483, 1
      %v3485 = vadd.f32 %v3483, %v3484
      %v3486 = vsel %vm1070, %v3462, 0.0
      %v3487 = vsel %vm3477, %v3463, 0.0
      %v3488 = vadd.f32 %v3486, %v3487
      %v3489 = vrot.slane %v3488, 4
      %v3490 = vadd.f32 %v3488, %v3489
      %v3491 = vrot.slane %v3490, 2
      %v3492 = vadd.f32 %v3490, %v3491
      %v3493 = vrot.slane %v3492, 1
      %v3494 = vadd.f32 %v3492, %v3493
      %v3495 = vsel %vm1070, %v3464, 0.0
      %v3496 = vsel %vm3477, %v3465, 0.0
      %v3497 = vadd.f32 %v3495, %v3496
      %v3498 = vrot.slane %v3497, 4
      %v3499 = vadd.f32 %v3497, %v3498
      %v3500 = vrot.slane %v3499, 2
      %v3501 = vadd.f32 %v3499, %v3500
      %v3502 = vrot.slane %v3501, 1
      %v3503 = vadd.f32 %v3501, %v3502
      %v3504 = vsel %vm1070, %v3466, 0.0
      %v3505 = vsel %vm3477, %v3467, 0.0
      %v3506 = vadd.f32 %v3504, %v3505
      %v3507 = vrot.slane %v3506, 4
      %v3508 = vadd.f32 %v3506, %v3507
      %v3509 = vrot.slane %v3508, 2
      %v3510 = vadd.f32 %v3508, %v3509
      %v3511 = vrot.slane %v3510, 1
      %v3512 = vadd.f32 %v3510, %v3511
      %v3513 = vsel %vm1070, %v3468, 0.0
      %v3514 = vsel %vm3477, %v3469, 0.0
      %v3515 = vadd.f32 %v3513, %v3514
      %v3516 = vrot.slane %v3515, 4
      %v3517 = vadd.f32 %v3515, %v3516
      %v3518 = vrot.slane %v3517, 2
      %v3519 = vadd.f32 %v3517, %v3518
      %v3520 = vrot.slane %v3519, 1
      %v3521 = vadd.f32 %v3519, %v3520
      %v3522 = vsel %vm1070, %v3470, 0.0
      %v3523 = vsel %vm3477, %v3471, 0.0
      %v3524 = vadd.f32 %v3522, %v3523
      %v3525 = vrot.slane %v3524, 4
      %v3526 = vadd.f32 %v3524, %v3525
      %v3527 = vrot.slane %v3526, 2
      %v3528 = vadd.f32 %v3526, %v3527
      %v3529 = vrot.slane %v3528, 1
      %v3530 = vadd.f32 %v3528, %v3529
      %v3531 = vsel %vm1070, %v3472, 0.0
      %v3532 = vsel %vm3477, %v3473, 0.0
      %v3533 = vadd.f32 %v3531, %v3532
      %v3534 = vrot.slane %v3533, 4
      %v3535 = vadd.f32 %v3533, %v3534
      %v3536 = vrot.slane %v3535, 2
      %v3537 = vadd.f32 %v3535, %v3536
      %v3538 = vrot.slane %v3537, 1
      %v3539 = vadd.f32 %v3537, %v3538
      %v3540 = vsel %vm1070, %v3474, 0.0
      %v3541 = vsel %vm3477, %v3475, 0.0
      %v3542 = vadd.f32 %v3540, %v3541
      %v3543 = vrot.slane %v3542, 4
      %v3544 = vadd.f32 %v3542, %v3543
      %v3545 = vrot.slane %v3544, 2
      %v3546 = vadd.f32 %v3544, %v3545
      %v3547 = vrot.slane %v3546, 1
      %v3548 = vadd.f32 %v3546, %v3547
      %v3549 = vld [vmem:[%s569] sm:$0xff]
      %v3558 = vsel %vm1387, %v1657, %v1650
      %v3559 = vsel %vm1389, %v1664, %v3558
      %v3560 = vsel %vm1391, %v1671, %v3559
      %v3561 = vsel %vm1393, %v1678, %v3560
      %v3562 = vsel %vm1395, %v1685, %v3561
      %v3563 = vsel %vm1397, %v1692, %v3562
      %v3564 = vsel %vm1399, %v1699, %v3563
      %v3574 = vsel %vm1387, %v3494, %v3485
      %v3575 = vsel %vm1389, %v3503, %v3574
      %v3576 = vsel %vm1391, %v3512, %v3575
      %v3577 = vsel %vm1393, %v3521, %v3576
      %v3578 = vsel %vm1395, %v3530, %v3577
      %v3579 = vsel %vm1397, %v3539, %v3578
      %v3580 = vsel %vm1399, %v3548, %v3579
      %3581 = vrot.lane.b32.xlu0 %v3580, 32
      %v3582 = vpop.permute.xlu0 %3581
      %3585 = vrot.lane.b32.xlu0 %v3549, 64
      %v3586 = vpop.permute.xlu0 %3585
      %v3588 = vsel %vm1070, %v3564, %v3582
      %vm3589 = vcmask 523264
      %v3590 = vsel %vm3589, %v3588, %v3586
      %vm3591 = vcmask 588800
      %v3592 = vsel %vm3591, %v3590, 0.0
      %3593 = vst [vmem:[%s573] sm:$0xff] %v3592
      %p3594 = scmp.lt.s32.totalorder %s26, 1
      %s3595 = scalar_select %p3594, %s26, 1
      %s3596 = smul.addr %s3595, 8
      %s3597 = scalar_lea.vmem %s15, %s3596
      // Predicated region
      $region81: #{lstur_forward.2} parent=79 // pred_check
        %p3598 = pneg %p384
      $region82: #{lstur_forward.2} parent=79 // pred_check_branch
        %3600 = sbr.rel (%p3598) target = $region84
      $region83: #{lstur_forward.2} parent=79 // pred_region
        _
      $region84: #{lstur_forward.2} parent=79 // pred_fallthru
        _
    $region80: #{lstur_forward.2} parent=5 // pred_fallthru
      _
    %p3601 = scmp.le.s32.totalorder 2, %s21
    // Predicated region
    $region85: #{lstur_forward.2} parent=5 // pred_check
      %p3602 = pneg %p3601
    $region86: #{lstur_forward.2} parent=5 // pred_check_branch
      %3604 = sbr.rel (%p3602) target = $region88
    $region87: #{lstur_forward.2} parent=5 // pred_region
      %s3605 = ssub.s32 %s21, 2
      // Predicated region
      $region89: #{lstur_forward.2} parent=87 // pred_check
        %p3606 = pneg %p390
      $region90: #{lstur_forward.2} parent=87 // pred_check_branch
        %3608 = sbr.rel (%p3606) target = $region92
      $region91: #{lstur_forward.2} parent=87 // pred_region
        %p3609 = scmp.lt.s32.totalorder %s27, 1
        %s3610 = scalar_select %p3609, %s27, 1
        %s3611 = smul.addr %s3610, 8
        %s3612 = scalar_lea.vmem %s15, %s3611
      $region92: #{lstur_forward.2} parent=87 // pred_fallthru
        _
    $region88: #{lstur_forward.2} parent=5 // pred_fallthru
      _
  $region6: #{lstur_forward.2} parent=0 // loop_footer
    %s25 = sadd.s32 1, %s21
  $region7: #{lstur_forward.2} parent=0 // loop_footer_branch
    %20 = sbr.rel target = $region3
  $region8: #{lstur_forward.2} parent=0 // loop_exit
    _

// kernel: lstur_forward.3
$region0: #{lstur_forward.3}
  #allocation0 [shape = 'u32[]', space=smem, size = 0x4, offset = 0x4, fixed_abs, tag = 'smem constant byte address 0x4 - core index']
  #allocation1 [shape = 'u32[144,128]{1,0:T(1,128)}', space=vmem, size = 0x12000, scoped, tag = 'internal scratch']
  %s0 = inlined_call_operand.vmem [shape: f32[2,3,128], index: 0, kind: input, shape index: {}]
  %s1 = inlined_call_operand.vmem [shape: f32[8,128], index: 1, kind: input, shape index: {}]
  %s2 = inlined_call_operand.vmem [shape: f32[8,1], index: 2, kind: input, shape index: {}]
  %s3 = inlined_call_operand.vmem [shape: f32[2,128], index: 3, kind: input, shape index: {}]
  %s4 = inlined_call_operand.vmem [shape: f32[128,384], index: 4, kind: input, shape index: {}]
  %s5 = inlined_call_operand.vmem [shape: f32[128,384], index: 5, kind: input, shape index: {}]
  %s6 = inlined_call_operand.vmem [shape: f32[1,384], index: 6, kind: input, shape index: {}]
  %s7 = inlined_call_operand.vmem [shape: f32[1,384], index: 7, kind: input, shape index: {}]
  %s8 = inlined_call_operand.hbm [shape: f32[2,3], index: 8, kind: output, shape index: {}]
  %s9 = sld [smem:[#allocation0]]
  $region42: #{lstur_forward.3} parent=0
    _
  %s11 = ssub.s32 1, %s9
  %s12 = scalar_select 0, %s11, %s9
  $region1: #{lstur_forward.3} parent=0
    #allocation2 [shape = 'u8[1024]{0}', space=vmem, size = 0x400, scoped, tag = 'output window, operand 0, single buffered']
    #allocation3 [shape = 's32[1]{0}', space=sflag, size = 0x4, scoped, tag = 'scoped memory for lstur_forward.3']
    %13 = vsyncpa [#allocation3], 0
    // Predicated region
    $region2: #{lstur_forward.3} parent=1 // pred_check
      _
    $region3: #{lstur_forward.3} parent=1 // pred_check_branch
      %15 = sbr.rel (0) target = $region5
    $region4: #{lstur_forward.3} parent=1 // pred_region
      _
    $region5: #{lstur_forward.3} parent=1 // pred_fallthru
      _
    // Predicated region
    $region6: #{lstur_forward.3} parent=1 // pred_check
      _
    $region7: #{lstur_forward.3} parent=1 // pred_check_branch
      %17 = sbr.rel (0) target = $region9
    $region8: #{lstur_forward.3} parent=1 // pred_region
      _
    $region9: #{lstur_forward.3} parent=1 // pred_fallthru
      _
    // Predicated region
    $region10: #{lstur_forward.3} parent=1 // pred_check
      _
    $region11: #{lstur_forward.3} parent=1 // pred_check_branch
      %19 = sbr.rel (0) target = $region13
    $region12: #{lstur_forward.3} parent=1 // pred_region
      _
    $region13: #{lstur_forward.3} parent=1 // pred_fallthru
      _
    // Predicated region
    $region14: #{lstur_forward.3} parent=1 // pred_check
      _
    $region15: #{lstur_forward.3} parent=1 // pred_check_branch
      %21 = sbr.rel (0) target = $region17
    $region16: #{lstur_forward.3} parent=1 // pred_region
      _
    $region17: #{lstur_forward.3} parent=1 // pred_fallthru
      _
    // Predicated region
    $region18: #{lstur_forward.3} parent=1 // pred_check
      _
    $region19: #{lstur_forward.3} parent=1 // pred_check_branch
      %23 = sbr.rel (0) target = $region21
    $region20: #{lstur_forward.3} parent=1 // pred_region
      _
    $region21: #{lstur_forward.3} parent=1 // pred_fallthru
      _
    // Predicated region
    $region22: #{lstur_forward.3} parent=1 // pred_check
      _
    $region23: #{lstur_forward.3} parent=1 // pred_check_branch
      %25 = sbr.rel (0) target = $region25
    $region24: #{lstur_forward.3} parent=1 // pred_region
      _
    $region25: #{lstur_forward.3} parent=1 // pred_fallthru
      _
    // Predicated region
    $region26: #{lstur_forward.3} parent=1 // pred_check
      _
    $region27: #{lstur_forward.3} parent=1 // pred_check_branch
      %27 = sbr.rel (0) target = $region29
    $region28: #{lstur_forward.3} parent=1 // pred_region
      _
    $region29: #{lstur_forward.3} parent=1 // pred_fallthru
      _
    // Predicated region
    $region30: #{lstur_forward.3} parent=1 // pred_check
      _
    $region31: #{lstur_forward.3} parent=1 // pred_check_branch
      %29 = sbr.rel (0) target = $region33
    $region32: #{lstur_forward.3} parent=1 // pred_region
      _
    $region33: #{lstur_forward.3} parent=1 // pred_fallthru
      _
    %v30 = vld [vmem:[%s4] sm:$0xff]
    %v31 = vld [vmem:[%s4 + $0x8] sm:$0xff]
    %v32 = vld [vmem:[%s4 + $0x10] sm:$0xff]
    %v33 = vld [vmem:[%s4 + $0x18] sm:$0xff]
    %v34 = vld [vmem:[%s4 + $0x20] sm:$0xff]
    %v35 = vld [vmem:[%s4 + $0x28] sm:$0xff]
    %v36 = vld [vmem:[%s4 + $0x30] sm:$0xff]
    %v37 = vld [vmem:[%s4 + $0x38] sm:$0xff]
    %v38 = vld [vmem:[%s4 + $0x40] sm:$0xff]
    %v39 = vld [vmem:[%s4 + $0x48] sm:$0xff]
    %v40 = vld [vmem:[%s4 + $0x50] sm:$0xff]
    %v41 = vld [vmem:[%s4 + $0x58] sm:$0xff]
    %v42 = vld [vmem:[%s4 + $0x60] sm:$0xff]
    %v43 = vld [vmem:[%s4 + $0x68] sm:$0xff]
    %v44 = vld [vmem:[%s4 + $0x70] sm:$0xff]
    %v45 = vld [vmem:[%s4 + $0x78] sm:$0xff]
    %v46 = vld [vmem:[%s4 + $0x80] sm:$0xff]
    %v47 = vld [vmem:[%s4 + $0x88] sm:$0xff]
    %v48 = vld [vmem:[%s4 + $0x90] sm:$0xff]
    %v49 = vld [vmem:[%s4 + $0x98] sm:$0xff]
    %v50 = vld [vmem:[%s4 + $0xa0] sm:$0xff]
    %v51 = vld [vmem:[%s4 + $0xa8] sm:$0xff]
    %v52 = vld [vmem:[%s4 + $0xb0] sm:$0xff]
    %v53 = vld [vmem:[%s4 + $0xb8] sm:$0xff]
    %v54 = vld [vmem:[%s4 + $0xc0] sm:$0xff]
    %v55 = vld [vmem:[%s4 + $0xc8] sm:$0xff]
    %v56 = vld [vmem:[%s4 + $0xd0] sm:$0xff]
    %v57 = vld [vmem:[%s4 + $0xd8] sm:$0xff]
    %v58 = vld [vmem:[%s4 + $0xe0] sm:$0xff]
    %v59 = vld [vmem:[%s4 + $0xe8] sm:$0xff]
    %v60 = vld [vmem:[%s4 + $0xf0] sm:$0xff]
    %v61 = vld [vmem:[%s4 + $0xf8] sm:$0xff]
    %v62 = vld [vmem:[%s4 + $0x100] sm:$0xff]
    %v63 = vld [vmem:[%s4 + $0x108] sm:$0xff]
    %v64 = vld [vmem:[%s4 + $0x110] sm:$0xff]
    %v65 = vld [vmem:[%s4 + $0x118] sm:$0xff]
    %v66 = vld [vmem:[%s4 + $0x120] sm:$0xff]
    %v67 = vld [vmem:[%s4 + $0x128] sm:$0xff]
    %v68 = vld [vmem:[%s4 + $0x130] sm:$0xff]
    %v69 = vld [vmem:[%s4 + $0x138] sm:$0xff]
    %v70 = vld [vmem:[%s4 + $0x140] sm:$0xff]
    %v71 = vld [vmem:[%s4 + $0x148] sm:$0xff]
    %v72 = vld [vmem:[%s4 + $0x150] sm:$0xff]
    %v73 = vld [vmem:[%s4 + $0x158] sm:$0xff]
    %v74 = vld [vmem:[%s4 + $0x160] sm:$0xff]
    %v75 = vld [vmem:[%s4 + $0x168] sm:$0xff]
    %v76 = vld [vmem:[%s4 + $0x170] sm:$0xff]
    %v77 = vld [vmem:[%s4 + $0x178] sm:$0xff]
    %v78 = vld [vmem:[%s5] sm:$0xff]
    %v79 = vld [vmem:[%s5 + $0x8] sm:$0xff]
    %v80 = vld [vmem:[%s5 + $0x10] sm:$0xff]
    %v81 = vld [vmem:[%s5 + $0x18] sm:$0xff]
    %v82 = vld [vmem:[%s5 + $0x20] sm:$0xff]
    %v83 = vld [vmem:[%s5 + $0x28] sm:$0xff]
    %v84 = vld [vmem:[%s5 + $0x30] sm:$0xff]
    %v85 = vld [vmem:[%s5 + $0x38] sm:$0xff]
    %v86 = vld [vmem:[%s5 + $0x40] sm:$0xff]
    %v87 = vld [vmem:[%s5 + $0x48] sm:$0xff]
    %v88 = vld [vmem:[%s5 + $0x50] sm:$0xff]
    %v89 = vld [vmem:[%s5 + $0x58] sm:$0xff]
    %v90 = vld [vmem:[%s5 + $0x60] sm:$0xff]
    %v91 = vld [vmem:[%s5 + $0x68] sm:$0xff]
    %v92 = vld [vmem:[%s5 + $0x70] sm:$0xff]
    %v93 = vld [vmem:[%s5 + $0x78] sm:$0xff]
    %v94 = vld [vmem:[%s5 + $0x80] sm:$0xff]
    %v95 = vld [vmem:[%s5 + $0x88] sm:$0xff]
    %v96 = vld [vmem:[%s5 + $0x90] sm:$0xff]
    %v97 = vld [vmem:[%s5 + $0x98] sm:$0xff]
    %v98 = vld [vmem:[%s5 + $0xa0] sm:$0xff]
    %v99 = vld [vmem:[%s5 + $0xa8] sm:$0xff]
    %v100 = vld [vmem:[%s5 + $0xb0] sm:$0xff]
    %v101 = vld [vmem:[%s5 + $0xb8] sm:$0xff]
    %v102 = vld [vmem:[%s5 + $0xc0] sm:$0xff]
    %v103 = vld [vmem:[%s5 + $0xc8] sm:$0xff]
    %v104 = vld [vmem:[%s5 + $0xd0] sm:$0xff]
    %v105 = vld [vmem:[%s5 + $0xd8] sm:$0xff]
    %v106 = vld [vmem:[%s5 + $0xe0] sm:$0xff]
    %v107 = vld [vmem:[%s5 + $0xe8] sm:$0xff]
    %v108 = vld [vmem:[%s5 + $0xf0] sm:$0xff]
    %v109 = vld [vmem:[%s5 + $0xf8] sm:$0xff]
    %v110 = vld [vmem:[%s5 + $0x100] sm:$0xff]
    %v111 = vld [vmem:[%s5 + $0x108] sm:$0xff]
    %v112 = vld [vmem:[%s5 + $0x110] sm:$0xff]
    %v113 = vld [vmem:[%s5 + $0x118] sm:$0xff]
    %v114 = vld [vmem:[%s5 + $0x120] sm:$0xff]
    %v115 = vld [vmem:[%s5 + $0x128] sm:$0xff]
    %v116 = vld [vmem:[%s5 + $0x130] sm:$0xff]
    %v117 = vld [vmem:[%s5 + $0x138] sm:$0xff]
    %v118 = vld [vmem:[%s5 + $0x140] sm:$0xff]
    %v119 = vld [vmem:[%s5 + $0x148] sm:$0xff]
    %v120 = vld [vmem:[%s5 + $0x150] sm:$0xff]
    %v121 = vld [vmem:[%s5 + $0x158] sm:$0xff]
    %v122 = vld [vmem:[%s5 + $0x160] sm:$0xff]
    %v123 = vld [vmem:[%s5 + $0x168] sm:$0xff]
    %v124 = vld [vmem:[%s5 + $0x170] sm:$0xff]
    %v125 = vld [vmem:[%s5 + $0x178] sm:$0xff]
    %v126 = vld [vmem:[%s6] sm:$0x7]
    %v127 = vld [vmem:[%s7] sm:$0x7]
    %v128 = vld [vmem:[%s1] sm:$0xff]
    %v130 = vlaneseq
    %v131 = vshrl.u32 %v130, 7
    %v132 = vsub.s32 0, %v131
    %v133 = vrot.slane %v126, %v132
    %v134 = vlaneseq
    %v135 = vshrl.u32 %v134, 7
    %v136 = vsub.s32 1, %v135
    %v137 = vrot.slane %v126, %v136
    %v138 = vlaneseq
    %v139 = vshrl.u32 %v138, 7
    %v140 = vsub.s32 2, %v139
    %v141 = vrot.slane %v126, %v140
    %145 = vmatprep.subr.mxu0 %v76
    %146 = vmatpush1.msra.mxu0 %v75
    %147 = vmatprep.subr.mxu0 %v73
    %148 = vmatpush1.msra.mxu0 %v72
    %149 = vmatprep.subr.mxu0 %v70
    %150 = vmatpush1.msra.mxu0 %v69
    %151 = vmatprep.subr.mxu0 %v67
    %152 = vmatpush1.msra.mxu0 %v66
    %153 = vmatprep.subr.mxu0 %v64
    %154 = vmatpush1.msra.mxu0 %v63
    %155 = vmatprep.subr.mxu0 %v61
    %156 = vmatpush1.msra.mxu0 %v60
    %157 = vmatprep.subr.mxu0 %v58
    %158 = vmatpush1.msra.mxu0 %v57
    %159 = vmatprep.subr.mxu0 %v55
    %160 = vmatpush1.msra.mxu0 %v54
    %161 = vmatprep.subr.mxu0 %v52
    %162 = vmatpush1.msra.mxu0 %v51
    %163 = vmatprep.subr.mxu0 %v49
    %164 = vmatpush1.msra.mxu0 %v48
    %165 = vmatprep.subr.mxu0 %v46
    %166 = vmatpush1.msra.mxu0 %v45
    %167 = vmatprep.subr.mxu0 %v43
    %168 = vmatpush1.msra.mxu0 %v42
    %169 = vmatprep.subr.mxu0 %v40
    %170 = vmatpush1.msra.mxu0 %v39
    %171 = vmatprep.subr.mxu0 %v37
    %172 = vmatpush1.msra.mxu0 %v36
    %173 = vmatprep.subr.mxu0 %v34
    %174 = vmatpush1.msra.mxu0 %v33
    %175 = vmatprep.subr.mxu0 %v31
    %176 = vmatpush1.msra.mxu0 %v30
    %177 = vmatprep.subr.mxu0 0.0
    %178 = vmatpush2.msra.mxu0 0.0
    %179 = vmatprep.subr.mxu0 0.0
    %180 = vmatpush2.msra.mxu0 0.0
    %181 = vmatprep.subr.mxu0 0.0
    %182 = vmatpush2.msra.mxu0 0.0
    %183 = vmatprep.subr.mxu0 0.0
    %184 = vmatpush2.msra.mxu0 0.0
    %185 = vmatprep.subr.mxu0 0.0
    %186 = vmatpush2.msra.mxu0 0.0
    %187 = vmatprep.subr.mxu0 0.0
    %188 = vmatpush2.msra.mxu0 0.0
    %189 = vmatprep.subr.mxu0 0.0
    %190 = vmatpush2.msra.mxu0 0.0
    %191 = vmatprep.subr.mxu0 0.0
    %192 = vmatpush2.msra.mxu0 0.0
    %193 = vmatprep.subr.mxu0 0.0
    %194 = vmatpush2.msra.mxu0 0.0
    %195 = vmatprep.subr.mxu0 0.0
    %196 = vmatpush2.msra.mxu0 0.0
    %197 = vmatprep.subr.mxu0 0.0
    %198 = vmatpush2.msra.mxu0 0.0
    %199 = vmatprep.subr.mxu0 0.0
    %200 = vmatpush2.msra.mxu0 0.0
    %201 = vmatprep.subr.mxu0 0.0
    %202 = vmatpush2.msra.mxu0 0.0
    %203 = vmatprep.subr.mxu0 0.0
    %204 = vmatpush2.msra.mxu0 0.0
    %205 = vmatprep.subr.mxu0 0.0
    %206 = vmatpush2.msra.mxu0 0.0
    %207 = vmatprep.subr.mxu0 0.0
    %208 = vmatpush2.msra.mxu0 0.0
    %209 = vmatprep.mubr.f32.mxu0 0.0
    %210 = vmatmul.mubr.f32.gmra.mxu0 %v128
    %v211 = vpop.f32.mrf.mxu0
    %v212 = vadd.f32 %v133, %v211
    %v213 = vpop.f32.mrf.mxu0
    %v214 = vadd.f32 %v137, %v213
    %215 = vdwg.mxu0
    %216 = vmatprep.subr.mxu0 0.0
    %217 = vmatpush1.msra.mxu0 %v77
    %218 = vmatprep.subr.mxu0 0.0
    %219 = vmatpush1.msra.mxu0 %v74
    %220 = vmatprep.subr.mxu0 0.0
    %221 = vmatpush1.msra.mxu0 %v71
    %222 = vmatprep.subr.mxu0 0.0
    %223 = vmatpush1.msra.mxu0 %v68
    %224 = vmatprep.subr.mxu0 0.0
    %225 = vmatpush1.msra.mxu0 %v65
    %226 = vmatprep.subr.mxu0 0.0
    %227 = vmatpush1.msra.mxu0 %v62
    %228 = vmatprep.subr.mxu0 0.0
    %229 = vmatpush1.msra.mxu0 %v59
    %230 = vmatprep.subr.mxu0 0.0
    %231 = vmatpush1.msra.mxu0 %v56
    %232 = vmatprep.subr.mxu0 0.0
    %233 = vmatpush1.msra.mxu0 %v53
    %234 = vmatprep.subr.mxu0 0.0
    %235 = vmatpush1.msra.mxu0 %v50
    %236 = vmatprep.subr.mxu0 0.0
    %237 = vmatpush1.msra.mxu0 %v47
    %238 = vmatprep.subr.mxu0 0.0
    %239 = vmatpush1.msra.mxu0 %v44
    %240 = vmatprep.subr.mxu0 0.0
    %241 = vmatpush1.msra.mxu0 %v41
    %242 = vmatprep.subr.mxu0 0.0
    %243 = vmatpush1.msra.mxu0 %v38
    %244 = vmatprep.subr.mxu0 0.0
    %245 = vmatpush1.msra.mxu0 %v35
    %246 = vmatprep.subr.mxu0 0.0
    %247 = vmatpush1.msra.mxu0 %v32
    %248 = vmatprep.subr.mxu0 0.0
    %249 = vmatpush2.msra.mxu0 0.0
    %250 = vmatprep.subr.mxu0 0.0
    %251 = vmatpush2.msra.mxu0 0.0
    %252 = vmatprep.subr.mxu0 0.0
    %253 = vmatpush2.msra.mxu0 0.0
    %254 = vmatprep.subr.mxu0 0.0
    %255 = vmatpush2.msra.mxu0 0.0
    %256 = vmatprep.subr.mxu0 0.0
    %257 = vmatpush2.msra.mxu0 0.0
    %258 = vmatprep.subr.mxu0 0.0
    %259 = vmatpush2.msra.mxu0 0.0
    %260 = vmatprep.subr.mxu0 0.0
    %261 = vmatpush2.msra.mxu0 0.0
    %262 = vmatprep.subr.mxu0 0.0
    %263 = vmatpush2.msra.mxu0 0.0
    %264 = vmatprep.subr.mxu0 0.0
    %265 = vmatpush2.msra.mxu0 0.0
    %266 = vmatprep.subr.mxu0 0.0
    %267 = vmatpush2.msra.mxu0 0.0
    %268 = vmatprep.subr.mxu0 0.0
    %269 = vmatpush2.msra.mxu0 0.0
    %270 = vmatprep.subr.mxu0 0.0
    %271 = vmatpush2.msra.mxu0 0.0
    %272 = vmatprep.subr.mxu0 0.0
    %273 = vmatpush2.msra.mxu0 0.0
    %274 = vmatprep.subr.mxu0 0.0
    %275 = vmatpush2.msra.mxu0 0.0
    %276 = vmatprep.subr.mxu0 0.0
    %277 = vmatpush2.msra.mxu0 0.0
    %278 = vmatprep.subr.mxu0 0.0
    %279 = vmatpush2.msra.mxu0 0.0
    %280 = vmatprep.mubr.f32.mxu0 0.0
    %281 = vmatmul.mubr.f32.gmra.mxu0 %v128
    %v282 = vpop.f32.mrf.mxu0
    %v283 = vadd.f32 %v141, %v282
    %v284 = vpop.f32.mrf.mxu0
    %285 = vdwg.mxu0
    %v287 = vcombine.high %v212, %v212
    %v289 = vunpack.c.l.s4 1983009808
    %v290 = vunpack.c.0.s8 %v289
    %v291 = vlaneseq
    %v292 = vshrl.u32 %v291, 7
    %v293 = vsub.s32 %v290, %v292
    %v294 = vrot.slane %v212, %v293
    %v296 = vunpack.c.l.s4 1983009808
    %v297 = vunpack.c.0.s8 %v296
    %v298 = vlaneseq
    %v299 = vshrl.u32 %v298, 7
    %v300 = vsub.s32 %v297, %v299
    %v301 = vrot.slane %v287, %v300
    %v302 = vcombine.high %v294, %v294
    %v303 = vcombine.high %v301, %v301
    %v308 = vld [vmem:[%s2] sm:$0xff]
    %v309 = vsub.f32 1.0, %v308
    %v310 = vmul.f32 %v309, 1e+09
    %312 = vset.pattern.permute.xlu0 0
    %313 = vperm.xlu0 %312, %v310
    %v314 = vpop.permute.xlu0 %313
    %v316 = vadd.f32 %v214, %v314
    %v318 = vcombine.high %v316, %v316
    %v320 = vunpack.c.l.s4 1983009808
    %v321 = vunpack.c.0.s8 %v320
    %v322 = vlaneseq
    %v323 = vshrl.u32 %v322, 7
    %v324 = vsub.s32 %v321, %v323
    %v325 = vrot.slane %v316, %v324
    %v327 = vunpack.c.l.s4 1983009808
    %v328 = vunpack.c.0.s8 %v327
    %v329 = vlaneseq
    %v330 = vshrl.u32 %v329, 7
    %v331 = vsub.s32 %v328, %v330
    %v332 = vrot.slane %v318, %v331
    %v333 = vcombine.high %v325, %v325
    %v334 = vcombine.high %v332, %v332
    %v340 = vcombine.high %v283, %v283
    %v342 = vunpack.c.l.s4 1983009808
    %v343 = vunpack.c.0.s8 %v342
    %v344 = vlaneseq
    %v345 = vshrl.u32 %v344, 7
    %v346 = vsub.s32 %v343, %v345
    %v347 = vrot.slane %v283, %v346
    %v349 = vunpack.c.l.s4 1983009808
    %v350 = vunpack.c.0.s8 %v349
    %v351 = vlaneseq
    %v352 = vshrl.u32 %v351, 7
    %v353 = vsub.s32 %v350, %v352
    %v354 = vrot.slane %v340, %v353
    %v355 = vcombine.high %v347, %v347
    %v356 = vcombine.high %v354, %v354
    %v361 = vld [vmem:[%s3] sm:$0x3]
    %v363 = vlaneseq
    %v364 = vshrl.u32 %v363, 7
    %v365 = vsub.s32 0, %v364
    %v366 = vrot.slane %v127, %v365
    %v367 = vlaneseq
    %v368 = vshrl.u32 %v367, 7
    %v369 = vsub.s32 1, %v368
    %v370 = vrot.slane %v127, %v369
    %v371 = vlaneseq
    %v372 = vshrl.u32 %v371, 7
    %v373 = vsub.s32 2, %v372
    %v374 = vrot.slane %v127, %v373
    %378 = vmatprep.subr.mxu0 %v124
    %379 = vmatpush1.msra.mxu0 %v123
    %380 = vmatprep.subr.mxu0 %v121
    %381 = vmatpush1.msra.mxu0 %v120
    %382 = vmatprep.subr.mxu0 %v118
    %383 = vmatpush1.msra.mxu0 %v117
    %384 = vmatprep.subr.mxu0 %v115
    %385 = vmatpush1.msra.mxu0 %v114
    %386 = vmatprep.subr.mxu0 %v112
    %387 = vmatpush1.msra.mxu0 %v111
    %388 = vmatprep.subr.mxu0 %v109
    %389 = vmatpush1.msra.mxu0 %v108
    %390 = vmatprep.subr.mxu0 %v106
    %391 = vmatpush1.msra.mxu0 %v105
    %392 = vmatprep.subr.mxu0 %v103
    %393 = vmatpush1.msra.mxu0 %v102
    %394 = vmatprep.subr.mxu0 %v100
    %395 = vmatpush1.msra.mxu0 %v99
    %396 = vmatprep.subr.mxu0 %v97
    %397 = vmatpush1.msra.mxu0 %v96
    %398 = vmatprep.subr.mxu0 %v94
    %399 = vmatpush1.msra.mxu0 %v93
    %400 = vmatprep.subr.mxu0 %v91
    %401 = vmatpush1.msra.mxu0 %v90
    %402 = vmatprep.subr.mxu0 %v88
    %403 = vmatpush1.msra.mxu0 %v87
    %404 = vmatprep.subr.mxu0 %v85
    %405 = vmatpush1.msra.mxu0 %v84
    %406 = vmatprep.subr.mxu0 %v82
    %407 = vmatpush1.msra.mxu0 %v81
    %408 = vmatprep.subr.mxu0 %v79
    %409 = vmatpush1.msra.mxu0 %v78
    %410 = vmatprep.subr.mxu0 0.0
    %411 = vmatpush2.msra.mxu0 0.0
    %412 = vmatprep.subr.mxu0 0.0
    %413 = vmatpush2.msra.mxu0 0.0
    %414 = vmatprep.subr.mxu0 0.0
    %415 = vmatpush2.msra.mxu0 0.0
    %416 = vmatprep.subr.mxu0 0.0
    %417 = vmatpush2.msra.mxu0 0.0
    %418 = vmatprep.subr.mxu0 0.0
    %419 = vmatpush2.msra.mxu0 0.0
    %420 = vmatprep.subr.mxu0 0.0
    %421 = vmatpush2.msra.mxu0 0.0
    %422 = vmatprep.subr.mxu0 0.0
    %423 = vmatpush2.msra.mxu0 0.0
    %424 = vmatprep.subr.mxu0 0.0
    %425 = vmatpush2.msra.mxu0 0.0
    %426 = vmatprep.subr.mxu0 0.0
    %427 = vmatpush2.msra.mxu0 0.0
    %428 = vmatprep.subr.mxu0 0.0
    %429 = vmatpush2.msra.mxu0 0.0
    %430 = vmatprep.subr.mxu0 0.0
    %431 = vmatpush2.msra.mxu0 0.0
    %432 = vmatprep.subr.mxu0 0.0
    %433 = vmatpush2.msra.mxu0 0.0
    %434 = vmatprep.subr.mxu0 0.0
    %435 = vmatpush2.msra.mxu0 0.0
    %436 = vmatprep.subr.mxu0 0.0
    %437 = vmatpush2.msra.mxu0 0.0
    %438 = vmatprep.subr.mxu0 0.0
    %439 = vmatpush2.msra.mxu0 0.0
    %440 = vmatprep.subr.mxu0 0.0
    %441 = vmatpush2.msra.mxu0 0.0
    %442 = vmatprep.mubr.f32.mxu0 0.0
    %443 = vmatmul.mubr.f32.gmra.mxu0 %v361
    %v444 = vpop.f32.mrf.mxu0
    %v445 = vadd.f32 %v366, %v444
    %v446 = vpop.f32.mrf.mxu0
    %v447 = vadd.f32 %v370, %v446
    %448 = vdwg.mxu0
    %449 = vmatprep.subr.mxu0 0.0
    %450 = vmatpush1.msra.mxu0 %v125
    %451 = vmatprep.subr.mxu0 0.0
    %452 = vmatpush1.msra.mxu0 %v122
    %453 = vmatprep.subr.mxu0 0.0
    %454 = vmatpush1.msra.mxu0 %v119
    %455 = vmatprep.subr.mxu0 0.0
    %456 = vmatpush1.msra.mxu0 %v116
    %457 = vmatprep.subr.mxu0 0.0
    %458 = vmatpush1.msra.mxu0 %v113
    %459 = vmatprep.subr.mxu0 0.0
    %460 = vmatpush1.msra.mxu0 %v110
    %461 = vmatprep.subr.mxu0 0.0
    %462 = vmatpush1.msra.mxu0 %v107
    %463 = vmatprep.subr.mxu0 0.0
    %464 = vmatpush1.msra.mxu0 %v104
    %465 = vmatprep.subr.mxu0 0.0
    %466 = vmatpush1.msra.mxu0 %v101
    %467 = vmatprep.subr.mxu0 0.0
    %468 = vmatpush1.msra.mxu0 %v98
    %469 = vmatprep.subr.mxu0 0.0
    %470 = vmatpush1.msra.mxu0 %v95
    %471 = vmatprep.subr.mxu0 0.0
    %472 = vmatpush1.msra.mxu0 %v92
    %473 = vmatprep.subr.mxu0 0.0
    %474 = vmatpush1.msra.mxu0 %v89
    %475 = vmatprep.subr.mxu0 0.0
    %476 = vmatpush1.msra.mxu0 %v86
    %477 = vmatprep.subr.mxu0 0.0
    %478 = vmatpush1.msra.mxu0 %v83
    %479 = vmatprep.subr.mxu0 0.0
    %480 = vmatpush1.msra.mxu0 %v80
    %481 = vmatprep.subr.mxu0 0.0
    %482 = vmatpush2.msra.mxu0 0.0
    %483 = vmatprep.subr.mxu0 0.0
    %484 = vmatpush2.msra.mxu0 0.0
    %485 = vmatprep.subr.mxu0 0.0
    %486 = vmatpush2.msra.mxu0 0.0
    %487 = vmatprep.subr.mxu0 0.0
    %488 = vmatpush2.msra.mxu0 0.0
    %489 = vmatprep.subr.mxu0 0.0
    %490 = vmatpush2.msra.mxu0 0.0
    %491 = vmatprep.subr.mxu0 0.0
    %492 = vmatpush2.msra.mxu0 0.0
    %493 = vmatprep.subr.mxu0 0.0
    %494 = vmatpush2.msra.mxu0 0.0
    %495 = vmatprep.subr.mxu0 0.0
    %496 = vmatpush2.msra.mxu0 0.0
    %497 = vmatprep.subr.mxu0 0.0
    %498 = vmatpush2.msra.mxu0 0.0
    %499 = vmatprep.subr.mxu0 0.0
    %500 = vmatpush2.msra.mxu0 0.0
    %501 = vmatprep.subr.mxu0 0.0
    %502 = vmatpush2.msra.mxu0 0.0
    %503 = vmatprep.subr.mxu0 0.0
    %504 = vmatpush2.msra.mxu0 0.0
    %505 = vmatprep.subr.mxu0 0.0
    %506 = vmatpush2.msra.mxu0 0.0
    %507 = vmatprep.subr.mxu0 0.0
    %508 = vmatpush2.msra.mxu0 0.0
    %509 = vmatprep.subr.mxu0 0.0
    %510 = vmatpush2.msra.mxu0 0.0
    %511 = vmatprep.subr.mxu0 0.0
    %512 = vmatpush2.msra.mxu0 0.0
    %513 = vmatprep.mubr.f32.mxu0 0.0
    %514 = vmatmul.mubr.f32.gmra.mxu0 %v361
    %v515 = vpop.f32.mrf.mxu0
    %v516 = vadd.f32 %v374, %v515
    %v517 = vpop.f32.mrf.mxu0
    %518 = vdwg.mxu0
    %v519 = vadd.f32 %v294, %v445
    %v520 = vxor.u32 %v519, 2147483648
    %v521 = vmul.f32 %v520, 1.442695
    %v522 = vpow.pop %v521
    %v523 = vadd.f32 %v522, 1.0
    %v524 = vrcp.pop %v523
    %v525 = vmul.f32 1.0, %v524
    %v526 = vadd.f32 %v325, %v447
    %v527 = vxor.u32 %v526, 2147483648
    %v528 = vmul.f32 %v527, 1.442695
    %v529 = vpow.pop %v528
    %v530 = vadd.f32 %v529, 1.0
    %v531 = vrcp.pop %v530
    %v532 = vmul.f32 1.0, %v531
    %v533 = vmul.f32 %v525, %v516
    %v534 = vadd.f32 %v347, %v533
    %v535 = vtanh.pop %v534
    %v536 = vsub.f32 1.0, %v532
    %v537 = vmul.f32 %v536, %v535
    %v538 = vmul.f32 %v532, %v361
    %v539 = vadd.f32 %v537, %v538
    %540 = vmatprep.subr.mxu0 %v124
    %541 = vmatpush1.msra.mxu0 %v123
    %542 = vmatprep.subr.mxu0 %v121
    %543 = vmatpush1.msra.mxu0 %v120
    %544 = vmatprep.subr.mxu0 %v118
    %545 = vmatpush1.msra.mxu0 %v117
    %546 = vmatprep.subr.mxu0 %v115
    %547 = vmatpush1.msra.mxu0 %v114
    %548 = vmatprep.subr.mxu0 %v112
    %549 = vmatpush1.msra.mxu0 %v111
    %550 = vmatprep.subr.mxu0 %v109
    %551 = vmatpush1.msra.mxu0 %v108
    %552 = vmatprep.subr.mxu0 %v106
    %553 = vmatpush1.msra.mxu0 %v105
    %554 = vmatprep.subr.mxu0 %v103
    %555 = vmatpush1.msra.mxu0 %v102
    %556 = vmatprep.subr.mxu0 %v100
    %557 = vmatpush1.msra.mxu0 %v99
    %558 = vmatprep.subr.mxu0 %v97
    %559 = vmatpush1.msra.mxu0 %v96
    %560 = vmatprep.subr.mxu0 %v94
    %561 = vmatpush1.msra.mxu0 %v93
    %562 = vmatprep.subr.mxu0 %v91
    %563 = vmatpush1.msra.mxu0 %v90
    %564 = vmatprep.subr.mxu0 %v88
    %565 = vmatpush1.msra.mxu0 %v87
    %566 = vmatprep.subr.mxu0 %v85
    %567 = vmatpush1.msra.mxu0 %v84
    %568 = vmatprep.subr.mxu0 %v82
    %569 = vmatpush1.msra.mxu0 %v81
    %570 = vmatprep.subr.mxu0 %v79
    %571 = vmatpush1.msra.mxu0 %v78
    %572 = vmatprep.subr.mxu0 0.0
    %573 = vmatpush2.msra.mxu0 0.0
    %574 = vmatprep.subr.mxu0 0.0
    %575 = vmatpush2.msra.mxu0 0.0
    %576 = vmatprep.subr.mxu0 0.0
    %577 = vmatpush2.msra.mxu0 0.0
    %578 = vmatprep.subr.mxu0 0.0
    %579 = vmatpush2.msra.mxu0 0.0
    %580 = vmatprep.subr.mxu0 0.0
    %581 = vmatpush2.msra.mxu0 0.0
    %582 = vmatprep.subr.mxu0 0.0
    %583 = vmatpush2.msra.mxu0 0.0
    %584 = vmatprep.subr.mxu0 0.0
    %585 = vmatpush2.msra.mxu0 0.0
    %586 = vmatprep.subr.mxu0 0.0
    %587 = vmatpush2.msra.mxu0 0.0
    %588 = vmatprep.subr.mxu0 0.0
    %589 = vmatpush2.msra.mxu0 0.0
    %590 = vmatprep.subr.mxu0 0.0
    %591 = vmatpush2.msra.mxu0 0.0
    %592 = vmatprep.subr.mxu0 0.0
    %593 = vmatpush2.msra.mxu0 0.0
    %594 = vmatprep.subr.mxu0 0.0
    %595 = vmatpush2.msra.mxu0 0.0
    %596 = vmatprep.subr.mxu0 0.0
    %597 = vmatpush2.msra.mxu0 0.0
    %598 = vmatprep.subr.mxu0 0.0
    %599 = vmatpush2.msra.mxu0 0.0
    %600 = vmatprep.subr.mxu0 0.0
    %601 = vmatpush2.msra.mxu0 0.0
    %602 = vmatprep.subr.mxu0 0.0
    %603 = vmatpush2.msra.mxu0 0.0
    %604 = vmatprep.mubr.f32.mxu0 0.0
    %605 = vmatmul.mubr.f32.gmra.mxu0 %v539
    %v606 = vpop.f32.mrf.mxu0
    %v607 = vadd.f32 %v366, %v606
    %v608 = vpop.f32.mrf.mxu0
    %v609 = vadd.f32 %v370, %v608
    %610 = vdwg.mxu0
    %611 = vmatprep.subr.mxu0 0.0
    %612 = vmatpush1.msra.mxu0 %v125
    %613 = vmatprep.subr.mxu0 0.0
    %614 = vmatpush1.msra.mxu0 %v122
    %615 = vmatprep.subr.mxu0 0.0
    %616 = vmatpush1.msra.mxu0 %v119
    %617 = vmatprep.subr.mxu0 0.0
    %618 = vmatpush1.msra.mxu0 %v116
    %619 = vmatprep.subr.mxu0 0.0
    %620 = vmatpush1.msra.mxu0 %v113
    %621 = vmatprep.subr.mxu0 0.0
    %622 = vmatpush1.msra.mxu0 %v110
    %623 = vmatprep.subr.mxu0 0.0
    %624 = vmatpush1.msra.mxu0 %v107
    %625 = vmatprep.subr.mxu0 0.0
    %626 = vmatpush1.msra.mxu0 %v104
    %627 = vmatprep.subr.mxu0 0.0
    %628 = vmatpush1.msra.mxu0 %v101
    %629 = vmatprep.subr.mxu0 0.0
    %630 = vmatpush1.msra.mxu0 %v98
    %631 = vmatprep.subr.mxu0 0.0
    %632 = vmatpush1.msra.mxu0 %v95
    %633 = vmatprep.subr.mxu0 0.0
    %634 = vmatpush1.msra.mxu0 %v92
    %635 = vmatprep.subr.mxu0 0.0
    %636 = vmatpush1.msra.mxu0 %v89
    %637 = vmatprep.subr.mxu0 0.0
    %638 = vmatpush1.msra.mxu0 %v86
    %639 = vmatprep.subr.mxu0 0.0
    %640 = vmatpush1.msra.mxu0 %v83
    %641 = vmatprep.subr.mxu0 0.0
    %642 = vmatpush1.msra.mxu0 %v80
    %643 = vmatprep.subr.mxu0 0.0
    %644 = vmatpush2.msra.mxu0 0.0
    %645 = vmatprep.subr.mxu0 0.0
    %646 = vmatpush2.msra.mxu0 0.0
    %647 = vmatprep.subr.mxu0 0.0
    %648 = vmatpush2.msra.mxu0 0.0
    %649 = vmatprep.subr.mxu0 0.0
    %650 = vmatpush2.msra.mxu0 0.0
    %651 = vmatprep.subr.mxu0 0.0
    %652 = vmatpush2.msra.mxu0 0.0
    %653 = vmatprep.subr.mxu0 0.0
    %654 = vmatpush2.msra.mxu0 0.0
    %655 = vmatprep.subr.mxu0 0.0
    %656 = vmatpush2.msra.mxu0 0.0
    %657 = vmatprep.subr.mxu0 0.0
    %658 = vmatpush2.msra.mxu0 0.0
    %659 = vmatprep.subr.mxu0 0.0
    %660 = vmatpush2.msra.mxu0 0.0
    %661 = vmatprep.subr.mxu0 0.0
    %662 = vmatpush2.msra.mxu0 0.0
    %663 = vmatprep.subr.mxu0 0.0
    %664 = vmatpush2.msra.mxu0 0.0
    %665 = vmatprep.subr.mxu0 0.0
    %666 = vmatpush2.msra.mxu0 0.0
    %667 = vmatprep.subr.mxu0 0.0
    %668 = vmatpush2.msra.mxu0 0.0
    %669 = vmatprep.subr.mxu0 0.0
    %670 = vmatpush2.msra.mxu0 0.0
    %671 = vmatprep.subr.mxu0 0.0
    %672 = vmatpush2.msra.mxu0 0.0
    %673 = vmatprep.subr.mxu0 0.0
    %674 = vmatpush2.msra.mxu0 0.0
    %675 = vmatprep.mubr.f32.mxu0 0.0
    %676 = vmatmul.mubr.f32.gmra.mxu0 %v539
    %v677 = vpop.f32.mrf.mxu0
    %v678 = vadd.f32 %v374, %v677
    %v679 = vpop.f32.mrf.mxu0
    %680 = vdwg.mxu0
    %v681 = vadd.f32 %v302, %v607
    %v682 = vxor.u32 %v681, 2147483648
    %v683 = vmul.f32 %v682, 1.442695
    %v684 = vpow.pop %v683
    %v685 = vadd.f32 %v684, 1.0
    %v686 = vrcp.pop %v685
    %v687 = vmul.f32 1.0, %v686
    %v688 = vadd.f32 %v333, %v609
    %v689 = vxor.u32 %v688, 2147483648
    %v690 = vmul.f32 %v689, 1.442695
    %v691 = vpow.pop %v690
    %v692 = vadd.f32 %v691, 1.0
    %v693 = vrcp.pop %v692
    %v694 = vmul.f32 1.0, %v693
    %v695 = vmul.f32 %v687, %v678
    %v696 = vadd.f32 %v355, %v695
    %v697 = vtanh.pop %v696
    %v698 = vsub.f32 1.0, %v694
    %v699 = vmul.f32 %v698, %v697
    %v700 = vmul.f32 %v694, %v539
    %v701 = vadd.f32 %v699, %v700
    %702 = vmatprep.subr.mxu0 %v124
    %703 = vmatpush1.msra.mxu0 %v123
    %704 = vmatprep.subr.mxu0 %v121
    %705 = vmatpush1.msra.mxu0 %v120
    %706 = vmatprep.subr.mxu0 %v118
    %707 = vmatpush1.msra.mxu0 %v117
    %708 = vmatprep.subr.mxu0 %v115
    %709 = vmatpush1.msra.mxu0 %v114
    %710 = vmatprep.subr.mxu0 %v112
    %711 = vmatpush1.msra.mxu0 %v111
    %712 = vmatprep.subr.mxu0 %v109
    %713 = vmatpush1.msra.mxu0 %v108
    %714 = vmatprep.subr.mxu0 %v106
    %715 = vmatpush1.msra.mxu0 %v105
    %716 = vmatprep.subr.mxu0 %v103
    %717 = vmatpush1.msra.mxu0 %v102
    %718 = vmatprep.subr.mxu0 %v100
    %719 = vmatpush1.msra.mxu0 %v99
    %720 = vmatprep.subr.mxu0 %v97
    %721 = vmatpush1.msra.mxu0 %v96
    %722 = vmatprep.subr.mxu0 %v94
    %723 = vmatpush1.msra.mxu0 %v93
    %724 = vmatprep.subr.mxu0 %v91
    %725 = vmatpush1.msra.mxu0 %v90
    %726 = vmatprep.subr.mxu0 %v88
    %727 = vmatpush1.msra.mxu0 %v87
    %728 = vmatprep.subr.mxu0 %v85
    %729 = vmatpush1.msra.mxu0 %v84
    %730 = vmatprep.subr.mxu0 %v82
    %731 = vmatpush1.msra.mxu0 %v81
    %732 = vmatprep.subr.mxu0 %v79
    %733 = vmatpush1.msra.mxu0 %v78
    %734 = vmatprep.subr.mxu0 0.0
    %735 = vmatpush2.msra.mxu0 0.0
    %736 = vmatprep.subr.mxu0 0.0
    %737 = vmatpush2.msra.mxu0 0.0
    %738 = vmatprep.subr.mxu0 0.0
    %739 = vmatpush2.msra.mxu0 0.0
    %740 = vmatprep.subr.mxu0 0.0
    %741 = vmatpush2.msra.mxu0 0.0
    %742 = vmatprep.subr.mxu0 0.0
    %743 = vmatpush2.msra.mxu0 0.0
    %744 = vmatprep.subr.mxu0 0.0
    %745 = vmatpush2.msra.mxu0 0.0
    %746 = vmatprep.subr.mxu0 0.0
    %747 = vmatpush2.msra.mxu0 0.0
    %748 = vmatprep.subr.mxu0 0.0
    %749 = vmatpush2.msra.mxu0 0.0
    %750 = vmatprep.subr.mxu0 0.0
    %751 = vmatpush2.msra.mxu0 0.0
    %752 = vmatprep.subr.mxu0 0.0
    %753 = vmatpush2.msra.mxu0 0.0
    %754 = vmatprep.subr.mxu0 0.0
    %755 = vmatpush2.msra.mxu0 0.0
    %756 = vmatprep.subr.mxu0 0.0
    %757 = vmatpush2.msra.mxu0 0.0
    %758 = vmatprep.subr.mxu0 0.0
    %759 = vmatpush2.msra.mxu0 0.0
    %760 = vmatprep.subr.mxu0 0.0
    %761 = vmatpush2.msra.mxu0 0.0
    %762 = vmatprep.subr.mxu0 0.0
    %763 = vmatpush2.msra.mxu0 0.0
    %764 = vmatprep.subr.mxu0 0.0
    %765 = vmatpush2.msra.mxu0 0.0
    %766 = vmatprep.mubr.f32.mxu0 0.0
    %767 = vmatmul.mubr.f32.gmra.mxu0 %v701
    %v768 = vpop.f32.mrf.mxu0
    %v769 = vadd.f32 %v366, %v768
    %v770 = vpop.f32.mrf.mxu0
    %v771 = vadd.f32 %v370, %v770
    %772 = vdwg.mxu0
    %773 = vmatprep.subr.mxu0 0.0
    %774 = vmatpush1.msra.mxu0 %v125
    %775 = vmatprep.subr.mxu0 0.0
    %776 = vmatpush1.msra.mxu0 %v122
    %777 = vmatprep.subr.mxu0 0.0
    %778 = vmatpush1.msra.mxu0 %v119
    %779 = vmatprep.subr.mxu0 0.0
    %780 = vmatpush1.msra.mxu0 %v116
    %781 = vmatprep.subr.mxu0 0.0
    %782 = vmatpush1.msra.mxu0 %v113
    %783 = vmatprep.subr.mxu0 0.0
    %784 = vmatpush1.msra.mxu0 %v110
    %785 = vmatprep.subr.mxu0 0.0
    %786 = vmatpush1.msra.mxu0 %v107
    %787 = vmatprep.subr.mxu0 0.0
    %788 = vmatpush1.msra.mxu0 %v104
    %789 = vmatprep.subr.mxu0 0.0
    %790 = vmatpush1.msra.mxu0 %v101
    %791 = vmatprep.subr.mxu0 0.0
    %792 = vmatpush1.msra.mxu0 %v98
    %793 = vmatprep.subr.mxu0 0.0
    %794 = vmatpush1.msra.mxu0 %v95
    %795 = vmatprep.subr.mxu0 0.0
    %796 = vmatpush1.msra.mxu0 %v92
    %797 = vmatprep.subr.mxu0 0.0
    %798 = vmatpush1.msra.mxu0 %v89
    %799 = vmatprep.subr.mxu0 0.0
    %800 = vmatpush1.msra.mxu0 %v86
    %801 = vmatprep.subr.mxu0 0.0
    %802 = vmatpush1.msra.mxu0 %v83
    %803 = vmatprep.subr.mxu0 0.0
    %804 = vmatpush1.msra.mxu0 %v80
    %805 = vmatprep.subr.mxu0 0.0
    %806 = vmatpush2.msra.mxu0 0.0
    %807 = vmatprep.subr.mxu0 0.0
    %808 = vmatpush2.msra.mxu0 0.0
    %809 = vmatprep.subr.mxu0 0.0
    %810 = vmatpush2.msra.mxu0 0.0
    %811 = vmatprep.subr.mxu0 0.0
    %812 = vmatpush2.msra.mxu0 0.0
    %813 = vmatprep.subr.mxu0 0.0
    %814 = vmatpush2.msra.mxu0 0.0
    %815 = vmatprep.subr.mxu0 0.0
    %816 = vmatpush2.msra.mxu0 0.0
    %817 = vmatprep.subr.mxu0 0.0
    %818 = vmatpush2.msra.mxu0 0.0
    %819 = vmatprep.subr.mxu0 0.0
    %820 = vmatpush2.msra.mxu0 0.0
    %821 = vmatprep.subr.mxu0 0.0
    %822 = vmatpush2.msra.mxu0 0.0
    %823 = vmatprep.subr.mxu0 0.0
    %824 = vmatpush2.msra.mxu0 0.0
    %825 = vmatprep.subr.mxu0 0.0
    %826 = vmatpush2.msra.mxu0 0.0
    %827 = vmatprep.subr.mxu0 0.0
    %828 = vmatpush2.msra.mxu0 0.0
    %829 = vmatprep.subr.mxu0 0.0
    %830 = vmatpush2.msra.mxu0 0.0
    %831 = vmatprep.subr.mxu0 0.0
    %832 = vmatpush2.msra.mxu0 0.0
    %833 = vmatprep.subr.mxu0 0.0
    %834 = vmatpush2.msra.mxu0 0.0
    %835 = vmatprep.subr.mxu0 0.0
    %836 = vmatpush2.msra.mxu0 0.0
    %837 = vmatprep.mubr.f32.mxu0 0.0
    %838 = vmatmul.mubr.f32.gmra.mxu0 %v701
    %v839 = vpop.f32.mrf.mxu0
    %v840 = vadd.f32 %v374, %v839
    %v841 = vpop.f32.mrf.mxu0
    %842 = vdwg.mxu0
    %v843 = vadd.f32 %v301, %v769
    %v844 = vxor.u32 %v843, 2147483648
    %v845 = vmul.f32 %v844, 1.442695
    %v846 = vpow.pop %v845
    %v847 = vadd.f32 %v846, 1.0
    %v848 = vrcp.pop %v847
    %v849 = vmul.f32 1.0, %v848
    %v850 = vadd.f32 %v332, %v771
    %v851 = vxor.u32 %v850, 2147483648
    %v852 = vmul.f32 %v851, 1.442695
    %v853 = vpow.pop %v852
    %v854 = vadd.f32 %v853, 1.0
    %v855 = vrcp.pop %v854
    %v856 = vmul.f32 1.0, %v855
    %v857 = vmul.f32 %v849, %v840
    %v858 = vadd.f32 %v354, %v857
    %v859 = vtanh.pop %v858
    %v860 = vsub.f32 1.0, %v856
    %v861 = vmul.f32 %v860, %v859
    %v862 = vmul.f32 %v856, %v701
    %v863 = vadd.f32 %v861, %v862
    %864 = vmatprep.subr.mxu0 %v124
    %865 = vmatpush1.msra.mxu0 %v123
    %866 = vmatprep.subr.mxu0 %v121
    %867 = vmatpush1.msra.mxu0 %v120
    %868 = vmatprep.subr.mxu0 %v118
    %869 = vmatpush1.msra.mxu0 %v117
    %870 = vmatprep.subr.mxu0 %v115
    %871 = vmatpush1.msra.mxu0 %v114
    %872 = vmatprep.subr.mxu0 %v112
    %873 = vmatpush1.msra.mxu0 %v111
    %874 = vmatprep.subr.mxu0 %v109
    %875 = vmatpush1.msra.mxu0 %v108
    %876 = vmatprep.subr.mxu0 %v106
    %877 = vmatpush1.msra.mxu0 %v105
    %878 = vmatprep.subr.mxu0 %v103
    %879 = vmatpush1.msra.mxu0 %v102
    %880 = vmatprep.subr.mxu0 %v100
    %881 = vmatpush1.msra.mxu0 %v99
    %882 = vmatprep.subr.mxu0 %v97
    %883 = vmatpush1.msra.mxu0 %v96
    %884 = vmatprep.subr.mxu0 %v94
    %885 = vmatpush1.msra.mxu0 %v93
    %886 = vmatprep.subr.mxu0 %v91
    %887 = vmatpush1.msra.mxu0 %v90
    %888 = vmatprep.subr.mxu0 %v88
    %889 = vmatpush1.msra.mxu0 %v87
    %890 = vmatprep.subr.mxu0 %v85
    %891 = vmatpush1.msra.mxu0 %v84
    %892 = vmatprep.subr.mxu0 %v82
    %893 = vmatpush1.msra.mxu0 %v81
    %894 = vmatprep.subr.mxu0 %v79
    %895 = vmatpush1.msra.mxu0 %v78
    %896 = vmatprep.subr.mxu0 0.0
    %897 = vmatpush2.msra.mxu0 0.0
    %898 = vmatprep.subr.mxu0 0.0
    %899 = vmatpush2.msra.mxu0 0.0
    %900 = vmatprep.subr.mxu0 0.0
    %901 = vmatpush2.msra.mxu0 0.0
    %902 = vmatprep.subr.mxu0 0.0
    %903 = vmatpush2.msra.mxu0 0.0
    %904 = vmatprep.subr.mxu0 0.0
    %905 = vmatpush2.msra.mxu0 0.0
    %906 = vmatprep.subr.mxu0 0.0
    %907 = vmatpush2.msra.mxu0 0.0
    %908 = vmatprep.subr.mxu0 0.0
    %909 = vmatpush2.msra.mxu0 0.0
    %910 = vmatprep.subr.mxu0 0.0
    %911 = vmatpush2.msra.mxu0 0.0
    %912 = vmatprep.subr.mxu0 0.0
    %913 = vmatpush2.msra.mxu0 0.0
    %914 = vmatprep.subr.mxu0 0.0
    %915 = vmatpush2.msra.mxu0 0.0
    %916 = vmatprep.subr.mxu0 0.0
    %917 = vmatpush2.msra.mxu0 0.0
    %918 = vmatprep.subr.mxu0 0.0
    %919 = vmatpush2.msra.mxu0 0.0
    %920 = vmatprep.subr.mxu0 0.0
    %921 = vmatpush2.msra.mxu0 0.0
    %922 = vmatprep.subr.mxu0 0.0
    %923 = vmatpush2.msra.mxu0 0.0
    %924 = vmatprep.subr.mxu0 0.0
    %925 = vmatpush2.msra.mxu0 0.0
    %926 = vmatprep.subr.mxu0 0.0
    %927 = vmatpush2.msra.mxu0 0.0
    %928 = vmatprep.mubr.f32.mxu0 0.0
    %929 = vmatmul.mubr.f32.gmra.mxu0 %v863
    %v930 = vpop.f32.mrf.mxu0
    %v931 = vadd.f32 %v366, %v930
    %v932 = vpop.f32.mrf.mxu0
    %v933 = vadd.f32 %v370, %v932
    %934 = vdwg.mxu0
    %935 = vmatprep.subr.mxu0 0.0
    %936 = vmatpush1.msra.mxu0 %v125
    %937 = vmatprep.subr.mxu0 0.0
    %938 = vmatpush1.msra.mxu0 %v122
    %939 = vmatprep.subr.mxu0 0.0
    %940 = vmatpush1.msra.mxu0 %v119
    %941 = vmatprep.subr.mxu0 0.0
    %942 = vmatpush1.msra.mxu0 %v116
    %943 = vmatprep.subr.mxu0 0.0
    %944 = vmatpush1.msra.mxu0 %v113
    %945 = vmatprep.subr.mxu0 0.0
    %946 = vmatpush1.msra.mxu0 %v110
    %947 = vmatprep.subr.mxu0 0.0
    %948 = vmatpush1.msra.mxu0 %v107
    %949 = vmatprep.subr.mxu0 0.0
    %950 = vmatpush1.msra.mxu0 %v104
    %951 = vmatprep.subr.mxu0 0.0
    %952 = vmatpush1.msra.mxu0 %v101
    %953 = vmatprep.subr.mxu0 0.0
    %954 = vmatpush1.msra.mxu0 %v98
    %955 = vmatprep.subr.mxu0 0.0
    %956 = vmatpush1.msra.mxu0 %v95
    %957 = vmatprep.subr.mxu0 0.0
    %958 = vmatpush1.msra.mxu0 %v92
    %959 = vmatprep.subr.mxu0 0.0
    %960 = vmatpush1.msra.mxu0 %v89
    %961 = vmatprep.subr.mxu0 0.0
    %962 = vmatpush1.msra.mxu0 %v86
    %963 = vmatprep.subr.mxu0 0.0
    %964 = vmatpush1.msra.mxu0 %v83
    %965 = vmatprep.subr.mxu0 0.0
    %966 = vmatpush1.msra.mxu0 %v80
    %967 = vmatprep.subr.mxu0 0.0
    %968 = vmatpush2.msra.mxu0 0.0
    %969 = vmatprep.subr.mxu0 0.0
    %970 = vmatpush2.msra.mxu0 0.0
    %971 = vmatprep.subr.mxu0 0.0
    %972 = vmatpush2.msra.mxu0 0.0
    %973 = vmatprep.subr.mxu0 0.0
    %974 = vmatpush2.msra.mxu0 0.0
    %975 = vmatprep.subr.mxu0 0.0
    %976 = vmatpush2.msra.mxu0 0.0
    %977 = vmatprep.subr.mxu0 0.0
    %978 = vmatpush2.msra.mxu0 0.0
    %979 = vmatprep.subr.mxu0 0.0
    %980 = vmatpush2.msra.mxu0 0.0
    %981 = vmatprep.subr.mxu0 0.0
    %982 = vmatpush2.msra.mxu0 0.0
    %983 = vmatprep.subr.mxu0 0.0
    %984 = vmatpush2.msra.mxu0 0.0
    %985 = vmatprep.subr.mxu0 0.0
    %986 = vmatpush2.msra.mxu0 0.0
    %987 = vmatprep.subr.mxu0 0.0
    %988 = vmatpush2.msra.mxu0 0.0
    %989 = vmatprep.subr.mxu0 0.0
    %990 = vmatpush2.msra.mxu0 0.0
    %991 = vmatprep.subr.mxu0 0.0
    %992 = vmatpush2.msra.mxu0 0.0
    %993 = vmatprep.subr.mxu0 0.0
    %994 = vmatpush2.msra.mxu0 0.0
    %995 = vmatprep.subr.mxu0 0.0
    %996 = vmatpush2.msra.mxu0 0.0
    %997 = vmatprep.subr.mxu0 0.0
    %998 = vmatpush2.msra.mxu0 0.0
    %999 = vmatprep.mubr.f32.mxu0 0.0
    %1000 = vmatmul.mubr.f32.gmra.mxu0 %v863
    %v1001 = vpop.f32.mrf.mxu0
    %v1002 = vadd.f32 %v374, %v1001
    %v1003 = vpop.f32.mrf.mxu0
    %1004 = vdwg.mxu0
    %v1005 = vadd.f32 %v303, %v931
    %v1006 = vxor.u32 %v1005, 2147483648
    %v1007 = vmul.f32 %v1006, 1.442695
    %v1008 = vpow.pop %v1007
    %v1009 = vadd.f32 %v1008, 1.0
    %v1010 = vrcp.pop %v1009
    %v1011 = vmul.f32 1.0, %v1010
    %v1012 = vadd.f32 %v334, %v933
    %v1013 = vxor.u32 %v1012, 2147483648
    %v1014 = vmul.f32 %v1013, 1.442695
    %v1015 = vpow.pop %v1014
    %v1016 = vadd.f32 %v1015, 1.0
    %v1017 = vrcp.pop %v1016
    %v1018 = vmul.f32 1.0, %v1017
    %v1019 = vmul.f32 %v1011, %v1002
    %v1020 = vadd.f32 %v356, %v1019
    %v1021 = vtanh.pop %v1020
    %v1022 = vsub.f32 1.0, %v1018
    %v1023 = vmul.f32 %v1022, %v1021
    %v1024 = vmul.f32 %v1018, %v863
    %v1025 = vadd.f32 %v1023, %v1024
    %v1026 = vld [vmem:[%s0] sm:$0x7]
    %v1027 = vld [vmem:[%s0 + $0x4] sm:$0x7]
    %v1030 = vunpack.c.l.s4 1966171168
    %v1031 = vunpack.c.0.s8 %v1030
    %v1032 = vlaneseq
    %v1033 = vshrl.u32 %v1032, 7
    %v1034 = vsub.s32 %v1031, %v1033
    %v1035 = vrot.slane %v1025, %v1034
    %v1036 = vcombine.high %v1035, %v1035
    %v1037 = vlaneseq
    %v1038 = vshrl.u32 %v1037, 7
    %v1039 = vsub.s32 0, %v1038
    %v1040 = vrot.slane %v1035, %v1039
    %v1041 = vlaneseq
    %v1042 = vshrl.u32 %v1041, 7
    %v1043 = vsub.s32 0, %v1042
    %v1044 = vrot.slane %v1036, %v1043
    %v1047 = vmul.f32 %v1026, %v1040
    %v1048 = vmul.f32 %v1027, %v1044
    %vm1049 = vcmask 1042432
    %v1050 = vsel %vm1049, %v1047, 0.0
    %1051 = vadd.xlane.f32.xlu0 %v1050
    %v1052 = vpop.xlane.xlu0 %1051
    %v1053 = vsel %vm1049, %v1048, 0.0
    %1054 = vadd.xlane.f32.xlu0 %v1053
    %v1055 = vpop.xlane.xlu0 %1054
    %v1058 = vlaneseq
    %v1059 = vand.u32 %v1058, 127
    %v1060 = vlaneseq
    %v1061 = vshrl.u32 %v1060, 7
    %v1062 = vsub.s32 %v1059, %v1061
    %v1063 = vrot.slane %v1052, %v1062
    %v1064 = vlaneseq
    %v1065 = vshrl.u32 %v1064, 7
    %v1066 = vsub.s32 %v1059, %v1065
    %v1067 = vrot.slane %v1055, %v1066
    %vm1068 = vcmask 1041409
    %v1069 = vsel %vm1068, %v1067, %v1063
    %vm1071 = vcmask 17408
    %1072 = vst.msk [vmem:[#allocation2] sm:$0x3] %vm1071, %v1069
    // Predicated region
    $region34: #{lstur_forward.3} parent=1 // pred_check
      _
    $region35: #{lstur_forward.3} parent=1 // pred_check_branch
      %1074 = sbr.rel (0) target = $region37
    $region36: #{lstur_forward.3} parent=1 // pred_region
      %s1076 = ssub.s32 32, 32
      %1077 = vsyncadd [#allocation3], %s1076
      %s1079 = sshll.u32 [#allocation2], 4
      %s1080 = int_to_ptr.vmem [resolvable:$true] %s1079
      %1082 = dma.vmem_to_hbm [thread:$0]  %s1080, 32, %s8, [#allocation3]
    $region37: #{lstur_forward.3} parent=1 // pred_fallthru
      _
    // Predicated region
    $region38: #{lstur_forward.3} parent=1 // pred_check
      _
    $region39: #{lstur_forward.3} parent=1 // pred_check_branch
      %1084 = sbr.rel (0) target = $region41
    $region40: #{lstur_forward.3} parent=1 // pred_region
      %1085 = dma.done [#allocation3], 32
    $region41: #{lstur_forward.3} parent=1 // pred_fallthru
      _
    %1086 = vsyncpa [#allocation3], 1

</llo_original>
